<compile_context>
chip_gen: v5e
topology: v5e:2x2
jax: 0.10.0
libtpu: 0.0.40
codegen_flags: <defaults>
</compile_context>

<pallas_src>
import jax
import jax.numpy as jnp
from jax.experimental import pallas as pl
from jax.experimental.pallas import tpu as pltpu

# v6e/v7x micro-opt from the perf review: cast MXU operands to bf16 while keeping f32
# accumulation and an f32 bias/ReLU epilogue.  Off by default so the strict f32 comparison
# against the reference is guaranteed to pass (expect ~1e-2-level drift when enabled).
USE_BF16_MATMUL = False


def _mxu(x):
    return x.astype(jnp.bfloat16) if USE_BF16_MATMUL else x


def _full_spec(shape):
    # Whole (small) array as one resident VMEM block.
    return pl.BlockSpec(shape, lambda *_: (0,) * len(shape))


def _pick_tile(m, target=4096):
    """Largest 8-aligned divisor of m that is <= target (falls back to the full dim)."""
    if m <= target:
        return m
    for d in range(target - target % 8, 7, -8):
        if m % d == 0:
            return d
    return m


# ---------------------------------------------------------------------------
# Pallas kernel 1: fused conv (single im2col matmul) + bias + ReLU + 2x2 max-pool
# ---------------------------------------------------------------------------
def _conv_pool_kernel(a_ref, w_ref, b_ref, o_ref, abuf, zbuf):
    # a_ref: (4, T, K) -- im2col operands of the four 2x2 pool-window positions for the
    # same T pooled-output pixels.  One MXU push: (4T, K) @ (K, O); one bias+ReLU epilogue;
    # the pool is the elementwise max of the four T-row blocks.
    t = a_ref.shape[1]
    for q in range(4):                                   # stage as a single (4T, K) operand
        abuf[q * t:(q + 1) * t, :] = a_ref[q]
    z = jnp.dot(_mxu(abuf[...]), _mxu(w_ref[...]), preferred_element_type=jnp.float32)
    zbuf[...] = jnp.maximum(z + b_ref[...], 0.0)
    o_ref[...] = jnp.maximum(
        jnp.maximum(zbuf[0 * t:1 * t, :], zbuf[1 * t:2 * t, :]),
        jnp.maximum(zbuf[2 * t:3 * t, :], zbuf[3 * t:4 * t, :]))


def conv_relu_pool(quads, wmat, bias2d):
    """quads: (4, M, K) pool-window im2col operands; wmat: (K, O); bias2d: (1, O).
    Returns the pooled activation (M, O) f32, rows ordered (b, i, j)."""
    _, M, K = quads.shape
    O = wmat.shape[1]
    tile = _pick_tile(M)
    flops = 2 * 4 * M * K * O
    bytes_accessed = 4 * (4 * M * K + K * O + O + M * O)
    return pl.pallas_call(
        _conv_pool_kernel,
        out_shape=jax.ShapeDtypeStruct((M, O), jnp.float32),
        grid=(M // tile,),
        in_specs=[pl.BlockSpec((4, tile, K), lambda i: (0, i, 0)),
                  pl.BlockSpec((K, O), lambda i: (0, 0)),
                  pl.BlockSpec((1, O), lambda i: (0, 0))],
        out_specs=pl.BlockSpec((tile, O), lambda i: (i, 0)),
        scratch_shapes=[pltpu.VMEM((4 * tile, K), jnp.float32),
                        pltpu.VMEM((4 * tile, O), jnp.float32)],
        compiler_params=pltpu.CompilerParams(dimension_semantics=("parallel",)),
        cost_estimate=pl.CostEstimate(flops=flops, transcendentals=0,
                                      bytes_accessed=bytes_accessed),
    )(quads, wmat, bias2d)


# ---------------------------------------------------------------------------
# Pallas kernel 2: fused conv2 + bias + ReLU + pool + FC(400->120->84->n) stack
# ---------------------------------------------------------------------------
def _conv_pool_fc_kernel(a_ref, w2_ref, b2_ref, w1f_ref, b1f_ref, w2f_ref, b2f_ref,
                         w3f_ref, b3f_ref, o_ref, zbuf, pbuf, feat):
    t = a_ref.shape[0] // 4       # pooled pixels * batch   (25 * B)
    nb = o_ref.shape[0]           # batch
    npos = t // nb                # pooled pixels per image (25)
    oc = w2_ref.shape[1]          # conv2 output channels   (16)

    # fused conv2 + bias + ReLU + 2x2 max-pool: one matmul, one epilogue, max of 4 blocks
    z = jnp.dot(_mxu(a_ref[...]), _mxu(w2_ref[...]), preferred_element_type=jnp.float32)
    zbuf[...] = jnp.maximum(z + b2_ref[...], 0.0)
    pbuf[...] = jnp.maximum(
        jnp.maximum(zbuf[0 * t:1 * t, :], zbuf[1 * t:2 * t, :]),
        jnp.maximum(zbuf[2 * t:3 * t, :], zbuf[3 * t:4 * t, :]))   # (t, oc), rows = (p, b)

    # (p, b)-ordered pooled rows -> (B, npos*oc) FC input; lane order (i, j, c) matches the
    # pre-permuted wf1 columns, so no reshape/transpose is needed anywhere.
    for p in range(npos):
        feat[:, p * oc:(p + 1) * oc] = pbuf[p * nb:(p + 1) * nb, :]

    # FC stack 400 -> 120 -> 84 -> n_class with both ReLUs, everything VMEM-resident.
    h = jnp.maximum(jnp.dot(_mxu(feat[...]), _mxu(w1f_ref[...]),
                            preferred_element_type=jnp.float32) + b1f_ref[...], 0.0)
    h = jnp.maximum(jnp.dot(_mxu(h), _mxu(w2f_ref[...]),
                            preferred_element_type=jnp.float32) + b2f_ref[...], 0.0)
    o_ref[...] = jnp.dot(_mxu(h), _mxu(w3f_ref[...]),
                         preferred_element_type=jnp.float32) + b3f_ref[...]


def conv_pool_fc(quads2, w2, b2, wf1, bf1, wf2, bf2, wf3, bf3, batch):
    QM, K2 = quads2.shape                      # QM = 4 * 25 * B, rows (quad, p, b)
    O2 = w2.shape[1]
    F1, N1 = wf1.shape
    N2, N3 = wf2.shape[1], wf3.shape[1]
    t = QM // 4
    assert F1 == (t // batch) * O2, "fc1 input size must match pooled conv2 features"
    flops = 2 * (QM * K2 * O2 + batch * (F1 * N1 + N1 * N2 + N2 * N3))
    bytes_accessed = 4 * (QM * K2 + K2 * O2 + F1 * N1 + N1 * N2 + N2 * N3
                          + O2 + N1 + N2 + N3 + batch * N3)
    return pl.pallas_call(
        _conv_pool_fc_kernel,
        out_shape=jax.ShapeDtypeStruct((batch, N3), jnp.float32),
        grid=(1,),
        in_specs=[_full_spec((QM, K2)),
                  _full_spec((K2, O2)), _full_spec((1, O2)),
                  _full_spec((F1, N1)), _full_spec((1, N1)),
                  _full_spec((N1, N2)), _full_spec((1, N2)),
                  _full_spec((N2, N3)), _full_spec((1, N3))],
        out_specs=_full_spec((batch, N3)),
        scratch_shapes=[pltpu.VMEM((QM, O2), jnp.float32),       # conv2 relu output
                        pltpu.VMEM((t, O2), jnp.float32),        # pooled (p, b)-rows
                        pltpu.VMEM((batch, F1), jnp.float32)],   # FC input (B, 400)
        compiler_params=pltpu.CompilerParams(dimension_semantics=("arbitrary",)),
        cost_estimate=pl.CostEstimate(flops=flops, transcendentals=0,
                                      bytes_accessed=bytes_accessed),
    )(quads2, w2, b2, wf1, bf1, wf2, bf2, wf3, bf3)


# ---------------------------------------------------------------------------
# per-forward glue (fused by XLA): pool-quadrant im2col packing
# ---------------------------------------------------------------------------
def _pool_quads(x_nhwc, kh, kw):
    """Quadrant im2col for fused Conv(kxk, stride 1) + ReLU + MaxPool2d(2,2).
    Returns 4 arrays (B, Po, Qo, kh*kw*C); quad (dy,dx) holds the patches of conv-output
    pixels (2i+dy, 2j+dx); feature order is (ky, kx, c)."""
    B, H, W, C = x_nhwc.shape
    Ho, Wo = H - kh + 1, W - kw + 1
    assert Ho % 2 == 0 and Wo % 2 == 0, "fused 2x2 pool assumes even conv output"
    cols = jnp.concatenate([x_nhwc[:, ky:ky + Ho, kx:kx + Wo, :]
                            for ky in range(kh) for kx in range(kw)], axis=-1)
    return [cols[:, dy::2, dx::2, :] for dy in range(2) for dx in range(2)]


def prepare_params(params):
    """One-time weight re-layout, hoisted out of the jitted forward (review item 1)."""
    w1, w2, wf1 = params["w1"], params["w2"], params["wf1"]
    o1, o2, n1 = w1.shape[0], w2.shape[0], wf1.shape[0]
    hw = int(round((wf1.shape[1] // o2) ** 0.5))          # pooled conv2 spatial size (5)
    return dict(
        W1=jnp.transpose(w1, (2, 3, 1, 0)).reshape(-1, o1),      # (kh*kw*C, 6), (ky,kx,c)
        b1=params["b1"].reshape(1, -1),
        W2=jnp.transpose(w2, (2, 3, 1, 0)).reshape(-1, o2),      # (150, 16)
        b2=params["b2"].reshape(1, -1),
        # PyTorch flattens conv output as (c, i, j); kernel 2's FC input is (i, j, c).
        Wf1=wf1.reshape(n1, o2, hw, hw).transpose(2, 3, 1, 0).reshape(-1, n1),   # (400,120)
        bf1=params["bf1"].reshape(1, -1),
        Wf2=params["wf2"].T, bf2=params["bf2"].reshape(1, -1),
        Wf3=params["wf3"].T, bf3=params["bf3"].reshape(1, -1),
    )


def cnn_forward(prep, x_nchw):
    B = x_nchw.shape[0]
    x = jnp.transpose(x_nchw, (0, 2, 3, 1))                       # NCHW -> NHWC once
    xp = jnp.pad(x, ((0, 0), (1, 1), (1, 1), (0, 0)))             # conv1 padding=1

    # stage 1: conv1(3x3) + ReLU + pool                    (Pallas kernel 1)
    q1 = _pool_quads(xp, 3, 3)
    _, P1, Q1, K1 = q1[0].shape
    A1 = jnp.stack([q.reshape(B * P1 * Q1, K1) for q in q1], axis=0)      # (4, M1, K1)
    y1 = conv_relu_pool(A1, prep["W1"], prep["b1"])               # (M1, 6), rows (b,i,j)
    y1 = y1.reshape(B, P1, Q1, -1)                                # free NHWC view (B,14,14,6)

    # stage 2: conv2(5x5) + ReLU + pool + full FC stack    (Pallas kernel 2)
    q2 = _pool_quads(y1, 5, 5)
    _, P2, Q2, K2 = q2[0].shape
    # rows ordered (p, b) so the kernel builds the (B, 400) FC input from contiguous slices
    A2 = jnp.concatenate(
        [q.transpose(1, 2, 0, 3).reshape(P2 * Q2 * B, K2) for q in q2], axis=0)  # (100B,150)
    return conv_pool_fc(A2, prep["W2"], prep["b2"], prep["Wf1"], prep["bf1"],
                        prep["Wf2"], prep["bf2"], prep["Wf3"], prep["bf3"], B)


# ---------------------------------------------------------------------------
# Pure-JAX reference (PyTorch semantics) and parameter init
# ---------------------------------------------------------------------------
def reference_forward(params, x):
    def conv(x, w, b, pad):
        y = jax.lax.conv_general_dilated(
            x, w, (1, 1), [(pad, pad), (pad, pad)],
            dimension_numbers=("NCHW", "OIHW", "NCHW"))
        return y + b[None, :, None, None]

    def pool(x):
        return jax.lax.reduce_window(x, -jnp.inf, jax.lax.max,
                                     (1, 1, 2, 2), (1, 1, 2, 2), "VALID")

    out = pool(jax.nn.relu(conv(x, params["w1"], params["b1"], 1)))
    out = pool(jax.nn.relu(conv(out, params["w2"], params["b2"], 0)))
    out = out.reshape(out.shape[0], -1)
    out = jax.nn.relu(out @ params["wf1"].T + params["bf1"])
    out = jax.nn.relu(out @ params["wf2"].T + params["bf2"])
    return out @ params["wf3"].T + params["bf3"]


def init_params(key, in_dim, n_class):
    ks = jax.random.split(key, 10)

    def u(k, shape, fan_in):
        bound = 1.0 / float(fan_in) ** 0.5
        return jax.random.uniform(k, shape, jnp.float32, -bound, bound)

    return dict(
        w1=u(ks[0], (6, in_dim, 3, 3), in_dim * 9), b1=u(ks[1], (6,), in_dim * 9),
        w2=u(ks[2], (16, 6, 5, 5), 6 * 25),        b2=u(ks[3], (16,), 6 * 25),
        wf1=u(ks[4], (120, 400), 400),             bf1=u(ks[5], (120,), 400),
        wf2=u(ks[6], (84, 120), 120),              bf2=u(ks[7], (84,), 120),
        wf3=u(ks[8], (n_class, 84), 84),           bf3=u(ks[9], (n_class,), 84),
    )


if __name__ == "__main__":
    B, in_dim, n_class = 2, 1, 10
    key = jax.random.PRNGKey(0)
    kp, kx = jax.random.split(key)
    params = init_params(kp, in_dim, n_class)
    # 28x28 input is implied by the FC layer expecting 16*5*5 = 400 features.
    x = jax.random.normal(kx, (B, in_dim, 28, 28), jnp.float32)

    prep = prepare_params(params)          # one-time weight re-layout, outside the jit
    fwd = jax.jit(cnn_forward)
    out = jax.block_until_ready(fwd(prep, x))
    assert out.shape == (B, n_class), out.shape

    with jax.default_matmul_precision("float32"):
        ref = jax.block_until_ready(reference_forward(params, x))
    err = float(jnp.max(jnp.abs(out - ref)))
    tol = 5e-2 if USE_BF16_MATMUL else 1e-3
    if err > tol:
        raise AssertionError(f"Pallas CNN mismatch vs reference: max abs err {err}")

    print("KERNEL_OK")
</pallas_src>

<mosaic_0001>
module attributes {stable_mosaic.version = 11 : i64} {
  func.func @_conv_pool_kernel(%arg0: i32, %arg1: memref<4x392x9xf32, #tpu.memory_space<vmem>>, %arg2: memref<9x6xf32, #tpu.memory_space<vmem>>, %arg3: memref<1x6xf32, #tpu.memory_space<vmem>>, %arg4: memref<392x6xf32, #tpu.memory_space<vmem>>, %arg5: memref<1568x9xf32, #tpu.memory_space<vmem>>, %arg6: memref<1568x6xf32, #tpu.memory_space<vmem>>) attributes {dimension_semantics = [#tpu.dimension_semantics<parallel>], iteration_bounds = array<i64: 1>, scalar_prefetch = 0 : i64, scratch_operands = 2 : i64, tpu.core_type = #tpu.core_type<tc>, window_params = [{transform_indices = @transform_0, window_bounds = array<i64: 4, 392, 9>}, {pipeline_mode = #tpu.pipeline_mode<synchronous>, transform_indices = @transform_1, window_bounds = array<i64: 9, 6>}, {pipeline_mode = #tpu.pipeline_mode<synchronous>, transform_indices = @transform_2, window_bounds = array<i64: 1, 6>}, {transform_indices = @transform_3, window_bounds = array<i64: 392, 6>}]} {
    %c0 = arith.constant 0 : index
    %c0_0 = arith.constant 0 : index
    %c0_1 = arith.constant 0 : index
    %0 = vector.load %arg1[%c0, %c0_0, %c0_1] : memref<4x392x9xf32, #tpu.memory_space<vmem>>, vector<1x392x9xf32>
    %1 = vector.shape_cast %0 : vector<1x392x9xf32> to vector<392x9xf32>
    %c0_2 = arith.constant 0 : index
    %c0_3 = arith.constant 0 : index
    %2 = vector.load %arg5[%c0_2, %c0_3] : memref<1568x9xf32, #tpu.memory_space<vmem>>, vector<392x9xf32>
    tpu.vector_store %arg5[%c0_2, %c0_3], %1 {strides = array<i32>} : memref<1568x9xf32, #tpu.memory_space<vmem>>, vector<392x9xf32>,
    %c1 = arith.constant 1 : index
    %c0_4 = arith.constant 0 : index
    %c0_5 = arith.constant 0 : index
    %3 = vector.load %arg1[%c1, %c0_4, %c0_5] : memref<4x392x9xf32, #tpu.memory_space<vmem>>, vector<1x392x9xf32>
    %4 = vector.shape_cast %3 : vector<1x392x9xf32> to vector<392x9xf32>
    %c392 = arith.constant 392 : index
    %c0_6 = arith.constant 0 : index
    %5 = vector.load %arg5[%c392, %c0_6] : memref<1568x9xf32, #tpu.memory_space<vmem>>, vector<392x9xf32>
    tpu.vector_store %arg5[%c392, %c0_6], %4 {strides = array<i32>} : memref<1568x9xf32, #tpu.memory_space<vmem>>, vector<392x9xf32>,
    %c2 = arith.constant 2 : index
    %c0_7 = arith.constant 0 : index
    %c0_8 = arith.constant 0 : index
    %6 = vector.load %arg1[%c2, %c0_7, %c0_8] : memref<4x392x9xf32, #tpu.memory_space<vmem>>, vector<1x392x9xf32>
    %7 = vector.shape_cast %6 : vector<1x392x9xf32> to vector<392x9xf32>
    %c784 = arith.constant 784 : index
    %c0_9 = arith.constant 0 : index
    %8 = vector.load %arg5[%c784, %c0_9] : memref<1568x9xf32, #tpu.memory_space<vmem>>, vector<392x9xf32>
    tpu.vector_store %arg5[%c784, %c0_9], %7 {strides = array<i32>} : memref<1568x9xf32, #tpu.memory_space<vmem>>, vector<392x9xf32>,
    %c3 = arith.constant 3 : index
    %c0_10 = arith.constant 0 : index
    %c0_11 = arith.constant 0 : index
    %9 = vector.load %arg1[%c3, %c0_10, %c0_11] : memref<4x392x9xf32, #tpu.memory_space<vmem>>, vector<1x392x9xf32>
    %10 = vector.shape_cast %9 : vector<1x392x9xf32> to vector<392x9xf32>
    %c1176 = arith.constant 1176 : index
    %c0_12 = arith.constant 0 : index
    %11 = vector.load %arg5[%c1176, %c0_12] : memref<1568x9xf32, #tpu.memory_space<vmem>>, vector<392x9xf32>
    tpu.vector_store %arg5[%c1176, %c0_12], %10 {strides = array<i32>} : memref<1568x9xf32, #tpu.memory_space<vmem>>, vector<392x9xf32>,
    %c0_13 = arith.constant 0 : index
    %c0_14 = arith.constant 0 : index
    %12 = vector.load %arg5[%c0_13, %c0_14] : memref<1568x9xf32, #tpu.memory_space<vmem>>, vector<1568x9xf32>
    %c0_15 = arith.constant 0 : index
    %c0_16 = arith.constant 0 : index
    %13 = vector.load %arg2[%c0_15, %c0_16] : memref<9x6xf32, #tpu.memory_space<vmem>>, vector<9x6xf32>
    %cst = arith.constant dense<0.000000e+00> : vector<1568x6xf32>
    %14 = tpu.matmul %12, %13, %cst {dimension_numbers = #tpu.dot_dimension_numbers<[1], [0], [0], [1], [0, 0, 1, 1], [], []>} : vector<1568x9xf32>, vector<9x6xf32>, vector<1568x6xf32> -> vector<1568x6xf32>
    %c0_17 = arith.constant 0 : index
    %c0_18 = arith.constant 0 : index
    %15 = vector.load %arg3[%c0_17, %c0_18] : memref<1x6xf32, #tpu.memory_space<vmem>>, vector<1x6xf32>
    %16 = vector.broadcast %15 : vector<1x6xf32> to vector<1568x6xf32>
    %17 = arith.addf %14, %16 : vector<1568x6xf32>
    %cst_19 = arith.constant 0.000000e+00 : f32
    %18 = vector.broadcast %cst_19 : f32 to vector<1568x6xf32>
    %19 = arith.maximumf %17, %18 : vector<1568x6xf32>
    %c0_20 = arith.constant 0 : index
    %c0_21 = arith.constant 0 : index
    %20 = vector.load %arg6[%c0_20, %c0_21] : memref<1568x6xf32, #tpu.memory_space<vmem>>, vector<1568x6xf32>
    tpu.vector_store %arg6[%c0_20, %c0_21], %19 {strides = array<i32>} : memref<1568x6xf32, #tpu.memory_space<vmem>>, vector<1568x6xf32>,
    %c0_22 = arith.constant 0 : index
    %c0_23 = arith.constant 0 : index
    %21 = vector.load %arg6[%c0_22, %c0_23] : memref<1568x6xf32, #tpu.memory_space<vmem>>, vector<392x6xf32>
    %c392_24 = arith.constant 392 : index
    %c0_25 = arith.constant 0 : index
    %22 = vector.load %arg6[%c392_24, %c0_25] : memref<1568x6xf32, #tpu.memory_space<vmem>>, vector<392x6xf32>
    %23 = arith.maximumf %21, %22 : vector<392x6xf32>
    %c784_26 = arith.constant 784 : index
    %c0_27 = arith.constant 0 : index
    %24 = vector.load %arg6[%c784_26, %c0_27] : memref<1568x6xf32, #tpu.memory_space<vmem>>, vector<392x6xf32>
    %c1176_28 = arith.constant 1176 : index
    %c0_29 = arith.constant 0 : index
    %25 = vector.load %arg6[%c1176_28, %c0_29] : memref<1568x6xf32, #tpu.memory_space<vmem>>, vector<392x6xf32>
    %26 = arith.maximumf %24, %25 : vector<392x6xf32>
    %27 = arith.maximumf %23, %26 : vector<392x6xf32>
    %c0_30 = arith.constant 0 : index
    %c0_31 = arith.constant 0 : index
    %28 = vector.load %arg4[%c0_30, %c0_31] : memref<392x6xf32, #tpu.memory_space<vmem>>, vector<392x6xf32>
    tpu.vector_store %arg4[%c0_30, %c0_31], %27 {strides = array<i32>} : memref<392x6xf32, #tpu.memory_space<vmem>>, vector<392x6xf32>,
    return
  }
  func.func @transform_0(%arg0: i32) -> (i32, i32, i32) {
    %c0_i32 = arith.constant 0 : i32
    %c0_i32_0 = arith.constant 0 : i32
    %c0_i32_1 = arith.constant 0 : i32
    return %c0_i32, %arg0, %c0_i32_0 : i32, i32, i32
  }
  func.func @transform_1(%arg0: i32) -> (i32, i32) {
    %c0_i32 = arith.constant 0 : i32
    %c0_i32_0 = arith.constant 0 : i32
    %c0_i32_1 = arith.constant 0 : i32
    return %c0_i32, %c0_i32_0 : i32, i32
  }
  func.func @transform_2(%arg0: i32) -> (i32, i32) {
    %c0_i32 = arith.constant 0 : i32
    %c0_i32_0 = arith.constant 0 : i32
    %c0_i32_1 = arith.constant 0 : i32
    return %c0_i32, %c0_i32_0 : i32, i32
  }
  func.func @transform_3(%arg0: i32) -> (i32, i32) {
    %c0_i32 = arith.constant 0 : i32
    %c0_i32_0 = arith.constant 0 : i32
    return %arg0, %c0_i32 : i32, i32
  }
}

module attributes {stable_mosaic.version = 11 : i64} {
  func.func @_conv_pool_fc_kernel(%arg0: i32, %arg1: memref<200x150xf32, #tpu.memory_space<vmem>>, %arg2: memref<150x16xf32, #tpu.memory_space<vmem>>, %arg3: memref<1x16xf32, #tpu.memory_space<vmem>>, %arg4: memref<400x120xf32, #tpu.memory_space<vmem>>, %arg5: memref<1x120xf32, #tpu.memory_space<vmem>>, %arg6: memref<120x84xf32, #tpu.memory_space<vmem>>, %arg7: memref<1x84xf32, #tpu.memory_space<vmem>>, %arg8: memref<84x10xf32, #tpu.memory_space<vmem>>, %arg9: memref<1x10xf32, #tpu.memory_space<vmem>>, %arg10: memref<2x10xf32, #tpu.memory_space<vmem>>, %arg11: memref<200x16xf32, #tpu.memory_space<vmem>>, %arg12: memref<50x16xf32, #tpu.memory_space<vmem>>, %arg13: memref<2x400xf32, #tpu.memory_space<vmem>>) attributes {dimension_semantics = [#tpu.dimension_semantics<arbitrary>], iteration_bounds = array<i64: 1>, scalar_prefetch = 0 : i64, scratch_operands = 3 : i64, tpu.core_type = #tpu.core_type<tc>, window_params = [{pipeline_mode = #tpu.pipeline_mode<synchronous>, transform_indices = @transform_0, window_bounds = array<i64: 200, 150>}, {pipeline_mode = #tpu.pipeline_mode<synchronous>, transform_indices = @transform_1, window_bounds = array<i64: 150, 16>}, {pipeline_mode = #tpu.pipeline_mode<synchronous>, transform_indices = @transform_2, window_bounds = array<i64: 1, 16>}, {pipeline_mode = #tpu.pipeline_mode<synchronous>, transform_indices = @transform_3, window_bounds = array<i64: 400, 120>}, {pipeline_mode = #tpu.pipeline_mode<synchronous>, transform_indices = @transform_4, window_bounds = array<i64: 1, 120>}, {pipeline_mode = #tpu.pipeline_mode<synchronous>, transform_indices = @transform_5, window_bounds = array<i64: 120, 84>}, {pipeline_mode = #tpu.pipeline_mode<synchronous>, transform_indices = @transform_6, window_bounds = array<i64: 1, 84>}, {pipeline_mode = #tpu.pipeline_mode<synchronous>, transform_indices = @transform_7, window_bounds = array<i64: 84, 10>}, {pipeline_mode = #tpu.pipeline_mode<synchronous>, transform_indices = @transform_8, window_bounds = array<i64: 1, 10>}, {pipeline_mode = #tpu.pipeline_mode<synchronous>, transform_indices = @transform_9, window_bounds = array<i64: 2, 10>}]} {
    %c0 = arith.constant 0 : index
    %c0_0 = arith.constant 0 : index
    %0 = vector.load %arg1[%c0, %c0_0] : memref<200x150xf32, #tpu.memory_space<vmem>>, vector<200x150xf32>
    %c0_1 = arith.constant 0 : index
    %c0_2 = arith.constant 0 : index
    %1 = vector.load %arg2[%c0_1, %c0_2] : memref<150x16xf32, #tpu.memory_space<vmem>>, vector<150x16xf32>
    %cst = arith.constant dense<0.000000e+00> : vector<200x16xf32>
    %2 = tpu.matmul %0, %1, %cst {dimension_numbers = #tpu.dot_dimension_numbers<[1], [0], [0], [1], [0, 0, 1, 1], [], []>} : vector<200x150xf32>, vector<150x16xf32>, vector<200x16xf32> -> vector<200x16xf32>
    %c0_3 = arith.constant 0 : index
    %c0_4 = arith.constant 0 : index
    %3 = vector.load %arg3[%c0_3, %c0_4] : memref<1x16xf32, #tpu.memory_space<vmem>>, vector<1x16xf32>
    %4 = vector.broadcast %3 : vector<1x16xf32> to vector<200x16xf32>
    %5 = arith.addf %2, %4 : vector<200x16xf32>
    %cst_5 = arith.constant 0.000000e+00 : f32
    %6 = vector.broadcast %cst_5 : f32 to vector<200x16xf32>
    %7 = arith.maximumf %5, %6 : vector<200x16xf32>
    %c0_6 = arith.constant 0 : index
    %c0_7 = arith.constant 0 : index
    %8 = vector.load %arg11[%c0_6, %c0_7] : memref<200x16xf32, #tpu.memory_space<vmem>>, vector<200x16xf32>
    tpu.vector_store %arg11[%c0_6, %c0_7], %7 {strides = array<i32>} : memref<200x16xf32, #tpu.memory_space<vmem>>, vector<200x16xf32>,
    %c0_8 = arith.constant 0 : index
    %c0_9 = arith.constant 0 : index
    %9 = vector.load %arg11[%c0_8, %c0_9] : memref<200x16xf32, #tpu.memory_space<vmem>>, vector<50x16xf32>
    %c50 = arith.constant 50 : index
    %c0_10 = arith.constant 0 : index
    %10 = vector.load %arg11[%c50, %c0_10] : memref<200x16xf32, #tpu.memory_space<vmem>>, vector<50x16xf32>
    %11 = arith.maximumf %9, %10 : vector<50x16xf32>
    %c100 = arith.constant 100 : index
    %c0_11 = arith.constant 0 : index
    %12 = vector.load %arg11[%c100, %c0_11] : memref<200x16xf32, #tpu.memory_space<vmem>>, vector<50x16xf32>
    %c150 = arith.constant 150 : index
    %c0_12 = arith.constant 0 : index
    %13 = vector.load %arg11[%c150, %c0_12] : memref<200x16xf32, #tpu.memory_space<vmem>>, vector<50x16xf32>
    %14 = arith.maximumf %12, %13 : vector<50x16xf32>
    %15 = arith.maximumf %11, %14 : vector<50x16xf32>
    %c0_13 = arith.constant 0 : index
    %c0_14 = arith.constant 0 : index
    %16 = vector.load %arg12[%c0_13, %c0_14] : memref<50x16xf32, #tpu.memory_space<vmem>>, vector<50x16xf32>
    tpu.vector_store %arg12[%c0_13, %c0_14], %15 {strides = array<i32>} : memref<50x16xf32, #tpu.memory_space<vmem>>, vector<50x16xf32>,
    %c0_15 = arith.constant 0 : index
    %c0_16 = arith.constant 0 : index
    %17 = vector.load %arg12[%c0_15, %c0_16] : memref<50x16xf32, #tpu.memory_space<vmem>>, vector<2x16xf32>
    %c0_17 = arith.constant 0 : index
    %c0_18 = arith.constant 0 : index
    %18 = vector.load %arg13[%c0_17, %c0_18] : memref<2x400xf32, #tpu.memory_space<vmem>>, vector<2x16xf32>
    tpu.vector_store %arg13[%c0_17, %c0_18], %17 {strides = array<i32>} : memref<2x400xf32, #tpu.memory_space<vmem>>, vector<2x16xf32>,
    %c2 = arith.constant 2 : index
    %c0_19 = arith.constant 0 : index
    %19 = vector.load %arg12[%c2, %c0_19] : memref<50x16xf32, #tpu.memory_space<vmem>>, vector<2x16xf32>
    %c0_20 = arith.constant 0 : index
    %c16 = arith.constant 16 : index
    %20 = vector.load %arg13[%c0_20, %c16] : memref<2x400xf32, #tpu.memory_space<vmem>>, vector<2x16xf32>
    tpu.vector_store %arg13[%c0_20, %c16], %19 {strides = array<i32>} : memref<2x400xf32, #tpu.memory_space<vmem>>, vector<2x16xf32>,
    %c4 = arith.constant 4 : index
    %c0_21 = arith.constant 0 : index
    %21 = vector.load %arg12[%c4, %c0_21] : memref<50x16xf32, #tpu.memory_space<vmem>>, vector<2x16xf32>
    %c0_22 = arith.constant 0 : index
    %c32 = arith.constant 32 : index
    %22 = vector.load %arg13[%c0_22, %c32] : memref<2x400xf32, #tpu.memory_space<vmem>>, vector<2x16xf32>
    tpu.vector_store %arg13[%c0_22, %c32], %21 {strides = array<i32>} : memref<2x400xf32, #tpu.memory_space<vmem>>, vector<2x16xf32>,
    %c6 = arith.constant 6 : index
    %c0_23 = arith.constant 0 : index
    %23 = vector.load %arg12[%c6, %c0_23] : memref<50x16xf32, #tpu.memory_space<vmem>>, vector<2x16xf32>
    %c0_24 = arith.constant 0 : index
    %c48 = arith.constant 48 : index
    %24 = vector.load %arg13[%c0_24, %c48] : memref<2x400xf32, #tpu.memory_space<vmem>>, vector<2x16xf32>
    tpu.vector_store %arg13[%c0_24, %c48], %23 {strides = array<i32>} : memref<2x400xf32, #tpu.memory_space<vmem>>, vector<2x16xf32>,
    %c8 = arith.constant 8 : index
    %c0_25 = arith.constant 0 : index
    %25 = vector.load %arg12[%c8, %c0_25] : memref<50x16xf32, #tpu.memory_space<vmem>>, vector<2x16xf32>
    %c0_26 = arith.constant 0 : index
    %c64 = arith.constant 64 : index
    %26 = vector.load %arg13[%c0_26, %c64] : memref<2x400xf32, #tpu.memory_space<vmem>>, vector<2x16xf32>
    tpu.vector_store %arg13[%c0_26, %c64], %25 {strides = array<i32>} : memref<2x400xf32, #tpu.memory_space<vmem>>, vector<2x16xf32>,
    %c10 = arith.constant 10 : index
    %c0_27 = arith.constant 0 : index
    %27 = vector.load %arg12[%c10, %c0_27] : memref<50x16xf32, #tpu.memory_space<vmem>>, vector<2x16xf32>
    %c0_28 = arith.constant 0 : index
    %c80 = arith.constant 80 : index
    %28 = vector.load %arg13[%c0_28, %c80] : memref<2x400xf32, #tpu.memory_space<vmem>>, vector<2x16xf32>
    tpu.vector_store %arg13[%c0_28, %c80], %27 {strides = array<i32>} : memref<2x400xf32, #tpu.memory_space<vmem>>, vector<2x16xf32>,
    %c12 = arith.constant 12 : index
    %c0_29 = arith.constant 0 : index
    %29 = vector.load %arg12[%c12, %c0_29] : memref<50x16xf32, #tpu.memory_space<vmem>>, vector<2x16xf32>
    %c0_30 = arith.constant 0 : index
    %c96 = arith.constant 96 : index
    %30 = vector.load %arg13[%c0_30, %c96] : memref<2x400xf32, #tpu.memory_space<vmem>>, vector<2x16xf32>
    tpu.vector_store %arg13[%c0_30, %c96], %29 {strides = array<i32>} : memref<2x400xf32, #tpu.memory_space<vmem>>, vector<2x16xf32>,
    %c14 = arith.constant 14 : index
    %c0_31 = arith.constant 0 : index
    %31 = vector.load %arg12[%c14, %c0_31] : memref<50x16xf32, #tpu.memory_space<vmem>>, vector<2x16xf32>
    %c0_32 = arith.constant 0 : index
    %c112 = arith.constant 112 : index
    %32 = vector.load %arg13[%c0_32, %c112] : memref<2x400xf32, #tpu.memory_space<vmem>>, vector<2x16xf32>
    tpu.vector_store %arg13[%c0_32, %c112], %31 {strides = array<i32>} : memref<2x400xf32, #tpu.memory_space<vmem>>, vector<2x16xf32>,
    %c16_33 = arith.constant 16 : index
    %c0_34 = arith.constant 0 : index
    %33 = vector.load %arg12[%c16_33, %c0_34] : memref<50x16xf32, #tpu.memory_space<vmem>>, vector<2x16xf32>
    %c0_35 = arith.constant 0 : index
    %c128 = arith.constant 128 : index
    %34 = vector.load %arg13[%c0_35, %c128] : memref<2x400xf32, #tpu.memory_space<vmem>>, vector<2x16xf32>
    tpu.vector_store %arg13[%c0_35, %c128], %33 {strides = array<i32>} : memref<2x400xf32, #tpu.memory_space<vmem>>, vector<2x16xf32>,
    %c18 = arith.constant 18 : index
    %c0_36 = arith.constant 0 : index
    %35 = vector.load %arg12[%c18, %c0_36] : memref<50x16xf32, #tpu.memory_space<vmem>>, vector<2x16xf32>
    %c0_37 = arith.constant 0 : index
    %c144 = arith.constant 144 : index
    %36 = vector.load %arg13[%c0_37, %c144] : memref<2x400xf32, #tpu.memory_space<vmem>>, vector<2x16xf32>
    tpu.vector_store %arg13[%c0_37, %c144], %35 {strides = array<i32>} : memref<2x400xf32, #tpu.memory_space<vmem>>, vector<2x16xf32>,
    %c20 = arith.constant 20 : index
    %c0_38 = arith.constant 0 : index
    %37 = vector.load %arg12[%c20, %c0_38] : memref<50x16xf32, #tpu.memory_space<vmem>>, vector<2x16xf32>
    %c0_39 = arith.constant 0 : index
    %c160 = arith.constant 160 : index
    %38 = vector.load %arg13[%c0_39, %c160] : memref<2x400xf32, #tpu.memory_space<vmem>>, vector<2x16xf32>
    tpu.vector_store %arg13[%c0_39, %c160], %37 {strides = array<i32>} : memref<2x400xf32, #tpu.memory_space<vmem>>, vector<2x16xf32>,
    %c22 = arith.constant 22 : index
    %c0_40 = arith.constant 0 : index
    %39 = vector.load %arg12[%c22, %c0_40] : memref<50x16xf32, #tpu.memory_space<vmem>>, vector<2x16xf32>
    %c0_41 = arith.constant 0 : index
    %c176 = arith.constant 176 : index
    %40 = vector.load %arg13[%c0_41, %c176] : memref<2x400xf32, #tpu.memory_space<vmem>>, vector<2x16xf32>
    tpu.vector_store %arg13[%c0_41, %c176], %39 {strides = array<i32>} : memref<2x400xf32, #tpu.memory_space<vmem>>, vector<2x16xf32>,
    %c24 = arith.constant 24 : index
    %c0_42 = arith.constant 0 : index
    %41 = vector.load %arg12[%c24, %c0_42] : memref<50x16xf32, #tpu.memory_space<vmem>>, vector<2x16xf32>
    %c0_43 = arith.constant 0 : index
    %c192 = arith.constant 192 : index
    %42 = vector.load %arg13[%c0_43, %c192] : memref<2x400xf32, #tpu.memory_space<vmem>>, vector<2x16xf32>
    tpu.vector_store %arg13[%c0_43, %c192], %41 {strides = array<i32>} : memref<2x400xf32, #tpu.memory_space<vmem>>, vector<2x16xf32>,
    %c26 = arith.constant 26 : index
    %c0_44 = arith.constant 0 : index
    %43 = vector.load %arg12[%c26, %c0_44] : memref<50x16xf32, #tpu.memory_space<vmem>>, vector<2x16xf32>
    %c0_45 = arith.constant 0 : index
    %c208 = arith.constant 208 : index
    %44 = vector.load %arg13[%c0_45, %c208] : memref<2x400xf32, #tpu.memory_space<vmem>>, vector<2x16xf32>
    tpu.vector_store %arg13[%c0_45, %c208], %43 {strides = array<i32>} : memref<2x400xf32, #tpu.memory_space<vmem>>, vector<2x16xf32>,
    %c28 = arith.constant 28 : index
    %c0_46 = arith.constant 0 : index
    %45 = vector.load %arg12[%c28, %c0_46] : memref<50x16xf32, #tpu.memory_space<vmem>>, vector<2x16xf32>
    %c0_47 = arith.constant 0 : index
    %c224 = arith.constant 224 : index
    %46 = vector.load %arg13[%c0_47, %c224] : memref<2x400xf32, #tpu.memory_space<vmem>>, vector<2x16xf32>
    tpu.vector_store %arg13[%c0_47, %c224], %45 {strides = array<i32>} : memref<2x400xf32, #tpu.memory_space<vmem>>, vector<2x16xf32>,
    %c30 = arith.constant 30 : index
    %c0_48 = arith.constant 0 : index
    %47 = vector.load %arg12[%c30, %c0_48] : memref<50x16xf32, #tpu.memory_space<vmem>>, vector<2x16xf32>
    %c0_49 = arith.constant 0 : index
    %c240 = arith.constant 240 : index
    %48 = vector.load %arg13[%c0_49, %c240] : memref<2x400xf32, #tpu.memory_space<vmem>>, vector<2x16xf32>
    tpu.vector_store %arg13[%c0_49, %c240], %47 {strides = array<i32>} : memref<2x400xf32, #tpu.memory_space<vmem>>, vector<2x16xf32>,
    %c32_50 = arith.constant 32 : index
    %c0_51 = arith.constant 0 : index
    %49 = vector.load %arg12[%c32_50, %c0_51] : memref<50x16xf32, #tpu.memory_space<vmem>>, vector<2x16xf32>
    %c0_52 = arith.constant 0 : index
    %c256 = arith.constant 256 : index
    %50 = vector.load %arg13[%c0_52, %c256] : memref<2x400xf32, #tpu.memory_space<vmem>>, vector<2x16xf32>
    tpu.vector_store %arg13[%c0_52, %c256], %49 {strides = array<i32>} : memref<2x400xf32, #tpu.memory_space<vmem>>, vector<2x16xf32>,
    %c34 = arith.constant 34 : index
    %c0_53 = arith.constant 0 : index
    %51 = vector.load %arg12[%c34, %c0_53] : memref<50x16xf32, #tpu.memory_space<vmem>>, vector<2x16xf32>
    %c0_54 = arith.constant 0 : index
    %c272 = arith.constant 272 : index
    %52 = vector.load %arg13[%c0_54, %c272] : memref<2x400xf32, #tpu.memory_space<vmem>>, vector<2x16xf32>
    tpu.vector_store %arg13[%c0_54, %c272], %51 {strides = array<i32>} : memref<2x400xf32, #tpu.memory_space<vmem>>, vector<2x16xf32>,
    %c36 = arith.constant 36 : index
    %c0_55 = arith.constant 0 : index
    %53 = vector.load %arg12[%c36, %c0_55] : memref<50x16xf32, #tpu.memory_space<vmem>>, vector<2x16xf32>
    %c0_56 = arith.constant 0 : index
    %c288 = arith.constant 288 : index
    %54 = vector.load %arg13[%c0_56, %c288] : memref<2x400xf32, #tpu.memory_space<vmem>>, vector<2x16xf32>
    tpu.vector_store %arg13[%c0_56, %c288], %53 {strides = array<i32>} : memref<2x400xf32, #tpu.memory_space<vmem>>, vector<2x16xf32>,
    %c38 = arith.constant 38 : index
    %c0_57 = arith.constant 0 : index
    %55 = vector.load %arg12[%c38, %c0_57] : memref<50x16xf32, #tpu.memory_space<vmem>>, vector<2x16xf32>
    %c0_58 = arith.constant 0 : index
    %c304 = arith.constant 304 : index
    %56 = vector.load %arg13[%c0_58, %c304] : memref<2x400xf32, #tpu.memory_space<vmem>>, vector<2x16xf32>
    tpu.vector_store %arg13[%c0_58, %c304], %55 {strides = array<i32>} : memref<2x400xf32, #tpu.memory_space<vmem>>, vector<2x16xf32>,
    %c40 = arith.constant 40 : index
    %c0_59 = arith.constant 0 : index
    %57 = vector.load %arg12[%c40, %c0_59] : memref<50x16xf32, #tpu.memory_space<vmem>>, vector<2x16xf32>
    %c0_60 = arith.constant 0 : index
    %c320 = arith.constant 320 : index
    %58 = vector.load %arg13[%c0_60, %c320] : memref<2x400xf32, #tpu.memory_space<vmem>>, vector<2x16xf32>
    tpu.vector_store %arg13[%c0_60, %c320], %57 {strides = array<i32>} : memref<2x400xf32, #tpu.memory_space<vmem>>, vector<2x16xf32>,
    %c42 = arith.constant 42 : index
    %c0_61 = arith.constant 0 : index
    %59 = vector.load %arg12[%c42, %c0_61] : memref<50x16xf32, #tpu.memory_space<vmem>>, vector<2x16xf32>
    %c0_62 = arith.constant 0 : index
    %c336 = arith.constant 336 : index
    %60 = vector.load %arg13[%c0_62, %c336] : memref<2x400xf32, #tpu.memory_space<vmem>>, vector<2x16xf32>
    tpu.vector_store %arg13[%c0_62, %c336], %59 {strides = array<i32>} : memref<2x400xf32, #tpu.memory_space<vmem>>, vector<2x16xf32>,
    %c44 = arith.constant 44 : index
    %c0_63 = arith.constant 0 : index
    %61 = vector.load %arg12[%c44, %c0_63] : memref<50x16xf32, #tpu.memory_space<vmem>>, vector<2x16xf32>
    %c0_64 = arith.constant 0 : index
    %c352 = arith.constant 352 : index
    %62 = vector.load %arg13[%c0_64, %c352] : memref<2x400xf32, #tpu.memory_space<vmem>>, vector<2x16xf32>
    tpu.vector_store %arg13[%c0_64, %c352], %61 {strides = array<i32>} : memref<2x400xf32, #tpu.memory_space<vmem>>, vector<2x16xf32>,
    %c46 = arith.constant 46 : index
    %c0_65 = arith.constant 0 : index
    %63 = vector.load %arg12[%c46, %c0_65] : memref<50x16xf32, #tpu.memory_space<vmem>>, vector<2x16xf32>
    %c0_66 = arith.constant 0 : index
    %c368 = arith.constant 368 : index
    %64 = vector.load %arg13[%c0_66, %c368] : memref<2x400xf32, #tpu.memory_space<vmem>>, vector<2x16xf32>
    tpu.vector_store %arg13[%c0_66, %c368], %63 {strides = array<i32>} : memref<2x400xf32, #tpu.memory_space<vmem>>, vector<2x16xf32>,
    %c48_67 = arith.constant 48 : index
    %c0_68 = arith.constant 0 : index
    %65 = vector.load %arg12[%c48_67, %c0_68] : memref<50x16xf32, #tpu.memory_space<vmem>>, vector<2x16xf32>
    %c0_69 = arith.constant 0 : index
    %c384 = arith.constant 384 : index
    %66 = vector.load %arg13[%c0_69, %c384] : memref<2x400xf32, #tpu.memory_space<vmem>>, vector<2x16xf32>
    tpu.vector_store %arg13[%c0_69, %c384], %65 {strides = array<i32>} : memref<2x400xf32, #tpu.memory_space<vmem>>, vector<2x16xf32>,
    %c0_70 = arith.constant 0 : index
    %c0_71 = arith.constant 0 : index
    %67 = vector.load %arg13[%c0_70, %c0_71] : memref<2x400xf32, #tpu.memory_space<vmem>>, vector<2x400xf32>
    %c0_72 = arith.constant 0 : index
    %c0_73 = arith.constant 0 : index
    %68 = vector.load %arg4[%c0_72, %c0_73] : memref<400x120xf32, #tpu.memory_space<vmem>>, vector<400x120xf32>
    %cst_74 = arith.constant dense<0.000000e+00> : vector<2x120xf32>
    %69 = tpu.matmul %67, %68, %cst_74 {dimension_numbers = #tpu.dot_dimension_numbers<[1], [0], [0], [1], [0, 0, 1, 1], [], []>} : vector<2x400xf32>, vector<400x120xf32>, vector<2x120xf32> -> vector<2x120xf32>
    %c0_75 = arith.constant 0 : index
    %c0_76 = arith.constant 0 : index
    %70 = vector.load %arg5[%c0_75, %c0_76] : memref<1x120xf32, #tpu.memory_space<vmem>>, vector<1x120xf32>
    %71 = vector.broadcast %70 : vector<1x120xf32> to vector<2x120xf32>
    %72 = arith.addf %69, %71 : vector<2x120xf32>
    %cst_77 = arith.constant 0.000000e+00 : f32
    %73 = vector.broadcast %cst_77 : f32 to vector<2x120xf32>
    %74 = arith.maximumf %72, %73 : vector<2x120xf32>
    %c0_78 = arith.constant 0 : index
    %c0_79 = arith.constant 0 : index
    %75 = vector.load %arg6[%c0_78, %c0_79] : memref<120x84xf32, #tpu.memory_space<vmem>>, vector<120x84xf32>
    %cst_80 = arith.constant dense<0.000000e+00> : vector<2x84xf32>
    %76 = tpu.matmul %74, %75, %cst_80 {dimension_numbers = #tpu.dot_dimension_numbers<[1], [0], [0], [1], [0, 0, 1, 1], [], []>} : vector<2x120xf32>, vector<120x84xf32>, vector<2x84xf32> -> vector<2x84xf32>
    %c0_81 = arith.constant 0 : index
    %c0_82 = arith.constant 0 : index
    %77 = vector.load %arg7[%c0_81, %c0_82] : memref<1x84xf32, #tpu.memory_space<vmem>>, vector<1x84xf32>
    %78 = vector.broadcast %77 : vector<1x84xf32> to vector<2x84xf32>
    %79 = arith.addf %76, %78 : vector<2x84xf32>
    %cst_83 = arith.constant 0.000000e+00 : f32
    %80 = vector.broadcast %cst_83 : f32 to vector<2x84xf32>
    %81 = arith.maximumf %79, %80 : vector<2x84xf32>
    %c0_84 = arith.constant 0 : index
    %c0_85 = arith.constant 0 : index
    %82 = vector.load %arg8[%c0_84, %c0_85] : memref<84x10xf32, #tpu.memory_space<vmem>>, vector<84x10xf32>
    %cst_86 = arith.constant dense<0.000000e+00> : vector<2x10xf32>
    %83 = tpu.matmul %81, %82, %cst_86 {dimension_numbers = #tpu.dot_dimension_numbers<[1], [0], [0], [1], [0, 0, 1, 1], [], []>} : vector<2x84xf32>, vector<84x10xf32>, vector<2x10xf32> -> vector<2x10xf32>
    %c0_87 = arith.constant 0 : index
    %c0_88 = arith.constant 0 : index
    %84 = vector.load %arg9[%c0_87, %c0_88] : memref<1x10xf32, #tpu.memory_space<vmem>>, vector<1x10xf32>
    %85 = vector.broadcast %84 : vector<1x10xf32> to vector<2x10xf32>
    %86 = arith.addf %83, %85 : vector<2x10xf32>
    %c0_89 = arith.constant 0 : index
    %c0_90 = arith.constant 0 : index
    %87 = vector.load %arg10[%c0_89, %c0_90] : memref<2x10xf32, #tpu.memory_space<vmem>>, vector<2x10xf32>
    tpu.vector_store %arg10[%c0_89, %c0_90], %86 {strides = array<i32>} : memref<2x10xf32, #tpu.memory_space<vmem>>, vector<2x10xf32>,
    return
  }
  func.func @transform_0(%arg0: i32) -> (i32, i32) {
    %c0_i32 = arith.constant 0 : i32
    %c0_i32_0 = arith.constant 0 : i32
    %c0_i32_1 = arith.constant 0 : i32
    return %c0_i32, %c0_i32_0 : i32, i32
  }
  func.func @transform_1(%arg0: i32) -> (i32, i32) {
    %c0_i32 = arith.constant 0 : i32
    %c0_i32_0 = arith.constant 0 : i32
    %c0_i32_1 = arith.constant 0 : i32
    return %c0_i32, %c0_i32_0 : i32, i32
  }
  func.func @transform_2(%arg0: i32) -> (i32, i32) {
    %c0_i32 = arith.constant 0 : i32
    %c0_i32_0 = arith.constant 0 : i32
    %c0_i32_1 = arith.constant 0 : i32
    return %c0_i32, %c0_i32_0 : i32, i32
  }
  func.func @transform_3(%arg0: i32) -> (i32, i32) {
    %c0_i32 = arith.constant 0 : i32
    %c0_i32_0 = arith.constant 0 : i32
    %c0_i32_1 = arith.constant 0 : i32
    return %c0_i32, %c0_i32_0 : i32, i32
  }
  func.func @transform_4(%arg0: i32) -> (i32, i32) {
    %c0_i32 = arith.constant 0 : i32
    %c0_i32_0 = arith.constant 0 : i32
    %c0_i32_1 = arith.constant 0 : i32
    return %c0_i32, %c0_i32_0 : i32, i32
  }
  func.func @transform_5(%arg0: i32) -> (i32, i32) {
    %c0_i32 = arith.constant 0 : i32
    %c0_i32_0 = arith.constant 0 : i32
    %c0_i32_1 = arith.constant 0 : i32
    return %c0_i32, %c0_i32_0 : i32, i32
  }
  func.func @transform_6(%arg0: i32) -> (i32, i32) {
    %c0_i32 = arith.constant 0 : i32
    %c0_i32_0 = arith.constant 0 : i32
    %c0_i32_1 = arith.constant 0 : i32
    return %c0_i32, %c0_i32_0 : i32, i32
  }
  func.func @transform_7(%arg0: i32) -> (i32, i32) {
    %c0_i32 = arith.constant 0 : i32
    %c0_i32_0 = arith.constant 0 : i32
    %c0_i32_1 = arith.constant 0 : i32
    return %c0_i32, %c0_i32_0 : i32, i32
  }
  func.func @transform_8(%arg0: i32) -> (i32, i32) {
    %c0_i32 = arith.constant 0 : i32
    %c0_i32_0 = arith.constant 0 : i32
    %c0_i32_1 = arith.constant 0 : i32
    return %c0_i32, %c0_i32_0 : i32, i32
  }
  func.func @transform_9(%arg0: i32) -> (i32, i32) {
    %c0_i32 = arith.constant 0 : i32
    %c0_i32_0 = arith.constant 0 : i32
    %c0_i32_1 = arith.constant 0 : i32
    return %c0_i32, %c0_i32_0 : i32, i32
  }
}

</mosaic_0001>

<llo_original>
// kernel: cnn_forward.2
$region0: #{cnn_forward.2}
  #allocation0 [shape = 'u32[]', space=smem, size = 0x4, offset = 0x4, fixed_abs, tag = 'smem constant byte address 0x4 - core index']
  #allocation1 [shape = 'u32[72,128]{1,0:T(1,128)}', space=vmem, size = 0x9000, scoped, tag = 'internal scratch']
  #allocation2 [shape = 'f32[1568,9]{1,0:T(8,128)}', space=vmem, size = 0xc4000, scoped, tag = 'scratch operand']
  #allocation3 [shape = 'f32[1568,6]{1,0:T(8,128)}', space=vmem, size = 0xc4000, scoped, tag = 'scratch operand']
  %s0 = inlined_call_operand.vmem [shape: f32[4,392,9], index: 0, kind: input, shape index: {}]
  %s1 = inlined_call_operand.vmem [shape: f32[9,6], index: 1, kind: input, shape index: {}]
  %s2 = inlined_call_operand.vmem [shape: f32[1,6], index: 2, kind: input, shape index: {}]
  %s3 = inlined_call_operand.vmem [shape: f32[392,6], index: 3, kind: output, shape index: {}]
  %s4 = sld [smem:[#allocation0]]
  $region22: #{cnn_forward.2} parent=0
    _
  %s6 = ssub.s32 1, %s4
  %s7 = scalar_select 0, %s6, %s4
  // Predicated region
  $region2: #{cnn_forward.2} parent=0 // pred_check
    _
  $region3: #{cnn_forward.2} parent=0 // pred_check_branch
    %9 = sbr.rel (0) target = $region5
  $region4: #{cnn_forward.2} parent=0 // pred_region
    _
  $region5: #{cnn_forward.2} parent=0 // pred_fallthru
    _
  // Predicated region
  $region6: #{cnn_forward.2} parent=0 // pred_check
    _
  $region7: #{cnn_forward.2} parent=0 // pred_check_branch
    %11 = sbr.rel (0) target = $region9
  $region8: #{cnn_forward.2} parent=0 // pred_region
    _
  $region9: #{cnn_forward.2} parent=0 // pred_fallthru
    _
  // Predicated region
  $region10: #{cnn_forward.2} parent=0 // pred_check
    _
  $region11: #{cnn_forward.2} parent=0 // pred_check_branch
    %13 = sbr.rel (0) target = $region13
  $region12: #{cnn_forward.2} parent=0 // pred_region
    _
  $region13: #{cnn_forward.2} parent=0 // pred_fallthru
    _
  %v14 = vld [vmem:[%s0] sm:$0xff]
  %v15 = vld [vmem:[%s0 + $0x8] sm:$0xff]
  %v16 = vld [vmem:[%s0 + $0x10] sm:$0xff]
  %v17 = vld [vmem:[%s0 + $0x18] sm:$0xff]
  %v18 = vld [vmem:[%s0 + $0x20] sm:$0xff]
  %v19 = vld [vmem:[%s0 + $0x28] sm:$0xff]
  %v20 = vld [vmem:[%s0 + $0x30] sm:$0xff]
  %v21 = vld [vmem:[%s0 + $0x38] sm:$0xff]
  %v22 = vld [vmem:[%s0 + $0x40] sm:$0xff]
  %v23 = vld [vmem:[%s0 + $0x48] sm:$0xff]
  %v24 = vld [vmem:[%s0 + $0x50] sm:$0xff]
  %v25 = vld [vmem:[%s0 + $0x58] sm:$0xff]
  %v26 = vld [vmem:[%s0 + $0x60] sm:$0xff]
  %v27 = vld [vmem:[%s0 + $0x68] sm:$0xff]
  %v28 = vld [vmem:[%s0 + $0x70] sm:$0xff]
  %v29 = vld [vmem:[%s0 + $0x78] sm:$0xff]
  %v30 = vld [vmem:[%s0 + $0x80] sm:$0xff]
  %v31 = vld [vmem:[%s0 + $0x88] sm:$0xff]
  %v32 = vld [vmem:[%s0 + $0x90] sm:$0xff]
  %v33 = vld [vmem:[%s0 + $0x98] sm:$0xff]
  %v34 = vld [vmem:[%s0 + $0xa0] sm:$0xff]
  %v35 = vld [vmem:[%s0 + $0xa8] sm:$0xff]
  %v36 = vld [vmem:[%s0 + $0xb0] sm:$0xff]
  %v37 = vld [vmem:[%s0 + $0xb8] sm:$0xff]
  %v38 = vld [vmem:[%s0 + $0xc0] sm:$0xff]
  %v39 = vld [vmem:[%s0 + $0xc8] sm:$0xff]
  %v40 = vld [vmem:[%s0 + $0xd0] sm:$0xff]
  %v41 = vld [vmem:[%s0 + $0xd8] sm:$0xff]
  %v42 = vld [vmem:[%s0 + $0xe0] sm:$0xff]
  %v43 = vld [vmem:[%s0 + $0xe8] sm:$0xff]
  %v44 = vld [vmem:[%s0 + $0xf0] sm:$0xff]
  %v45 = vld [vmem:[%s0 + $0xf8] sm:$0xff]
  %v46 = vld [vmem:[%s0 + $0x100] sm:$0xff]
  %v47 = vld [vmem:[%s0 + $0x108] sm:$0xff]
  %v48 = vld [vmem:[%s0 + $0x110] sm:$0xff]
  %v49 = vld [vmem:[%s0 + $0x118] sm:$0xff]
  %v50 = vld [vmem:[%s0 + $0x120] sm:$0xff]
  %v51 = vld [vmem:[%s0 + $0x128] sm:$0xff]
  %v52 = vld [vmem:[%s0 + $0x130] sm:$0xff]
  %v53 = vld [vmem:[%s0 + $0x138] sm:$0xff]
  %v54 = vld [vmem:[%s0 + $0x140] sm:$0xff]
  %v55 = vld [vmem:[%s0 + $0x148] sm:$0xff]
  %v56 = vld [vmem:[%s0 + $0x150] sm:$0xff]
  %v57 = vld [vmem:[%s0 + $0x158] sm:$0xff]
  %v58 = vld [vmem:[%s0 + $0x160] sm:$0xff]
  %v59 = vld [vmem:[%s0 + $0x168] sm:$0xff]
  %v60 = vld [vmem:[%s0 + $0x170] sm:$0xff]
  %v61 = vld [vmem:[%s0 + $0x178] sm:$0xff]
  %v62 = vld [vmem:[%s0 + $0x180] sm:$0xff]
  %vm63 = vcmask 72704
  %64 = vst.msk [vmem:[#allocation2] sm:$0xff] %vm63, %v14
  %65 = vst.msk [vmem:[#allocation2 + $0x8] sm:$0xff] %vm63, %v15
  %66 = vst.msk [vmem:[#allocation2 + $0x10] sm:$0xff] %vm63, %v16
  %67 = vst.msk [vmem:[#allocation2 + $0x18] sm:$0xff] %vm63, %v17
  %68 = vst.msk [vmem:[#allocation2 + $0x20] sm:$0xff] %vm63, %v18
  %69 = vst.msk [vmem:[#allocation2 + $0x28] sm:$0xff] %vm63, %v19
  %70 = vst.msk [vmem:[#allocation2 + $0x30] sm:$0xff] %vm63, %v20
  %71 = vst.msk [vmem:[#allocation2 + $0x38] sm:$0xff] %vm63, %v21
  %72 = vst.msk [vmem:[#allocation2 + $0x40] sm:$0xff] %vm63, %v22
  %73 = vst.msk [vmem:[#allocation2 + $0x48] sm:$0xff] %vm63, %v23
  %74 = vst.msk [vmem:[#allocation2 + $0x50] sm:$0xff] %vm63, %v24
  %75 = vst.msk [vmem:[#allocation2 + $0x58] sm:$0xff] %vm63, %v25
  %76 = vst.msk [vmem:[#allocation2 + $0x60] sm:$0xff] %vm63, %v26
  %77 = vst.msk [vmem:[#allocation2 + $0x68] sm:$0xff] %vm63, %v27
  %78 = vst.msk [vmem:[#allocation2 + $0x70] sm:$0xff] %vm63, %v28
  %79 = vst.msk [vmem:[#allocation2 + $0x78] sm:$0xff] %vm63, %v29
  %80 = vst.msk [vmem:[#allocation2 + $0x80] sm:$0xff] %vm63, %v30
  %81 = vst.msk [vmem:[#allocation2 + $0x88] sm:$0xff] %vm63, %v31
  %82 = vst.msk [vmem:[#allocation2 + $0x90] sm:$0xff] %vm63, %v32
  %83 = vst.msk [vmem:[#allocation2 + $0x98] sm:$0xff] %vm63, %v33
  %84 = vst.msk [vmem:[#allocation2 + $0xa0] sm:$0xff] %vm63, %v34
  %85 = vst.msk [vmem:[#allocation2 + $0xa8] sm:$0xff] %vm63, %v35
  %86 = vst.msk [vmem:[#allocation2 + $0xb0] sm:$0xff] %vm63, %v36
  %87 = vst.msk [vmem:[#allocation2 + $0xb8] sm:$0xff] %vm63, %v37
  %88 = vst.msk [vmem:[#allocation2 + $0xc0] sm:$0xff] %vm63, %v38
  %89 = vst.msk [vmem:[#allocation2 + $0xc8] sm:$0xff] %vm63, %v39
  %90 = vst.msk [vmem:[#allocation2 + $0xd0] sm:$0xff] %vm63, %v40
  %91 = vst.msk [vmem:[#allocation2 + $0xd8] sm:$0xff] %vm63, %v41
  %92 = vst.msk [vmem:[#allocation2 + $0xe0] sm:$0xff] %vm63, %v42
  %93 = vst.msk [vmem:[#allocation2 + $0xe8] sm:$0xff] %vm63, %v43
  %94 = vst.msk [vmem:[#allocation2 + $0xf0] sm:$0xff] %vm63, %v44
  %95 = vst.msk [vmem:[#allocation2 + $0xf8] sm:$0xff] %vm63, %v45
  %96 = vst.msk [vmem:[#allocation2 + $0x100] sm:$0xff] %vm63, %v46
  %97 = vst.msk [vmem:[#allocation2 + $0x108] sm:$0xff] %vm63, %v47
  %98 = vst.msk [vmem:[#allocation2 + $0x110] sm:$0xff] %vm63, %v48
  %99 = vst.msk [vmem:[#allocation2 + $0x118] sm:$0xff] %vm63, %v49
  %100 = vst.msk [vmem:[#allocation2 + $0x120] sm:$0xff] %vm63, %v50
  %101 = vst.msk [vmem:[#allocation2 + $0x128] sm:$0xff] %vm63, %v51
  %102 = vst.msk [vmem:[#allocation2 + $0x130] sm:$0xff] %vm63, %v52
  %103 = vst.msk [vmem:[#allocation2 + $0x138] sm:$0xff] %vm63, %v53
  %104 = vst.msk [vmem:[#allocation2 + $0x140] sm:$0xff] %vm63, %v54
  %105 = vst.msk [vmem:[#allocation2 + $0x148] sm:$0xff] %vm63, %v55
  %106 = vst.msk [vmem:[#allocation2 + $0x150] sm:$0xff] %vm63, %v56
  %107 = vst.msk [vmem:[#allocation2 + $0x158] sm:$0xff] %vm63, %v57
  %108 = vst.msk [vmem:[#allocation2 + $0x160] sm:$0xff] %vm63, %v58
  %109 = vst.msk [vmem:[#allocation2 + $0x168] sm:$0xff] %vm63, %v59
  %110 = vst.msk [vmem:[#allocation2 + $0x170] sm:$0xff] %vm63, %v60
  %111 = vst.msk [vmem:[#allocation2 + $0x178] sm:$0xff] %vm63, %v61
  %112 = vst.msk [vmem:[#allocation2 + $0x180] sm:$0xff] %vm63, %v62
  %s113 = scalar_lea.vmem %s0, 392
  %v114 = vld [vmem:[%s113] sm:$0xff]
  %v115 = vld [vmem:[%s113 + $0x8] sm:$0xff]
  %v116 = vld [vmem:[%s113 + $0x10] sm:$0xff]
  %v117 = vld [vmem:[%s113 + $0x18] sm:$0xff]
  %v118 = vld [vmem:[%s113 + $0x20] sm:$0xff]
  %v119 = vld [vmem:[%s113 + $0x28] sm:$0xff]
  %v120 = vld [vmem:[%s113 + $0x30] sm:$0xff]
  %v121 = vld [vmem:[%s113 + $0x38] sm:$0xff]
  %v122 = vld [vmem:[%s113 + $0x40] sm:$0xff]
  %v123 = vld [vmem:[%s113 + $0x48] sm:$0xff]
  %v124 = vld [vmem:[%s113 + $0x50] sm:$0xff]
  %v125 = vld [vmem:[%s113 + $0x58] sm:$0xff]
  %v126 = vld [vmem:[%s113 + $0x60] sm:$0xff]
  %v127 = vld [vmem:[%s113 + $0x68] sm:$0xff]
  %v128 = vld [vmem:[%s113 + $0x70] sm:$0xff]
  %v129 = vld [vmem:[%s113 + $0x78] sm:$0xff]
  %v130 = vld [vmem:[%s113 + $0x80] sm:$0xff]
  %v131 = vld [vmem:[%s113 + $0x88] sm:$0xff]
  %v132 = vld [vmem:[%s113 + $0x90] sm:$0xff]
  %v133 = vld [vmem:[%s113 + $0x98] sm:$0xff]
  %v134 = vld [vmem:[%s113 + $0xa0] sm:$0xff]
  %v135 = vld [vmem:[%s113 + $0xa8] sm:$0xff]
  %v136 = vld [vmem:[%s113 + $0xb0] sm:$0xff]
  %v137 = vld [vmem:[%s113 + $0xb8] sm:$0xff]
  %v138 = vld [vmem:[%s113 + $0xc0] sm:$0xff]
  %v139 = vld [vmem:[%s113 + $0xc8] sm:$0xff]
  %v140 = vld [vmem:[%s113 + $0xd0] sm:$0xff]
  %v141 = vld [vmem:[%s113 + $0xd8] sm:$0xff]
  %v142 = vld [vmem:[%s113 + $0xe0] sm:$0xff]
  %v143 = vld [vmem:[%s113 + $0xe8] sm:$0xff]
  %v144 = vld [vmem:[%s113 + $0xf0] sm:$0xff]
  %v145 = vld [vmem:[%s113 + $0xf8] sm:$0xff]
  %v146 = vld [vmem:[%s113 + $0x100] sm:$0xff]
  %v147 = vld [vmem:[%s113 + $0x108] sm:$0xff]
  %v148 = vld [vmem:[%s113 + $0x110] sm:$0xff]
  %v149 = vld [vmem:[%s113 + $0x118] sm:$0xff]
  %v150 = vld [vmem:[%s113 + $0x120] sm:$0xff]
  %v151 = vld [vmem:[%s113 + $0x128] sm:$0xff]
  %v152 = vld [vmem:[%s113 + $0x130] sm:$0xff]
  %v153 = vld [vmem:[%s113 + $0x138] sm:$0xff]
  %v154 = vld [vmem:[%s113 + $0x140] sm:$0xff]
  %v155 = vld [vmem:[%s113 + $0x148] sm:$0xff]
  %v156 = vld [vmem:[%s113 + $0x150] sm:$0xff]
  %v157 = vld [vmem:[%s113 + $0x158] sm:$0xff]
  %v158 = vld [vmem:[%s113 + $0x160] sm:$0xff]
  %v159 = vld [vmem:[%s113 + $0x168] sm:$0xff]
  %v160 = vld [vmem:[%s113 + $0x170] sm:$0xff]
  %v161 = vld [vmem:[%s113 + $0x178] sm:$0xff]
  %v162 = vld [vmem:[%s113 + $0x180] sm:$0xff]
  %163 = vst.msk [vmem:[#allocation2 + $0x188] sm:$0xff] %vm63, %v114
  %164 = vst.msk [vmem:[#allocation2 + $0x190] sm:$0xff] %vm63, %v115
  %165 = vst.msk [vmem:[#allocation2 + $0x198] sm:$0xff] %vm63, %v116
  %166 = vst.msk [vmem:[#allocation2 + $0x1a0] sm:$0xff] %vm63, %v117
  %167 = vst.msk [vmem:[#allocation2 + $0x1a8] sm:$0xff] %vm63, %v118
  %168 = vst.msk [vmem:[#allocation2 + $0x1b0] sm:$0xff] %vm63, %v119
  %169 = vst.msk [vmem:[#allocation2 + $0x1b8] sm:$0xff] %vm63, %v120
  %170 = vst.msk [vmem:[#allocation2 + $0x1c0] sm:$0xff] %vm63, %v121
  %171 = vst.msk [vmem:[#allocation2 + $0x1c8] sm:$0xff] %vm63, %v122
  %172 = vst.msk [vmem:[#allocation2 + $0x1d0] sm:$0xff] %vm63, %v123
  %173 = vst.msk [vmem:[#allocation2 + $0x1d8] sm:$0xff] %vm63, %v124
  %174 = vst.msk [vmem:[#allocation2 + $0x1e0] sm:$0xff] %vm63, %v125
  %175 = vst.msk [vmem:[#allocation2 + $0x1e8] sm:$0xff] %vm63, %v126
  %176 = vst.msk [vmem:[#allocation2 + $0x1f0] sm:$0xff] %vm63, %v127
  %177 = vst.msk [vmem:[#allocation2 + $0x1f8] sm:$0xff] %vm63, %v128
  %178 = vst.msk [vmem:[#allocation2 + $0x200] sm:$0xff] %vm63, %v129
  %179 = vst.msk [vmem:[#allocation2 + $0x208] sm:$0xff] %vm63, %v130
  %180 = vst.msk [vmem:[#allocation2 + $0x210] sm:$0xff] %vm63, %v131
  %181 = vst.msk [vmem:[#allocation2 + $0x218] sm:$0xff] %vm63, %v132
  %182 = vst.msk [vmem:[#allocation2 + $0x220] sm:$0xff] %vm63, %v133
  %183 = vst.msk [vmem:[#allocation2 + $0x228] sm:$0xff] %vm63, %v134
  %184 = vst.msk [vmem:[#allocation2 + $0x230] sm:$0xff] %vm63, %v135
  %185 = vst.msk [vmem:[#allocation2 + $0x238] sm:$0xff] %vm63, %v136
  %186 = vst.msk [vmem:[#allocation2 + $0x240] sm:$0xff] %vm63, %v137
  %187 = vst.msk [vmem:[#allocation2 + $0x248] sm:$0xff] %vm63, %v138
  %188 = vst.msk [vmem:[#allocation2 + $0x250] sm:$0xff] %vm63, %v139
  %189 = vst.msk [vmem:[#allocation2 + $0x258] sm:$0xff] %vm63, %v140
  %190 = vst.msk [vmem:[#allocation2 + $0x260] sm:$0xff] %vm63, %v141
  %191 = vst.msk [vmem:[#allocation2 + $0x268] sm:$0xff] %vm63, %v142
  %192 = vst.msk [vmem:[#allocation2 + $0x270] sm:$0xff] %vm63, %v143
  %193 = vst.msk [vmem:[#allocation2 + $0x278] sm:$0xff] %vm63, %v144
  %194 = vst.msk [vmem:[#allocation2 + $0x280] sm:$0xff] %vm63, %v145
  %195 = vst.msk [vmem:[#allocation2 + $0x288] sm:$0xff] %vm63, %v146
  %196 = vst.msk [vmem:[#allocation2 + $0x290] sm:$0xff] %vm63, %v147
  %197 = vst.msk [vmem:[#allocation2 + $0x298] sm:$0xff] %vm63, %v148
  %198 = vst.msk [vmem:[#allocation2 + $0x2a0] sm:$0xff] %vm63, %v149
  %199 = vst.msk [vmem:[#allocation2 + $0x2a8] sm:$0xff] %vm63, %v150
  %200 = vst.msk [vmem:[#allocation2 + $0x2b0] sm:$0xff] %vm63, %v151
  %201 = vst.msk [vmem:[#allocation2 + $0x2b8] sm:$0xff] %vm63, %v152
  %202 = vst.msk [vmem:[#allocation2 + $0x2c0] sm:$0xff] %vm63, %v153
  %203 = vst.msk [vmem:[#allocation2 + $0x2c8] sm:$0xff] %vm63, %v154
  %204 = vst.msk [vmem:[#allocation2 + $0x2d0] sm:$0xff] %vm63, %v155
  %205 = vst.msk [vmem:[#allocation2 + $0x2d8] sm:$0xff] %vm63, %v156
  %206 = vst.msk [vmem:[#allocation2 + $0x2e0] sm:$0xff] %vm63, %v157
  %207 = vst.msk [vmem:[#allocation2 + $0x2e8] sm:$0xff] %vm63, %v158
  %208 = vst.msk [vmem:[#allocation2 + $0x2f0] sm:$0xff] %vm63, %v159
  %209 = vst.msk [vmem:[#allocation2 + $0x2f8] sm:$0xff] %vm63, %v160
  %210 = vst.msk [vmem:[#allocation2 + $0x300] sm:$0xff] %vm63, %v161
  %211 = vst.msk [vmem:[#allocation2 + $0x308] sm:$0xff] %vm63, %v162
  %s212 = scalar_lea.vmem %s0, 784
  %v213 = vld [vmem:[%s212] sm:$0xff]
  %v214 = vld [vmem:[%s212 + $0x8] sm:$0xff]
  %v215 = vld [vmem:[%s212 + $0x10] sm:$0xff]
  %v216 = vld [vmem:[%s212 + $0x18] sm:$0xff]
  %v217 = vld [vmem:[%s212 + $0x20] sm:$0xff]
  %v218 = vld [vmem:[%s212 + $0x28] sm:$0xff]
  %v219 = vld [vmem:[%s212 + $0x30] sm:$0xff]
  %v220 = vld [vmem:[%s212 + $0x38] sm:$0xff]
  %v221 = vld [vmem:[%s212 + $0x40] sm:$0xff]
  %v222 = vld [vmem:[%s212 + $0x48] sm:$0xff]
  %v223 = vld [vmem:[%s212 + $0x50] sm:$0xff]
  %v224 = vld [vmem:[%s212 + $0x58] sm:$0xff]
  %v225 = vld [vmem:[%s212 + $0x60] sm:$0xff]
  %v226 = vld [vmem:[%s212 + $0x68] sm:$0xff]
  %v227 = vld [vmem:[%s212 + $0x70] sm:$0xff]
  %v228 = vld [vmem:[%s212 + $0x78] sm:$0xff]
  %v229 = vld [vmem:[%s212 + $0x80] sm:$0xff]
  %v230 = vld [vmem:[%s212 + $0x88] sm:$0xff]
  %v231 = vld [vmem:[%s212 + $0x90] sm:$0xff]
  %v232 = vld [vmem:[%s212 + $0x98] sm:$0xff]
  %v233 = vld [vmem:[%s212 + $0xa0] sm:$0xff]
  %v234 = vld [vmem:[%s212 + $0xa8] sm:$0xff]
  %v235 = vld [vmem:[%s212 + $0xb0] sm:$0xff]
  %v236 = vld [vmem:[%s212 + $0xb8] sm:$0xff]
  %v237 = vld [vmem:[%s212 + $0xc0] sm:$0xff]
  %v238 = vld [vmem:[%s212 + $0xc8] sm:$0xff]
  %v239 = vld [vmem:[%s212 + $0xd0] sm:$0xff]
  %v240 = vld [vmem:[%s212 + $0xd8] sm:$0xff]
  %v241 = vld [vmem:[%s212 + $0xe0] sm:$0xff]
  %v242 = vld [vmem:[%s212 + $0xe8] sm:$0xff]
  %v243 = vld [vmem:[%s212 + $0xf0] sm:$0xff]
  %v244 = vld [vmem:[%s212 + $0xf8] sm:$0xff]
  %v245 = vld [vmem:[%s212 + $0x100] sm:$0xff]
  %v246 = vld [vmem:[%s212 + $0x108] sm:$0xff]
  %v247 = vld [vmem:[%s212 + $0x110] sm:$0xff]
  %v248 = vld [vmem:[%s212 + $0x118] sm:$0xff]
  %v249 = vld [vmem:[%s212 + $0x120] sm:$0xff]
  %v250 = vld [vmem:[%s212 + $0x128] sm:$0xff]
  %v251 = vld [vmem:[%s212 + $0x130] sm:$0xff]
  %v252 = vld [vmem:[%s212 + $0x138] sm:$0xff]
  %v253 = vld [vmem:[%s212 + $0x140] sm:$0xff]
  %v254 = vld [vmem:[%s212 + $0x148] sm:$0xff]
  %v255 = vld [vmem:[%s212 + $0x150] sm:$0xff]
  %v256 = vld [vmem:[%s212 + $0x158] sm:$0xff]
  %v257 = vld [vmem:[%s212 + $0x160] sm:$0xff]
  %v258 = vld [vmem:[%s212 + $0x168] sm:$0xff]
  %v259 = vld [vmem:[%s212 + $0x170] sm:$0xff]
  %v260 = vld [vmem:[%s212 + $0x178] sm:$0xff]
  %v261 = vld [vmem:[%s212 + $0x180] sm:$0xff]
  %262 = vst.msk [vmem:[#allocation2 + $0x310] sm:$0xff] %vm63, %v213
  %263 = vst.msk [vmem:[#allocation2 + $0x318] sm:$0xff] %vm63, %v214
  %264 = vst.msk [vmem:[#allocation2 + $0x320] sm:$0xff] %vm63, %v215
  %265 = vst.msk [vmem:[#allocation2 + $0x328] sm:$0xff] %vm63, %v216
  %266 = vst.msk [vmem:[#allocation2 + $0x330] sm:$0xff] %vm63, %v217
  %267 = vst.msk [vmem:[#allocation2 + $0x338] sm:$0xff] %vm63, %v218
  %268 = vst.msk [vmem:[#allocation2 + $0x340] sm:$0xff] %vm63, %v219
  %269 = vst.msk [vmem:[#allocation2 + $0x348] sm:$0xff] %vm63, %v220
  %270 = vst.msk [vmem:[#allocation2 + $0x350] sm:$0xff] %vm63, %v221
  %271 = vst.msk [vmem:[#allocation2 + $0x358] sm:$0xff] %vm63, %v222
  %272 = vst.msk [vmem:[#allocation2 + $0x360] sm:$0xff] %vm63, %v223
  %273 = vst.msk [vmem:[#allocation2 + $0x368] sm:$0xff] %vm63, %v224
  %274 = vst.msk [vmem:[#allocation2 + $0x370] sm:$0xff] %vm63, %v225
  %275 = vst.msk [vmem:[#allocation2 + $0x378] sm:$0xff] %vm63, %v226
  %276 = vst.msk [vmem:[#allocation2 + $0x380] sm:$0xff] %vm63, %v227
  %277 = vst.msk [vmem:[#allocation2 + $0x388] sm:$0xff] %vm63, %v228
  %278 = vst.msk [vmem:[#allocation2 + $0x390] sm:$0xff] %vm63, %v229
  %279 = vst.msk [vmem:[#allocation2 + $0x398] sm:$0xff] %vm63, %v230
  %280 = vst.msk [vmem:[#allocation2 + $0x3a0] sm:$0xff] %vm63, %v231
  %281 = vst.msk [vmem:[#allocation2 + $0x3a8] sm:$0xff] %vm63, %v232
  %282 = vst.msk [vmem:[#allocation2 + $0x3b0] sm:$0xff] %vm63, %v233
  %283 = vst.msk [vmem:[#allocation2 + $0x3b8] sm:$0xff] %vm63, %v234
  %284 = vst.msk [vmem:[#allocation2 + $0x3c0] sm:$0xff] %vm63, %v235
  %285 = vst.msk [vmem:[#allocation2 + $0x3c8] sm:$0xff] %vm63, %v236
  %286 = vst.msk [vmem:[#allocation2 + $0x3d0] sm:$0xff] %vm63, %v237
  %287 = vst.msk [vmem:[#allocation2 + $0x3d8] sm:$0xff] %vm63, %v238
  %288 = vst.msk [vmem:[#allocation2 + $0x3e0] sm:$0xff] %vm63, %v239
  %289 = vst.msk [vmem:[#allocation2 + $0x3e8] sm:$0xff] %vm63, %v240
  %290 = vst.msk [vmem:[#allocation2 + $0x3f0] sm:$0xff] %vm63, %v241
  %291 = vst.msk [vmem:[#allocation2 + $0x3f8] sm:$0xff] %vm63, %v242
  %292 = vst.msk [vmem:[#allocation2 + $0x400] sm:$0xff] %vm63, %v243
  %293 = vst.msk [vmem:[#allocation2 + $0x408] sm:$0xff] %vm63, %v244
  %294 = vst.msk [vmem:[#allocation2 + $0x410] sm:$0xff] %vm63, %v245
  %295 = vst.msk [vmem:[#allocation2 + $0x418] sm:$0xff] %vm63, %v246
  %296 = vst.msk [vmem:[#allocation2 + $0x420] sm:$0xff] %vm63, %v247
  %297 = vst.msk [vmem:[#allocation2 + $0x428] sm:$0xff] %vm63, %v248
  %298 = vst.msk [vmem:[#allocation2 + $0x430] sm:$0xff] %vm63, %v249
  %299 = vst.msk [vmem:[#allocation2 + $0x438] sm:$0xff] %vm63, %v250
  %300 = vst.msk [vmem:[#allocation2 + $0x440] sm:$0xff] %vm63, %v251
  %301 = vst.msk [vmem:[#allocation2 + $0x448] sm:$0xff] %vm63, %v252
  %302 = vst.msk [vmem:[#allocation2 + $0x450] sm:$0xff] %vm63, %v253
  %303 = vst.msk [vmem:[#allocation2 + $0x458] sm:$0xff] %vm63, %v254
  %304 = vst.msk [vmem:[#allocation2 + $0x460] sm:$0xff] %vm63, %v255
  %305 = vst.msk [vmem:[#allocation2 + $0x468] sm:$0xff] %vm63, %v256
  %306 = vst.msk [vmem:[#allocation2 + $0x470] sm:$0xff] %vm63, %v257
  %307 = vst.msk [vmem:[#allocation2 + $0x478] sm:$0xff] %vm63, %v258
  %308 = vst.msk [vmem:[#allocation2 + $0x480] sm:$0xff] %vm63, %v259
  %309 = vst.msk [vmem:[#allocation2 + $0x488] sm:$0xff] %vm63, %v260
  %310 = vst.msk [vmem:[#allocation2 + $0x490] sm:$0xff] %vm63, %v261
  %s311 = scalar_lea.vmem %s0, 1176
  %v312 = vld [vmem:[%s311] sm:$0xff]
  %v313 = vld [vmem:[%s311 + $0x8] sm:$0xff]
  %v314 = vld [vmem:[%s311 + $0x10] sm:$0xff]
  %v315 = vld [vmem:[%s311 + $0x18] sm:$0xff]
  %v316 = vld [vmem:[%s311 + $0x20] sm:$0xff]
  %v317 = vld [vmem:[%s311 + $0x28] sm:$0xff]
  %v318 = vld [vmem:[%s311 + $0x30] sm:$0xff]
  %v319 = vld [vmem:[%s311 + $0x38] sm:$0xff]
  %v320 = vld [vmem:[%s311 + $0x40] sm:$0xff]
  %v321 = vld [vmem:[%s311 + $0x48] sm:$0xff]
  %v322 = vld [vmem:[%s311 + $0x50] sm:$0xff]
  %v323 = vld [vmem:[%s311 + $0x58] sm:$0xff]
  %v324 = vld [vmem:[%s311 + $0x60] sm:$0xff]
  %v325 = vld [vmem:[%s311 + $0x68] sm:$0xff]
  %v326 = vld [vmem:[%s311 + $0x70] sm:$0xff]
  %v327 = vld [vmem:[%s311 + $0x78] sm:$0xff]
  %v328 = vld [vmem:[%s311 + $0x80] sm:$0xff]
  %v329 = vld [vmem:[%s311 + $0x88] sm:$0xff]
  %v330 = vld [vmem:[%s311 + $0x90] sm:$0xff]
  %v331 = vld [vmem:[%s311 + $0x98] sm:$0xff]
  %v332 = vld [vmem:[%s311 + $0xa0] sm:$0xff]
  %v333 = vld [vmem:[%s311 + $0xa8] sm:$0xff]
  %v334 = vld [vmem:[%s311 + $0xb0] sm:$0xff]
  %v335 = vld [vmem:[%s311 + $0xb8] sm:$0xff]
  %v336 = vld [vmem:[%s311 + $0xc0] sm:$0xff]
  %v337 = vld [vmem:[%s311 + $0xc8] sm:$0xff]
  %v338 = vld [vmem:[%s311 + $0xd0] sm:$0xff]
  %v339 = vld [vmem:[%s311 + $0xd8] sm:$0xff]
  %v340 = vld [vmem:[%s311 + $0xe0] sm:$0xff]
  %v341 = vld [vmem:[%s311 + $0xe8] sm:$0xff]
  %v342 = vld [vmem:[%s311 + $0xf0] sm:$0xff]
  %v343 = vld [vmem:[%s311 + $0xf8] sm:$0xff]
  %v344 = vld [vmem:[%s311 + $0x100] sm:$0xff]
  %v345 = vld [vmem:[%s311 + $0x108] sm:$0xff]
  %v346 = vld [vmem:[%s311 + $0x110] sm:$0xff]
  %v347 = vld [vmem:[%s311 + $0x118] sm:$0xff]
  %v348 = vld [vmem:[%s311 + $0x120] sm:$0xff]
  %v349 = vld [vmem:[%s311 + $0x128] sm:$0xff]
  %v350 = vld [vmem:[%s311 + $0x130] sm:$0xff]
  %v351 = vld [vmem:[%s311 + $0x138] sm:$0xff]
  %v352 = vld [vmem:[%s311 + $0x140] sm:$0xff]
  %v353 = vld [vmem:[%s311 + $0x148] sm:$0xff]
  %v354 = vld [vmem:[%s311 + $0x150] sm:$0xff]
  %v355 = vld [vmem:[%s311 + $0x158] sm:$0xff]
  %v356 = vld [vmem:[%s311 + $0x160] sm:$0xff]
  %v357 = vld [vmem:[%s311 + $0x168] sm:$0xff]
  %v358 = vld [vmem:[%s311 + $0x170] sm:$0xff]
  %v359 = vld [vmem:[%s311 + $0x178] sm:$0xff]
  %v360 = vld [vmem:[%s311 + $0x180] sm:$0xff]
  %361 = vst.msk [vmem:[#allocation2 + $0x498] sm:$0xff] %vm63, %v312
  %362 = vst.msk [vmem:[#allocation2 + $0x4a0] sm:$0xff] %vm63, %v313
  %363 = vst.msk [vmem:[#allocation2 + $0x4a8] sm:$0xff] %vm63, %v314
  %364 = vst.msk [vmem:[#allocation2 + $0x4b0] sm:$0xff] %vm63, %v315
  %365 = vst.msk [vmem:[#allocation2 + $0x4b8] sm:$0xff] %vm63, %v316
  %366 = vst.msk [vmem:[#allocation2 + $0x4c0] sm:$0xff] %vm63, %v317
  %367 = vst.msk [vmem:[#allocation2 + $0x4c8] sm:$0xff] %vm63, %v318
  %368 = vst.msk [vmem:[#allocation2 + $0x4d0] sm:$0xff] %vm63, %v319
  %369 = vst.msk [vmem:[#allocation2 + $0x4d8] sm:$0xff] %vm63, %v320
  %370 = vst.msk [vmem:[#allocation2 + $0x4e0] sm:$0xff] %vm63, %v321
  %371 = vst.msk [vmem:[#allocation2 + $0x4e8] sm:$0xff] %vm63, %v322
  %372 = vst.msk [vmem:[#allocation2 + $0x4f0] sm:$0xff] %vm63, %v323
  %373 = vst.msk [vmem:[#allocation2 + $0x4f8] sm:$0xff] %vm63, %v324
  %374 = vst.msk [vmem:[#allocation2 + $0x500] sm:$0xff] %vm63, %v325
  %375 = vst.msk [vmem:[#allocation2 + $0x508] sm:$0xff] %vm63, %v326
  %376 = vst.msk [vmem:[#allocation2 + $0x510] sm:$0xff] %vm63, %v327
  %377 = vst.msk [vmem:[#allocation2 + $0x518] sm:$0xff] %vm63, %v328
  %378 = vst.msk [vmem:[#allocation2 + $0x520] sm:$0xff] %vm63, %v329
  %379 = vst.msk [vmem:[#allocation2 + $0x528] sm:$0xff] %vm63, %v330
  %380 = vst.msk [vmem:[#allocation2 + $0x530] sm:$0xff] %vm63, %v331
  %381 = vst.msk [vmem:[#allocation2 + $0x538] sm:$0xff] %vm63, %v332
  %382 = vst.msk [vmem:[#allocation2 + $0x540] sm:$0xff] %vm63, %v333
  %383 = vst.msk [vmem:[#allocation2 + $0x548] sm:$0xff] %vm63, %v334
  %384 = vst.msk [vmem:[#allocation2 + $0x550] sm:$0xff] %vm63, %v335
  %385 = vst.msk [vmem:[#allocation2 + $0x558] sm:$0xff] %vm63, %v336
  %386 = vst.msk [vmem:[#allocation2 + $0x560] sm:$0xff] %vm63, %v337
  %387 = vst.msk [vmem:[#allocation2 + $0x568] sm:$0xff] %vm63, %v338
  %388 = vst.msk [vmem:[#allocation2 + $0x570] sm:$0xff] %vm63, %v339
  %389 = vst.msk [vmem:[#allocation2 + $0x578] sm:$0xff] %vm63, %v340
  %390 = vst.msk [vmem:[#allocation2 + $0x580] sm:$0xff] %vm63, %v341
  %391 = vst.msk [vmem:[#allocation2 + $0x588] sm:$0xff] %vm63, %v342
  %392 = vst.msk [vmem:[#allocation2 + $0x590] sm:$0xff] %vm63, %v343
  %393 = vst.msk [vmem:[#allocation2 + $0x598] sm:$0xff] %vm63, %v344
  %394 = vst.msk [vmem:[#allocation2 + $0x5a0] sm:$0xff] %vm63, %v345
  %395 = vst.msk [vmem:[#allocation2 + $0x5a8] sm:$0xff] %vm63, %v346
  %396 = vst.msk [vmem:[#allocation2 + $0x5b0] sm:$0xff] %vm63, %v347
  %397 = vst.msk [vmem:[#allocation2 + $0x5b8] sm:$0xff] %vm63, %v348
  %398 = vst.msk [vmem:[#allocation2 + $0x5c0] sm:$0xff] %vm63, %v349
  %399 = vst.msk [vmem:[#allocation2 + $0x5c8] sm:$0xff] %vm63, %v350
  %400 = vst.msk [vmem:[#allocation2 + $0x5d0] sm:$0xff] %vm63, %v351
  %401 = vst.msk [vmem:[#allocation2 + $0x5d8] sm:$0xff] %vm63, %v352
  %402 = vst.msk [vmem:[#allocation2 + $0x5e0] sm:$0xff] %vm63, %v353
  %403 = vst.msk [vmem:[#allocation2 + $0x5e8] sm:$0xff] %vm63, %v354
  %404 = vst.msk [vmem:[#allocation2 + $0x5f0] sm:$0xff] %vm63, %v355
  %405 = vst.msk [vmem:[#allocation2 + $0x5f8] sm:$0xff] %vm63, %v356
  %406 = vst.msk [vmem:[#allocation2 + $0x600] sm:$0xff] %vm63, %v357
  %407 = vst.msk [vmem:[#allocation2 + $0x608] sm:$0xff] %vm63, %v358
  %408 = vst.msk [vmem:[#allocation2 + $0x610] sm:$0xff] %vm63, %v359
  %409 = vst.msk [vmem:[#allocation2 + $0x618] sm:$0xff] %vm63, %v360
  %v410 = vld [vmem:[#allocation2] sm:$0xff]
  %v411 = vld [vmem:[#allocation2 + $0x8] sm:$0xff]
  %v412 = vld [vmem:[#allocation2 + $0x10] sm:$0xff]
  %v413 = vld [vmem:[#allocation2 + $0x18] sm:$0xff]
  %v414 = vld [vmem:[#allocation2 + $0x20] sm:$0xff]
  %v415 = vld [vmem:[#allocation2 + $0x28] sm:$0xff]
  %v416 = vld [vmem:[#allocation2 + $0x30] sm:$0xff]
  %v417 = vld [vmem:[#allocation2 + $0x38] sm:$0xff]
  %v418 = vld [vmem:[#allocation2 + $0x40] sm:$0xff]
  %v419 = vld [vmem:[#allocation2 + $0x48] sm:$0xff]
  %v420 = vld [vmem:[#allocation2 + $0x50] sm:$0xff]
  %v421 = vld [vmem:[#allocation2 + $0x58] sm:$0xff]
  %v422 = vld [vmem:[#allocation2 + $0x60] sm:$0xff]
  %v423 = vld [vmem:[#allocation2 + $0x68] sm:$0xff]
  %v424 = vld [vmem:[#allocation2 + $0x70] sm:$0xff]
  %v425 = vld [vmem:[#allocation2 + $0x78] sm:$0xff]
  %v426 = vld [vmem:[#allocation2 + $0x80] sm:$0xff]
  %v427 = vld [vmem:[#allocation2 + $0x88] sm:$0xff]
  %v428 = vld [vmem:[#allocation2 + $0x90] sm:$0xff]
  %v429 = vld [vmem:[#allocation2 + $0x98] sm:$0xff]
  %v430 = vld [vmem:[#allocation2 + $0xa0] sm:$0xff]
  %v431 = vld [vmem:[#allocation2 + $0xa8] sm:$0xff]
  %v432 = vld [vmem:[#allocation2 + $0xb0] sm:$0xff]
  %v433 = vld [vmem:[#allocation2 + $0xb8] sm:$0xff]
  %v434 = vld [vmem:[#allocation2 + $0xc0] sm:$0xff]
  %v435 = vld [vmem:[#allocation2 + $0xc8] sm:$0xff]
  %v436 = vld [vmem:[#allocation2 + $0xd0] sm:$0xff]
  %v437 = vld [vmem:[#allocation2 + $0xd8] sm:$0xff]
  %v438 = vld [vmem:[#allocation2 + $0xe0] sm:$0xff]
  %v439 = vld [vmem:[#allocation2 + $0xe8] sm:$0xff]
  %v440 = vld [vmem:[#allocation2 + $0xf0] sm:$0xff]
  %v441 = vld [vmem:[#allocation2 + $0xf8] sm:$0xff]
  %v442 = vld [vmem:[#allocation2 + $0x100] sm:$0xff]
  %v443 = vld [vmem:[#allocation2 + $0x108] sm:$0xff]
  %v444 = vld [vmem:[#allocation2 + $0x110] sm:$0xff]
  %v445 = vld [vmem:[#allocation2 + $0x118] sm:$0xff]
  %v446 = vld [vmem:[#allocation2 + $0x120] sm:$0xff]
  %v447 = vld [vmem:[#allocation2 + $0x128] sm:$0xff]
  %v448 = vld [vmem:[#allocation2 + $0x130] sm:$0xff]
  %v449 = vld [vmem:[#allocation2 + $0x138] sm:$0xff]
  %v450 = vld [vmem:[#allocation2 + $0x140] sm:$0xff]
  %v451 = vld [vmem:[#allocation2 + $0x148] sm:$0xff]
  %v452 = vld [vmem:[#allocation2 + $0x150] sm:$0xff]
  %v453 = vld [vmem:[#allocation2 + $0x158] sm:$0xff]
  %v454 = vld [vmem:[#allocation2 + $0x160] sm:$0xff]
  %v455 = vld [vmem:[#allocation2 + $0x168] sm:$0xff]
  %v456 = vld [vmem:[#allocation2 + $0x170] sm:$0xff]
  %v457 = vld [vmem:[#allocation2 + $0x178] sm:$0xff]
  %v458 = vld [vmem:[#allocation2 + $0x180] sm:$0xff]
  %v459 = vld [vmem:[#allocation2 + $0x188] sm:$0xff]
  %v460 = vld [vmem:[#allocation2 + $0x190] sm:$0xff]
  %v461 = vld [vmem:[#allocation2 + $0x198] sm:$0xff]
  %v462 = vld [vmem:[#allocation2 + $0x1a0] sm:$0xff]
  %v463 = vld [vmem:[#allocation2 + $0x1a8] sm:$0xff]
  %v464 = vld [vmem:[#allocation2 + $0x1b0] sm:$0xff]
  %v465 = vld [vmem:[#allocation2 + $0x1b8] sm:$0xff]
  %v466 = vld [vmem:[#allocation2 + $0x1c0] sm:$0xff]
  %v467 = vld [vmem:[#allocation2 + $0x1c8] sm:$0xff]
  %v468 = vld [vmem:[#allocation2 + $0x1d0] sm:$0xff]
  %v469 = vld [vmem:[#allocation2 + $0x1d8] sm:$0xff]
  %v470 = vld [vmem:[#allocation2 + $0x1e0] sm:$0xff]
  %v471 = vld [vmem:[#allocation2 + $0x1e8] sm:$0xff]
  %v472 = vld [vmem:[#allocation2 + $0x1f0] sm:$0xff]
  %v473 = vld [vmem:[#allocation2 + $0x1f8] sm:$0xff]
  %v474 = vld [vmem:[#allocation2 + $0x200] sm:$0xff]
  %v475 = vld [vmem:[#allocation2 + $0x208] sm:$0xff]
  %v476 = vld [vmem:[#allocation2 + $0x210] sm:$0xff]
  %v477 = vld [vmem:[#allocation2 + $0x218] sm:$0xff]
  %v478 = vld [vmem:[#allocation2 + $0x220] sm:$0xff]
  %v479 = vld [vmem:[#allocation2 + $0x228] sm:$0xff]
  %v480 = vld [vmem:[#allocation2 + $0x230] sm:$0xff]
  %v481 = vld [vmem:[#allocation2 + $0x238] sm:$0xff]
  %v482 = vld [vmem:[#allocation2 + $0x240] sm:$0xff]
  %v483 = vld [vmem:[#allocation2 + $0x248] sm:$0xff]
  %v484 = vld [vmem:[#allocation2 + $0x250] sm:$0xff]
  %v485 = vld [vmem:[#allocation2 + $0x258] sm:$0xff]
  %v486 = vld [vmem:[#allocation2 + $0x260] sm:$0xff]
  %v487 = vld [vmem:[#allocation2 + $0x268] sm:$0xff]
  %v488 = vld [vmem:[#allocation2 + $0x270] sm:$0xff]
  %v489 = vld [vmem:[#allocation2 + $0x278] sm:$0xff]
  %v490 = vld [vmem:[#allocation2 + $0x280] sm:$0xff]
  %v491 = vld [vmem:[#allocation2 + $0x288] sm:$0xff]
  %v492 = vld [vmem:[#allocation2 + $0x290] sm:$0xff]
  %v493 = vld [vmem:[#allocation2 + $0x298] sm:$0xff]
  %v494 = vld [vmem:[#allocation2 + $0x2a0] sm:$0xff]
  %v495 = vld [vmem:[#allocation2 + $0x2a8] sm:$0xff]
  %v496 = vld [vmem:[#allocation2 + $0x2b0] sm:$0xff]
  %v497 = vld [vmem:[#allocation2 + $0x2b8] sm:$0xff]
  %v498 = vld [vmem:[#allocation2 + $0x2c0] sm:$0xff]
  %v499 = vld [vmem:[#allocation2 + $0x2c8] sm:$0xff]
  %v500 = vld [vmem:[#allocation2 + $0x2d0] sm:$0xff]
  %v501 = vld [vmem:[#allocation2 + $0x2d8] sm:$0xff]
  %v502 = vld [vmem:[#allocation2 + $0x2e0] sm:$0xff]
  %v503 = vld [vmem:[#allocation2 + $0x2e8] sm:$0xff]
  %v504 = vld [vmem:[#allocation2 + $0x2f0] sm:$0xff]
  %v505 = vld [vmem:[#allocation2 + $0x2f8] sm:$0xff]
  %v506 = vld [vmem:[#allocation2 + $0x300] sm:$0xff]
  %v507 = vld [vmem:[#allocation2 + $0x308] sm:$0xff]
  %v508 = vld [vmem:[#allocation2 + $0x310] sm:$0xff]
  %v509 = vld [vmem:[#allocation2 + $0x318] sm:$0xff]
  %v510 = vld [vmem:[#allocation2 + $0x320] sm:$0xff]
  %v511 = vld [vmem:[#allocation2 + $0x328] sm:$0xff]
  %v512 = vld [vmem:[#allocation2 + $0x330] sm:$0xff]
  %v513 = vld [vmem:[#allocation2 + $0x338] sm:$0xff]
  %v514 = vld [vmem:[#allocation2 + $0x340] sm:$0xff]
  %v515 = vld [vmem:[#allocation2 + $0x348] sm:$0xff]
  %v516 = vld [vmem:[#allocation2 + $0x350] sm:$0xff]
  %v517 = vld [vmem:[#allocation2 + $0x358] sm:$0xff]
  %v518 = vld [vmem:[#allocation2 + $0x360] sm:$0xff]
  %v519 = vld [vmem:[#allocation2 + $0x368] sm:$0xff]
  %v520 = vld [vmem:[#allocation2 + $0x370] sm:$0xff]
  %v521 = vld [vmem:[#allocation2 + $0x378] sm:$0xff]
  %v522 = vld [vmem:[#allocation2 + $0x380] sm:$0xff]
  %v523 = vld [vmem:[#allocation2 + $0x388] sm:$0xff]
  %v524 = vld [vmem:[#allocation2 + $0x390] sm:$0xff]
  %v525 = vld [vmem:[#allocation2 + $0x398] sm:$0xff]
  %v526 = vld [vmem:[#allocation2 + $0x3a0] sm:$0xff]
  %v527 = vld [vmem:[#allocation2 + $0x3a8] sm:$0xff]
  %v528 = vld [vmem:[#allocation2 + $0x3b0] sm:$0xff]
  %v529 = vld [vmem:[#allocation2 + $0x3b8] sm:$0xff]
  %v530 = vld [vmem:[#allocation2 + $0x3c0] sm:$0xff]
  %v531 = vld [vmem:[#allocation2 + $0x3c8] sm:$0xff]
  %v532 = vld [vmem:[#allocation2 + $0x3d0] sm:$0xff]
  %v533 = vld [vmem:[#allocation2 + $0x3d8] sm:$0xff]
  %v534 = vld [vmem:[#allocation2 + $0x3e0] sm:$0xff]
  %v535 = vld [vmem:[#allocation2 + $0x3e8] sm:$0xff]
  %v536 = vld [vmem:[#allocation2 + $0x3f0] sm:$0xff]
  %v537 = vld [vmem:[#allocation2 + $0x3f8] sm:$0xff]
  %v538 = vld [vmem:[#allocation2 + $0x400] sm:$0xff]
  %v539 = vld [vmem:[#allocation2 + $0x408] sm:$0xff]
  %v540 = vld [vmem:[#allocation2 + $0x410] sm:$0xff]
  %v541 = vld [vmem:[#allocation2 + $0x418] sm:$0xff]
  %v542 = vld [vmem:[#allocation2 + $0x420] sm:$0xff]
  %v543 = vld [vmem:[#allocation2 + $0x428] sm:$0xff]
  %v544 = vld [vmem:[#allocation2 + $0x430] sm:$0xff]
  %v545 = vld [vmem:[#allocation2 + $0x438] sm:$0xff]
  %v546 = vld [vmem:[#allocation2 + $0x440] sm:$0xff]
  %v547 = vld [vmem:[#allocation2 + $0x448] sm:$0xff]
  %v548 = vld [vmem:[#allocation2 + $0x450] sm:$0xff]
  %v549 = vld [vmem:[#allocation2 + $0x458] sm:$0xff]
  %v550 = vld [vmem:[#allocation2 + $0x460] sm:$0xff]
  %v551 = vld [vmem:[#allocation2 + $0x468] sm:$0xff]
  %v552 = vld [vmem:[#allocation2 + $0x470] sm:$0xff]
  %v553 = vld [vmem:[#allocation2 + $0x478] sm:$0xff]
  %v554 = vld [vmem:[#allocation2 + $0x480] sm:$0xff]
  %v555 = vld [vmem:[#allocation2 + $0x488] sm:$0xff]
  %v556 = vld [vmem:[#allocation2 + $0x490] sm:$0xff]
  %v557 = vld [vmem:[#allocation2 + $0x498] sm:$0xff]
  %v558 = vld [vmem:[#allocation2 + $0x4a0] sm:$0xff]
  %v559 = vld [vmem:[#allocation2 + $0x4a8] sm:$0xff]
  %v560 = vld [vmem:[#allocation2 + $0x4b0] sm:$0xff]
  %v561 = vld [vmem:[#allocation2 + $0x4b8] sm:$0xff]
  %v562 = vld [vmem:[#allocation2 + $0x4c0] sm:$0xff]
  %v563 = vld [vmem:[#allocation2 + $0x4c8] sm:$0xff]
  %v564 = vld [vmem:[#allocation2 + $0x4d0] sm:$0xff]
  %v565 = vld [vmem:[#allocation2 + $0x4d8] sm:$0xff]
  %v566 = vld [vmem:[#allocation2 + $0x4e0] sm:$0xff]
  %v567 = vld [vmem:[#allocation2 + $0x4e8] sm:$0xff]
  %v568 = vld [vmem:[#allocation2 + $0x4f0] sm:$0xff]
  %v569 = vld [vmem:[#allocation2 + $0x4f8] sm:$0xff]
  %v570 = vld [vmem:[#allocation2 + $0x500] sm:$0xff]
  %v571 = vld [vmem:[#allocation2 + $0x508] sm:$0xff]
  %v572 = vld [vmem:[#allocation2 + $0x510] sm:$0xff]
  %v573 = vld [vmem:[#allocation2 + $0x518] sm:$0xff]
  %v574 = vld [vmem:[#allocation2 + $0x520] sm:$0xff]
  %v575 = vld [vmem:[#allocation2 + $0x528] sm:$0xff]
  %v576 = vld [vmem:[#allocation2 + $0x530] sm:$0xff]
  %v577 = vld [vmem:[#allocation2 + $0x538] sm:$0xff]
  %v578 = vld [vmem:[#allocation2 + $0x540] sm:$0xff]
  %v579 = vld [vmem:[#allocation2 + $0x548] sm:$0xff]
  %v580 = vld [vmem:[#allocation2 + $0x550] sm:$0xff]
  %v581 = vld [vmem:[#allocation2 + $0x558] sm:$0xff]
  %v582 = vld [vmem:[#allocation2 + $0x560] sm:$0xff]
  %v583 = vld [vmem:[#allocation2 + $0x568] sm:$0xff]
  %v584 = vld [vmem:[#allocation2 + $0x570] sm:$0xff]
  %v585 = vld [vmem:[#allocation2 + $0x578] sm:$0xff]
  %v586 = vld [vmem:[#allocation2 + $0x580] sm:$0xff]
  %v587 = vld [vmem:[#allocation2 + $0x588] sm:$0xff]
  %v588 = vld [vmem:[#allocation2 + $0x590] sm:$0xff]
  %v589 = vld [vmem:[#allocation2 + $0x598] sm:$0xff]
  %v590 = vld [vmem:[#allocation2 + $0x5a0] sm:$0xff]
  %v591 = vld [vmem:[#allocation2 + $0x5a8] sm:$0xff]
  %v592 = vld [vmem:[#allocation2 + $0x5b0] sm:$0xff]
  %v593 = vld [vmem:[#allocation2 + $0x5b8] sm:$0xff]
  %v594 = vld [vmem:[#allocation2 + $0x5c0] sm:$0xff]
  %v595 = vld [vmem:[#allocation2 + $0x5c8] sm:$0xff]
  %v596 = vld [vmem:[#allocation2 + $0x5d0] sm:$0xff]
  %v597 = vld [vmem:[#allocation2 + $0x5d8] sm:$0xff]
  %v598 = vld [vmem:[#allocation2 + $0x5e0] sm:$0xff]
  %v599 = vld [vmem:[#allocation2 + $0x5e8] sm:$0xff]
  %v600 = vld [vmem:[#allocation2 + $0x5f0] sm:$0xff]
  %v601 = vld [vmem:[#allocation2 + $0x5f8] sm:$0xff]
  %v602 = vld [vmem:[#allocation2 + $0x600] sm:$0xff]
  %v603 = vld [vmem:[#allocation2 + $0x608] sm:$0xff]
  %v604 = vld [vmem:[#allocation2 + $0x610] sm:$0xff]
  %v605 = vld [vmem:[#allocation2 + $0x618] sm:$0xff]
  %v606 = vld [vmem:[%s1] sm:$0xff]
  %v607 = vld [vmem:[%s1 + $0x8] sm:$0x1]
  %v608 = vld [vmem:[%s2] sm:$0x1]
  %v610 = vperm.slane %v608, 0
  %v613 = vsel %vm63, %v410, 0
  %v616 = vsel %vm63, %v411, 0
  %v619 = vsel %vm63, %v412, 0
  %v622 = vsel %vm63, %v413, 0
  %v625 = vsel %vm63, %v414, 0
  %v628 = vsel %vm63, %v415, 0
  %v631 = vsel %vm63, %v416, 0
  %v634 = vsel %vm63, %v417, 0
  %v637 = vsel %vm63, %v418, 0
  %v640 = vsel %vm63, %v419, 0
  %v643 = vsel %vm63, %v420, 0
  %v646 = vsel %vm63, %v421, 0
  %v649 = vsel %vm63, %v422, 0
  %v652 = vsel %vm63, %v423, 0
  %v655 = vsel %vm63, %v424, 0
  %v658 = vsel %vm63, %v425, 0
  %v661 = vsel %vm63, %v426, 0
  %v664 = vsel %vm63, %v427, 0
  %v667 = vsel %vm63, %v428, 0
  %v670 = vsel %vm63, %v429, 0
  %v673 = vsel %vm63, %v430, 0
  %v676 = vsel %vm63, %v431, 0
  %v679 = vsel %vm63, %v432, 0
  %v682 = vsel %vm63, %v433, 0
  %v685 = vsel %vm63, %v434, 0
  %v688 = vsel %vm63, %v435, 0
  %v691 = vsel %vm63, %v436, 0
  %v694 = vsel %vm63, %v437, 0
  %v697 = vsel %vm63, %v438, 0
  %v700 = vsel %vm63, %v439, 0
  %v703 = vsel %vm63, %v440, 0
  %v706 = vsel %vm63, %v441, 0
  %v709 = vsel %vm63, %v442, 0
  %v712 = vsel %vm63, %v443, 0
  %v715 = vsel %vm63, %v444, 0
  %v718 = vsel %vm63, %v445, 0
  %v721 = vsel %vm63, %v446, 0
  %v724 = vsel %vm63, %v447, 0
  %v727 = vsel %vm63, %v448, 0
  %v730 = vsel %vm63, %v449, 0
  %v733 = vsel %vm63, %v450, 0
  %v736 = vsel %vm63, %v451, 0
  %v739 = vsel %vm63, %v452, 0
  %v742 = vsel %vm63, %v453, 0
  %v745 = vsel %vm63, %v454, 0
  %v748 = vsel %vm63, %v455, 0
  %v751 = vsel %vm63, %v456, 0
  %v754 = vsel %vm63, %v457, 0
  %v757 = vsel %vm63, %v458, 0
  %v760 = vsel %vm63, %v459, 0
  %v763 = vsel %vm63, %v460, 0
  %v766 = vsel %vm63, %v461, 0
  %v769 = vsel %vm63, %v462, 0
  %v772 = vsel %vm63, %v463, 0
  %v775 = vsel %vm63, %v464, 0
  %v778 = vsel %vm63, %v465, 0
  %v781 = vsel %vm63, %v466, 0
  %v784 = vsel %vm63, %v467, 0
  %v787 = vsel %vm63, %v468, 0
  %v790 = vsel %vm63, %v469, 0
  %v793 = vsel %vm63, %v470, 0
  %v796 = vsel %vm63, %v471, 0
  %v799 = vsel %vm63, %v472, 0
  %v802 = vsel %vm63, %v473, 0
  %v805 = vsel %vm63, %v474, 0
  %v808 = vsel %vm63, %v475, 0
  %v811 = vsel %vm63, %v476, 0
  %v814 = vsel %vm63, %v477, 0
  %v817 = vsel %vm63, %v478, 0
  %v820 = vsel %vm63, %v479, 0
  %v823 = vsel %vm63, %v480, 0
  %v826 = vsel %vm63, %v481, 0
  %v829 = vsel %vm63, %v482, 0
  %v832 = vsel %vm63, %v483, 0
  %v835 = vsel %vm63, %v484, 0
  %v838 = vsel %vm63, %v485, 0
  %v841 = vsel %vm63, %v486, 0
  %v844 = vsel %vm63, %v487, 0
  %v847 = vsel %vm63, %v488, 0
  %v850 = vsel %vm63, %v489, 0
  %v853 = vsel %vm63, %v490, 0
  %v856 = vsel %vm63, %v491, 0
  %v859 = vsel %vm63, %v492, 0
  %v862 = vsel %vm63, %v493, 0
  %v865 = vsel %vm63, %v494, 0
  %v868 = vsel %vm63, %v495, 0
  %v871 = vsel %vm63, %v496, 0
  %v874 = vsel %vm63, %v497, 0
  %v877 = vsel %vm63, %v498, 0
  %v880 = vsel %vm63, %v499, 0
  %v883 = vsel %vm63, %v500, 0
  %v886 = vsel %vm63, %v501, 0
  %v889 = vsel %vm63, %v502, 0
  %v892 = vsel %vm63, %v503, 0
  %v895 = vsel %vm63, %v504, 0
  %v898 = vsel %vm63, %v505, 0
  %v901 = vsel %vm63, %v506, 0
  %v904 = vsel %vm63, %v507, 0
  %v907 = vsel %vm63, %v508, 0
  %v910 = vsel %vm63, %v509, 0
  %v913 = vsel %vm63, %v510, 0
  %v916 = vsel %vm63, %v511, 0
  %v919 = vsel %vm63, %v512, 0
  %v922 = vsel %vm63, %v513, 0
  %v925 = vsel %vm63, %v514, 0
  %v928 = vsel %vm63, %v515, 0
  %v931 = vsel %vm63, %v516, 0
  %v934 = vsel %vm63, %v517, 0
  %v937 = vsel %vm63, %v518, 0
  %v940 = vsel %vm63, %v519, 0
  %v943 = vsel %vm63, %v520, 0
  %v946 = vsel %vm63, %v521, 0
  %v949 = vsel %vm63, %v522, 0
  %v952 = vsel %vm63, %v523, 0
  %v955 = vsel %vm63, %v524, 0
  %v958 = vsel %vm63, %v525, 0
  %v961 = vsel %vm63, %v526, 0
  %v964 = vsel %vm63, %v527, 0
  %v967 = vsel %vm63, %v528, 0
  %v970 = vsel %vm63, %v529, 0
  %v973 = vsel %vm63, %v530, 0
  %v976 = vsel %vm63, %v531, 0
  %v979 = vsel %vm63, %v532, 0
  %v982 = vsel %vm63, %v533, 0
  %v985 = vsel %vm63, %v534, 0
  %v988 = vsel %vm63, %v535, 0
  %v991 = vsel %vm63, %v536, 0
  %v994 = vsel %vm63, %v537, 0
  %v997 = vsel %vm63, %v538, 0
  %v1000 = vsel %vm63, %v539, 0
  %v1003 = vsel %vm63, %v540, 0
  %v1006 = vsel %vm63, %v541, 0
  %v1009 = vsel %vm63, %v542, 0
  %v1012 = vsel %vm63, %v543, 0
  %v1015 = vsel %vm63, %v544, 0
  %v1018 = vsel %vm63, %v545, 0
  %v1021 = vsel %vm63, %v546, 0
  %v1024 = vsel %vm63, %v547, 0
  %v1027 = vsel %vm63, %v548, 0
  %v1030 = vsel %vm63, %v549, 0
  %v1033 = vsel %vm63, %v550, 0
  %v1036 = vsel %vm63, %v551, 0
  %v1039 = vsel %vm63, %v552, 0
  %v1042 = vsel %vm63, %v553, 0
  %v1045 = vsel %vm63, %v554, 0
  %v1048 = vsel %vm63, %v555, 0
  %v1051 = vsel %vm63, %v556, 0
  %v1054 = vsel %vm63, %v557, 0
  %v1057 = vsel %vm63, %v558, 0
  %v1060 = vsel %vm63, %v559, 0
  %v1063 = vsel %vm63, %v560, 0
  %v1066 = vsel %vm63, %v561, 0
  %v1069 = vsel %vm63, %v562, 0
  %v1072 = vsel %vm63, %v563, 0
  %v1075 = vsel %vm63, %v564, 0
  %v1078 = vsel %vm63, %v565, 0
  %v1081 = vsel %vm63, %v566, 0
  %v1084 = vsel %vm63, %v567, 0
  %v1087 = vsel %vm63, %v568, 0
  %v1090 = vsel %vm63, %v569, 0
  %v1093 = vsel %vm63, %v570, 0
  %v1096 = vsel %vm63, %v571, 0
  %v1099 = vsel %vm63, %v572, 0
  %v1102 = vsel %vm63, %v573, 0
  %v1105 = vsel %vm63, %v574, 0
  %v1108 = vsel %vm63, %v575, 0
  %v1111 = vsel %vm63, %v576, 0
  %v1114 = vsel %vm63, %v577, 0
  %v1117 = vsel %vm63, %v578, 0
  %v1120 = vsel %vm63, %v579, 0
  %v1123 = vsel %vm63, %v580, 0
  %v1126 = vsel %vm63, %v581, 0
  %v1129 = vsel %vm63, %v582, 0
  %v1132 = vsel %vm63, %v583, 0
  %v1135 = vsel %vm63, %v584, 0
  %v1138 = vsel %vm63, %v585, 0
  %v1141 = vsel %vm63, %v586, 0
  %v1144 = vsel %vm63, %v587, 0
  %v1147 = vsel %vm63, %v588, 0
  %v1150 = vsel %vm63, %v589, 0
  %v1153 = vsel %vm63, %v590, 0
  %v1156 = vsel %vm63, %v591, 0
  %v1159 = vsel %vm63, %v592, 0
  %v1162 = vsel %vm63, %v593, 0
  %v1165 = vsel %vm63, %v594, 0
  %v1168 = vsel %vm63, %v595, 0
  %v1171 = vsel %vm63, %v596, 0
  %v1174 = vsel %vm63, %v597, 0
  %v1177 = vsel %vm63, %v598, 0
  %v1180 = vsel %vm63, %v599, 0
  %v1183 = vsel %vm63, %v600, 0
  %v1186 = vsel %vm63, %v601, 0
  %v1189 = vsel %vm63, %v602, 0
  %v1192 = vsel %vm63, %v603, 0
  %v1195 = vsel %vm63, %v604, 0
  %v1198 = vsel %vm63, %v605, 0
  %vm1200 = vcmask 1040384
  %v1202 = vsel %vm1200, %v607, 0
  %1204 = vmatpush.msra.mxu0 0.0
  %1205 = vmatpush.msra.mxu0 0.0
  %1206 = vmatpush.msra.mxu0 0.0
  %1207 = vmatpush.msra.mxu0 0.0
  %1208 = vmatpush.msra.mxu0 0.0
  %1209 = vmatpush.msra.mxu0 0.0
  %1210 = vmatpush.msra.mxu0 0.0
  %1211 = vmatpush.msra.mxu0 0.0
  %1212 = vmatpush.msra.mxu0 0.0
  %1213 = vmatpush.msra.mxu0 0.0
  %1214 = vmatpush.msra.mxu0 0.0
  %1215 = vmatpush.msra.mxu0 0.0
  %1216 = vmatpush.msra.mxu0 0.0
  %1217 = vmatpush.msra.mxu0 0.0
  %1218 = vmatpush.msra.mxu0 %v1202
  %1219 = vmatpush.msra.mxu0 %v606
  %1220 = vmatmul.f32.gmra.mxu0 %v613
  %v1221 = vpop.f32.mrf.mxu0
  %v1222 = vadd.f32 %v610, %v1221
  %1223 = vmatmul.f32.gmra.mxu0 %v616
  %v1224 = vpop.f32.mrf.mxu0
  %v1225 = vadd.f32 %v610, %v1224
  %1226 = vmatmul.f32.gmra.mxu0 %v619
  %v1227 = vpop.f32.mrf.mxu0
  %v1228 = vadd.f32 %v610, %v1227
  %1229 = vmatmul.f32.gmra.mxu0 %v622
  %v1230 = vpop.f32.mrf.mxu0
  %v1231 = vadd.f32 %v610, %v1230
  %1232 = vmatmul.f32.gmra.mxu0 %v625
  %v1233 = vpop.f32.mrf.mxu0
  %v1234 = vadd.f32 %v610, %v1233
  %1235 = vmatmul.f32.gmra.mxu0 %v628
  %v1236 = vpop.f32.mrf.mxu0
  %v1237 = vadd.f32 %v610, %v1236
  %1238 = vmatmul.f32.gmra.mxu0 %v631
  %v1239 = vpop.f32.mrf.mxu0
  %v1240 = vadd.f32 %v610, %v1239
  %1241 = vmatmul.f32.gmra.mxu0 %v634
  %v1242 = vpop.f32.mrf.mxu0
  %v1243 = vadd.f32 %v610, %v1242
  %1244 = vmatmul.f32.gmra.mxu0 %v637
  %v1245 = vpop.f32.mrf.mxu0
  %v1246 = vadd.f32 %v610, %v1245
  %1247 = vmatmul.f32.gmra.mxu0 %v640
  %v1248 = vpop.f32.mrf.mxu0
  %v1249 = vadd.f32 %v610, %v1248
  %1250 = vmatmul.f32.gmra.mxu0 %v643
  %v1251 = vpop.f32.mrf.mxu0
  %v1252 = vadd.f32 %v610, %v1251
  %1253 = vmatmul.f32.gmra.mxu0 %v646
  %v1254 = vpop.f32.mrf.mxu0
  %v1255 = vadd.f32 %v610, %v1254
  %1256 = vmatmul.f32.gmra.mxu0 %v649
  %v1257 = vpop.f32.mrf.mxu0
  %v1258 = vadd.f32 %v610, %v1257
  %1259 = vmatmul.f32.gmra.mxu0 %v652
  %v1260 = vpop.f32.mrf.mxu0
  %v1261 = vadd.f32 %v610, %v1260
  %1262 = vmatmul.f32.gmra.mxu0 %v655
  %v1263 = vpop.f32.mrf.mxu0
  %v1264 = vadd.f32 %v610, %v1263
  %1265 = vmatmul.f32.gmra.mxu0 %v658
  %v1266 = vpop.f32.mrf.mxu0
  %v1267 = vadd.f32 %v610, %v1266
  %1268 = vmatmul.f32.gmra.mxu0 %v661
  %v1269 = vpop.f32.mrf.mxu0
  %v1270 = vadd.f32 %v610, %v1269
  %1271 = vmatmul.f32.gmra.mxu0 %v664
  %v1272 = vpop.f32.mrf.mxu0
  %v1273 = vadd.f32 %v610, %v1272
  %1274 = vmatmul.f32.gmra.mxu0 %v667
  %v1275 = vpop.f32.mrf.mxu0
  %v1276 = vadd.f32 %v610, %v1275
  %1277 = vmatmul.f32.gmra.mxu0 %v670
  %v1278 = vpop.f32.mrf.mxu0
  %v1279 = vadd.f32 %v610, %v1278
  %1280 = vmatmul.f32.gmra.mxu0 %v673
  %v1281 = vpop.f32.mrf.mxu0
  %v1282 = vadd.f32 %v610, %v1281
  %1283 = vmatmul.f32.gmra.mxu0 %v676
  %v1284 = vpop.f32.mrf.mxu0
  %v1285 = vadd.f32 %v610, %v1284
  %1286 = vmatmul.f32.gmra.mxu0 %v679
  %v1287 = vpop.f32.mrf.mxu0
  %v1288 = vadd.f32 %v610, %v1287
  %1289 = vmatmul.f32.gmra.mxu0 %v682
  %v1290 = vpop.f32.mrf.mxu0
  %v1291 = vadd.f32 %v610, %v1290
  %1292 = vmatmul.f32.gmra.mxu0 %v685
  %v1293 = vpop.f32.mrf.mxu0
  %v1294 = vadd.f32 %v610, %v1293
  %1295 = vmatmul.f32.gmra.mxu0 %v688
  %v1296 = vpop.f32.mrf.mxu0
  %v1297 = vadd.f32 %v610, %v1296
  %1298 = vmatmul.f32.gmra.mxu0 %v691
  %v1299 = vpop.f32.mrf.mxu0
  %v1300 = vadd.f32 %v610, %v1299
  %1301 = vmatmul.f32.gmra.mxu0 %v694
  %v1302 = vpop.f32.mrf.mxu0
  %v1303 = vadd.f32 %v610, %v1302
  %1304 = vmatmul.f32.gmra.mxu0 %v697
  %v1305 = vpop.f32.mrf.mxu0
  %v1306 = vadd.f32 %v610, %v1305
  %1307 = vmatmul.f32.gmra.mxu0 %v700
  %v1308 = vpop.f32.mrf.mxu0
  %v1309 = vadd.f32 %v610, %v1308
  %1310 = vmatmul.f32.gmra.mxu0 %v703
  %v1311 = vpop.f32.mrf.mxu0
  %v1312 = vadd.f32 %v610, %v1311
  %1313 = vmatmul.f32.gmra.mxu0 %v706
  %v1314 = vpop.f32.mrf.mxu0
  %v1315 = vadd.f32 %v610, %v1314
  %1316 = vmatmul.f32.gmra.mxu0 %v709
  %v1317 = vpop.f32.mrf.mxu0
  %v1318 = vadd.f32 %v610, %v1317
  %1319 = vmatmul.f32.gmra.mxu0 %v712
  %v1320 = vpop.f32.mrf.mxu0
  %v1321 = vadd.f32 %v610, %v1320
  %1322 = vmatmul.f32.gmra.mxu0 %v715
  %v1323 = vpop.f32.mrf.mxu0
  %v1324 = vadd.f32 %v610, %v1323
  %1325 = vmatmul.f32.gmra.mxu0 %v718
  %v1326 = vpop.f32.mrf.mxu0
  %v1327 = vadd.f32 %v610, %v1326
  %1328 = vmatmul.f32.gmra.mxu0 %v721
  %v1329 = vpop.f32.mrf.mxu0
  %v1330 = vadd.f32 %v610, %v1329
  %1331 = vmatmul.f32.gmra.mxu0 %v724
  %v1332 = vpop.f32.mrf.mxu0
  %v1333 = vadd.f32 %v610, %v1332
  %1334 = vmatmul.f32.gmra.mxu0 %v727
  %v1335 = vpop.f32.mrf.mxu0
  %v1336 = vadd.f32 %v610, %v1335
  %1337 = vmatmul.f32.gmra.mxu0 %v730
  %v1338 = vpop.f32.mrf.mxu0
  %v1339 = vadd.f32 %v610, %v1338
  %1340 = vmatmul.f32.gmra.mxu0 %v733
  %v1341 = vpop.f32.mrf.mxu0
  %v1342 = vadd.f32 %v610, %v1341
  %1343 = vmatmul.f32.gmra.mxu0 %v736
  %v1344 = vpop.f32.mrf.mxu0
  %v1345 = vadd.f32 %v610, %v1344
  %1346 = vmatmul.f32.gmra.mxu0 %v739
  %v1347 = vpop.f32.mrf.mxu0
  %v1348 = vadd.f32 %v610, %v1347
  %1349 = vmatmul.f32.gmra.mxu0 %v742
  %v1350 = vpop.f32.mrf.mxu0
  %v1351 = vadd.f32 %v610, %v1350
  %1352 = vmatmul.f32.gmra.mxu0 %v745
  %v1353 = vpop.f32.mrf.mxu0
  %v1354 = vadd.f32 %v610, %v1353
  %1355 = vmatmul.f32.gmra.mxu0 %v748
  %v1356 = vpop.f32.mrf.mxu0
  %v1357 = vadd.f32 %v610, %v1356
  %1358 = vmatmul.f32.gmra.mxu0 %v751
  %v1359 = vpop.f32.mrf.mxu0
  %v1360 = vadd.f32 %v610, %v1359
  %1361 = vmatmul.f32.gmra.mxu0 %v754
  %v1362 = vpop.f32.mrf.mxu0
  %v1363 = vadd.f32 %v610, %v1362
  %1364 = vmatmul.f32.gmra.mxu0 %v757
  %v1365 = vpop.f32.mrf.mxu0
  %v1366 = vadd.f32 %v610, %v1365
  %1367 = vmatmul.f32.gmra.mxu0 %v760
  %v1368 = vpop.f32.mrf.mxu0
  %v1369 = vadd.f32 %v610, %v1368
  %1370 = vmatmul.f32.gmra.mxu0 %v763
  %v1371 = vpop.f32.mrf.mxu0
  %v1372 = vadd.f32 %v610, %v1371
  %1373 = vmatmul.f32.gmra.mxu0 %v766
  %v1374 = vpop.f32.mrf.mxu0
  %v1375 = vadd.f32 %v610, %v1374
  %1376 = vmatmul.f32.gmra.mxu0 %v769
  %v1377 = vpop.f32.mrf.mxu0
  %v1378 = vadd.f32 %v610, %v1377
  %1379 = vmatmul.f32.gmra.mxu0 %v772
  %v1380 = vpop.f32.mrf.mxu0
  %v1381 = vadd.f32 %v610, %v1380
  %1382 = vmatmul.f32.gmra.mxu0 %v775
  %v1383 = vpop.f32.mrf.mxu0
  %v1384 = vadd.f32 %v610, %v1383
  %1385 = vmatmul.f32.gmra.mxu0 %v778
  %v1386 = vpop.f32.mrf.mxu0
  %v1387 = vadd.f32 %v610, %v1386
  %1388 = vmatmul.f32.gmra.mxu0 %v781
  %v1389 = vpop.f32.mrf.mxu0
  %v1390 = vadd.f32 %v610, %v1389
  %1391 = vmatmul.f32.gmra.mxu0 %v784
  %v1392 = vpop.f32.mrf.mxu0
  %v1393 = vadd.f32 %v610, %v1392
  %1394 = vmatmul.f32.gmra.mxu0 %v787
  %v1395 = vpop.f32.mrf.mxu0
  %v1396 = vadd.f32 %v610, %v1395
  %1397 = vmatmul.f32.gmra.mxu0 %v790
  %v1398 = vpop.f32.mrf.mxu0
  %v1399 = vadd.f32 %v610, %v1398
  %1400 = vmatmul.f32.gmra.mxu0 %v793
  %v1401 = vpop.f32.mrf.mxu0
  %v1402 = vadd.f32 %v610, %v1401
  %1403 = vmatmul.f32.gmra.mxu0 %v796
  %v1404 = vpop.f32.mrf.mxu0
  %v1405 = vadd.f32 %v610, %v1404
  %1406 = vmatmul.f32.gmra.mxu0 %v799
  %v1407 = vpop.f32.mrf.mxu0
  %v1408 = vadd.f32 %v610, %v1407
  %1409 = vmatmul.f32.gmra.mxu0 %v802
  %v1410 = vpop.f32.mrf.mxu0
  %v1411 = vadd.f32 %v610, %v1410
  %1412 = vmatmul.f32.gmra.mxu0 %v805
  %v1413 = vpop.f32.mrf.mxu0
  %v1414 = vadd.f32 %v610, %v1413
  %1415 = vmatmul.f32.gmra.mxu0 %v808
  %v1416 = vpop.f32.mrf.mxu0
  %v1417 = vadd.f32 %v610, %v1416
  %1418 = vmatmul.f32.gmra.mxu0 %v811
  %v1419 = vpop.f32.mrf.mxu0
  %v1420 = vadd.f32 %v610, %v1419
  %1421 = vmatmul.f32.gmra.mxu0 %v814
  %v1422 = vpop.f32.mrf.mxu0
  %v1423 = vadd.f32 %v610, %v1422
  %1424 = vmatmul.f32.gmra.mxu0 %v817
  %v1425 = vpop.f32.mrf.mxu0
  %v1426 = vadd.f32 %v610, %v1425
  %1427 = vmatmul.f32.gmra.mxu0 %v820
  %v1428 = vpop.f32.mrf.mxu0
  %v1429 = vadd.f32 %v610, %v1428
  %1430 = vmatmul.f32.gmra.mxu0 %v823
  %v1431 = vpop.f32.mrf.mxu0
  %v1432 = vadd.f32 %v610, %v1431
  %1433 = vmatmul.f32.gmra.mxu0 %v826
  %v1434 = vpop.f32.mrf.mxu0
  %v1435 = vadd.f32 %v610, %v1434
  %1436 = vmatmul.f32.gmra.mxu0 %v829
  %v1437 = vpop.f32.mrf.mxu0
  %v1438 = vadd.f32 %v610, %v1437
  %1439 = vmatmul.f32.gmra.mxu0 %v832
  %v1440 = vpop.f32.mrf.mxu0
  %v1441 = vadd.f32 %v610, %v1440
  %1442 = vmatmul.f32.gmra.mxu0 %v835
  %v1443 = vpop.f32.mrf.mxu0
  %v1444 = vadd.f32 %v610, %v1443
  %1445 = vmatmul.f32.gmra.mxu0 %v838
  %v1446 = vpop.f32.mrf.mxu0
  %v1447 = vadd.f32 %v610, %v1446
  %1448 = vmatmul.f32.gmra.mxu0 %v841
  %v1449 = vpop.f32.mrf.mxu0
  %v1450 = vadd.f32 %v610, %v1449
  %1451 = vmatmul.f32.gmra.mxu0 %v844
  %v1452 = vpop.f32.mrf.mxu0
  %v1453 = vadd.f32 %v610, %v1452
  %1454 = vmatmul.f32.gmra.mxu0 %v847
  %v1455 = vpop.f32.mrf.mxu0
  %v1456 = vadd.f32 %v610, %v1455
  %1457 = vmatmul.f32.gmra.mxu0 %v850
  %v1458 = vpop.f32.mrf.mxu0
  %v1459 = vadd.f32 %v610, %v1458
  %1460 = vmatmul.f32.gmra.mxu0 %v853
  %v1461 = vpop.f32.mrf.mxu0
  %v1462 = vadd.f32 %v610, %v1461
  %1463 = vmatmul.f32.gmra.mxu0 %v856
  %v1464 = vpop.f32.mrf.mxu0
  %v1465 = vadd.f32 %v610, %v1464
  %1466 = vmatmul.f32.gmra.mxu0 %v859
  %v1467 = vpop.f32.mrf.mxu0
  %v1468 = vadd.f32 %v610, %v1467
  %1469 = vmatmul.f32.gmra.mxu0 %v862
  %v1470 = vpop.f32.mrf.mxu0
  %v1471 = vadd.f32 %v610, %v1470
  %1472 = vmatmul.f32.gmra.mxu0 %v865
  %v1473 = vpop.f32.mrf.mxu0
  %v1474 = vadd.f32 %v610, %v1473
  %1475 = vmatmul.f32.gmra.mxu0 %v868
  %v1476 = vpop.f32.mrf.mxu0
  %v1477 = vadd.f32 %v610, %v1476
  %1478 = vmatmul.f32.gmra.mxu0 %v871
  %v1479 = vpop.f32.mrf.mxu0
  %v1480 = vadd.f32 %v610, %v1479
  %1481 = vmatmul.f32.gmra.mxu0 %v874
  %v1482 = vpop.f32.mrf.mxu0
  %v1483 = vadd.f32 %v610, %v1482
  %1484 = vmatmul.f32.gmra.mxu0 %v877
  %v1485 = vpop.f32.mrf.mxu0
  %v1486 = vadd.f32 %v610, %v1485
  %1487 = vmatmul.f32.gmra.mxu0 %v880
  %v1488 = vpop.f32.mrf.mxu0
  %v1489 = vadd.f32 %v610, %v1488
  %1490 = vmatmul.f32.gmra.mxu0 %v883
  %v1491 = vpop.f32.mrf.mxu0
  %v1492 = vadd.f32 %v610, %v1491
  %1493 = vmatmul.f32.gmra.mxu0 %v886
  %v1494 = vpop.f32.mrf.mxu0
  %v1495 = vadd.f32 %v610, %v1494
  %1496 = vmatmul.f32.gmra.mxu0 %v889
  %v1497 = vpop.f32.mrf.mxu0
  %v1498 = vadd.f32 %v610, %v1497
  %1499 = vmatmul.f32.gmra.mxu0 %v892
  %v1500 = vpop.f32.mrf.mxu0
  %v1501 = vadd.f32 %v610, %v1500
  %1502 = vmatmul.f32.gmra.mxu0 %v895
  %v1503 = vpop.f32.mrf.mxu0
  %v1504 = vadd.f32 %v610, %v1503
  %1505 = vmatmul.f32.gmra.mxu0 %v898
  %v1506 = vpop.f32.mrf.mxu0
  %v1507 = vadd.f32 %v610, %v1506
  %1508 = vmatmul.f32.gmra.mxu0 %v901
  %v1509 = vpop.f32.mrf.mxu0
  %v1510 = vadd.f32 %v610, %v1509
  %1511 = vmatmul.f32.gmra.mxu0 %v904
  %v1512 = vpop.f32.mrf.mxu0
  %v1513 = vadd.f32 %v610, %v1512
  %1514 = vmatmul.f32.gmra.mxu0 %v907
  %v1515 = vpop.f32.mrf.mxu0
  %v1516 = vadd.f32 %v610, %v1515
  %1517 = vmatmul.f32.gmra.mxu0 %v910
  %v1518 = vpop.f32.mrf.mxu0
  %v1519 = vadd.f32 %v610, %v1518
  %1520 = vmatmul.f32.gmra.mxu0 %v913
  %v1521 = vpop.f32.mrf.mxu0
  %v1522 = vadd.f32 %v610, %v1521
  %1523 = vmatmul.f32.gmra.mxu0 %v916
  %v1524 = vpop.f32.mrf.mxu0
  %v1525 = vadd.f32 %v610, %v1524
  %1526 = vmatmul.f32.gmra.mxu0 %v919
  %v1527 = vpop.f32.mrf.mxu0
  %v1528 = vadd.f32 %v610, %v1527
  %1529 = vmatmul.f32.gmra.mxu0 %v922
  %v1530 = vpop.f32.mrf.mxu0
  %v1531 = vadd.f32 %v610, %v1530
  %1532 = vmatmul.f32.gmra.mxu0 %v925
  %v1533 = vpop.f32.mrf.mxu0
  %v1534 = vadd.f32 %v610, %v1533
  %1535 = vmatmul.f32.gmra.mxu0 %v928
  %v1536 = vpop.f32.mrf.mxu0
  %v1537 = vadd.f32 %v610, %v1536
  %1538 = vmatmul.f32.gmra.mxu0 %v931
  %v1539 = vpop.f32.mrf.mxu0
  %v1540 = vadd.f32 %v610, %v1539
  %1541 = vmatmul.f32.gmra.mxu0 %v934
  %v1542 = vpop.f32.mrf.mxu0
  %v1543 = vadd.f32 %v610, %v1542
  %1544 = vmatmul.f32.gmra.mxu0 %v937
  %v1545 = vpop.f32.mrf.mxu0
  %v1546 = vadd.f32 %v610, %v1545
  %1547 = vmatmul.f32.gmra.mxu0 %v940
  %v1548 = vpop.f32.mrf.mxu0
  %v1549 = vadd.f32 %v610, %v1548
  %1550 = vmatmul.f32.gmra.mxu0 %v943
  %v1551 = vpop.f32.mrf.mxu0
  %v1552 = vadd.f32 %v610, %v1551
  %1553 = vmatmul.f32.gmra.mxu0 %v946
  %v1554 = vpop.f32.mrf.mxu0
  %v1555 = vadd.f32 %v610, %v1554
  %1556 = vmatmul.f32.gmra.mxu0 %v949
  %v1557 = vpop.f32.mrf.mxu0
  %v1558 = vadd.f32 %v610, %v1557
  %1559 = vmatmul.f32.gmra.mxu0 %v952
  %v1560 = vpop.f32.mrf.mxu0
  %v1561 = vadd.f32 %v610, %v1560
  %1562 = vmatmul.f32.gmra.mxu0 %v955
  %v1563 = vpop.f32.mrf.mxu0
  %v1564 = vadd.f32 %v610, %v1563
  %1565 = vmatmul.f32.gmra.mxu0 %v958
  %v1566 = vpop.f32.mrf.mxu0
  %v1567 = vadd.f32 %v610, %v1566
  %1568 = vmatmul.f32.gmra.mxu0 %v961
  %v1569 = vpop.f32.mrf.mxu0
  %v1570 = vadd.f32 %v610, %v1569
  %1571 = vmatmul.f32.gmra.mxu0 %v964
  %v1572 = vpop.f32.mrf.mxu0
  %v1573 = vadd.f32 %v610, %v1572
  %1574 = vmatmul.f32.gmra.mxu0 %v967
  %v1575 = vpop.f32.mrf.mxu0
  %v1576 = vadd.f32 %v610, %v1575
  %1577 = vmatmul.f32.gmra.mxu0 %v970
  %v1578 = vpop.f32.mrf.mxu0
  %v1579 = vadd.f32 %v610, %v1578
  %1580 = vmatmul.f32.gmra.mxu0 %v973
  %v1581 = vpop.f32.mrf.mxu0
  %v1582 = vadd.f32 %v610, %v1581
  %1583 = vmatmul.f32.gmra.mxu0 %v976
  %v1584 = vpop.f32.mrf.mxu0
  %v1585 = vadd.f32 %v610, %v1584
  %1586 = vmatmul.f32.gmra.mxu0 %v979
  %v1587 = vpop.f32.mrf.mxu0
  %v1588 = vadd.f32 %v610, %v1587
  %1589 = vmatmul.f32.gmra.mxu0 %v982
  %v1590 = vpop.f32.mrf.mxu0
  %v1591 = vadd.f32 %v610, %v1590
  %1592 = vmatmul.f32.gmra.mxu0 %v985
  %v1593 = vpop.f32.mrf.mxu0
  %v1594 = vadd.f32 %v610, %v1593
  %1595 = vmatmul.f32.gmra.mxu0 %v988
  %v1596 = vpop.f32.mrf.mxu0
  %v1597 = vadd.f32 %v610, %v1596
  %1598 = vmatmul.f32.gmra.mxu0 %v991
  %v1599 = vpop.f32.mrf.mxu0
  %v1600 = vadd.f32 %v610, %v1599
  %1601 = vmatmul.f32.gmra.mxu0 %v994
  %v1602 = vpop.f32.mrf.mxu0
  %v1603 = vadd.f32 %v610, %v1602
  %1604 = vmatmul.f32.gmra.mxu0 %v997
  %v1605 = vpop.f32.mrf.mxu0
  %v1606 = vadd.f32 %v610, %v1605
  %1607 = vmatmul.f32.gmra.mxu0 %v1000
  %v1608 = vpop.f32.mrf.mxu0
  %v1609 = vadd.f32 %v610, %v1608
  %1610 = vmatmul.f32.gmra.mxu0 %v1003
  %v1611 = vpop.f32.mrf.mxu0
  %v1612 = vadd.f32 %v610, %v1611
  %1613 = vmatmul.f32.gmra.mxu0 %v1006
  %v1614 = vpop.f32.mrf.mxu0
  %v1615 = vadd.f32 %v610, %v1614
  %1616 = vmatmul.f32.gmra.mxu0 %v1009
  %v1617 = vpop.f32.mrf.mxu0
  %v1618 = vadd.f32 %v610, %v1617
  %1619 = vmatmul.f32.gmra.mxu0 %v1012
  %v1620 = vpop.f32.mrf.mxu0
  %v1621 = vadd.f32 %v610, %v1620
  %1622 = vmatmul.f32.gmra.mxu0 %v1015
  %v1623 = vpop.f32.mrf.mxu0
  %v1624 = vadd.f32 %v610, %v1623
  %1625 = vmatmul.f32.gmra.mxu0 %v1018
  %v1626 = vpop.f32.mrf.mxu0
  %v1627 = vadd.f32 %v610, %v1626
  %1628 = vmatmul.f32.gmra.mxu0 %v1021
  %v1629 = vpop.f32.mrf.mxu0
  %v1630 = vadd.f32 %v610, %v1629
  %1631 = vmatmul.f32.gmra.mxu0 %v1024
  %v1632 = vpop.f32.mrf.mxu0
  %v1633 = vadd.f32 %v610, %v1632
  %1634 = vmatmul.f32.gmra.mxu0 %v1027
  %v1635 = vpop.f32.mrf.mxu0
  %v1636 = vadd.f32 %v610, %v1635
  %1637 = vmatmul.f32.gmra.mxu0 %v1030
  %v1638 = vpop.f32.mrf.mxu0
  %v1639 = vadd.f32 %v610, %v1638
  %1640 = vmatmul.f32.gmra.mxu0 %v1033
  %v1641 = vpop.f32.mrf.mxu0
  %v1642 = vadd.f32 %v610, %v1641
  %1643 = vmatmul.f32.gmra.mxu0 %v1036
  %v1644 = vpop.f32.mrf.mxu0
  %v1645 = vadd.f32 %v610, %v1644
  %1646 = vmatmul.f32.gmra.mxu0 %v1039
  %v1647 = vpop.f32.mrf.mxu0
  %v1648 = vadd.f32 %v610, %v1647
  %1649 = vmatmul.f32.gmra.mxu0 %v1042
  %v1650 = vpop.f32.mrf.mxu0
  %v1651 = vadd.f32 %v610, %v1650
  %1652 = vmatmul.f32.gmra.mxu0 %v1045
  %v1653 = vpop.f32.mrf.mxu0
  %v1654 = vadd.f32 %v610, %v1653
  %1655 = vmatmul.f32.gmra.mxu0 %v1048
  %v1656 = vpop.f32.mrf.mxu0
  %v1657 = vadd.f32 %v610, %v1656
  %1658 = vmatmul.f32.gmra.mxu0 %v1051
  %v1659 = vpop.f32.mrf.mxu0
  %v1660 = vadd.f32 %v610, %v1659
  %1661 = vmatmul.f32.gmra.mxu0 %v1054
  %v1662 = vpop.f32.mrf.mxu0
  %v1663 = vadd.f32 %v610, %v1662
  %1664 = vmatmul.f32.gmra.mxu0 %v1057
  %v1665 = vpop.f32.mrf.mxu0
  %v1666 = vadd.f32 %v610, %v1665
  %1667 = vmatmul.f32.gmra.mxu0 %v1060
  %v1668 = vpop.f32.mrf.mxu0
  %v1669 = vadd.f32 %v610, %v1668
  %1670 = vmatmul.f32.gmra.mxu0 %v1063
  %v1671 = vpop.f32.mrf.mxu0
  %v1672 = vadd.f32 %v610, %v1671
  %1673 = vmatmul.f32.gmra.mxu0 %v1066
  %v1674 = vpop.f32.mrf.mxu0
  %v1675 = vadd.f32 %v610, %v1674
  %1676 = vmatmul.f32.gmra.mxu0 %v1069
  %v1677 = vpop.f32.mrf.mxu0
  %v1678 = vadd.f32 %v610, %v1677
  %1679 = vmatmul.f32.gmra.mxu0 %v1072
  %v1680 = vpop.f32.mrf.mxu0
  %v1681 = vadd.f32 %v610, %v1680
  %1682 = vmatmul.f32.gmra.mxu0 %v1075
  %v1683 = vpop.f32.mrf.mxu0
  %v1684 = vadd.f32 %v610, %v1683
  %1685 = vmatmul.f32.gmra.mxu0 %v1078
  %v1686 = vpop.f32.mrf.mxu0
  %v1687 = vadd.f32 %v610, %v1686
  %1688 = vmatmul.f32.gmra.mxu0 %v1081
  %v1689 = vpop.f32.mrf.mxu0
  %v1690 = vadd.f32 %v610, %v1689
  %1691 = vmatmul.f32.gmra.mxu0 %v1084
  %v1692 = vpop.f32.mrf.mxu0
  %v1693 = vadd.f32 %v610, %v1692
  %1694 = vmatmul.f32.gmra.mxu0 %v1087
  %v1695 = vpop.f32.mrf.mxu0
  %v1696 = vadd.f32 %v610, %v1695
  %1697 = vmatmul.f32.gmra.mxu0 %v1090
  %v1698 = vpop.f32.mrf.mxu0
  %v1699 = vadd.f32 %v610, %v1698
  %1700 = vmatmul.f32.gmra.mxu0 %v1093
  %v1701 = vpop.f32.mrf.mxu0
  %v1702 = vadd.f32 %v610, %v1701
  %1703 = vmatmul.f32.gmra.mxu0 %v1096
  %v1704 = vpop.f32.mrf.mxu0
  %v1705 = vadd.f32 %v610, %v1704
  %1706 = vmatmul.f32.gmra.mxu0 %v1099
  %v1707 = vpop.f32.mrf.mxu0
  %v1708 = vadd.f32 %v610, %v1707
  %1709 = vmatmul.f32.gmra.mxu0 %v1102
  %v1710 = vpop.f32.mrf.mxu0
  %v1711 = vadd.f32 %v610, %v1710
  %1712 = vmatmul.f32.gmra.mxu0 %v1105
  %v1713 = vpop.f32.mrf.mxu0
  %v1714 = vadd.f32 %v610, %v1713
  %1715 = vmatmul.f32.gmra.mxu0 %v1108
  %v1716 = vpop.f32.mrf.mxu0
  %v1717 = vadd.f32 %v610, %v1716
  %1718 = vmatmul.f32.gmra.mxu0 %v1111
  %v1719 = vpop.f32.mrf.mxu0
  %v1720 = vadd.f32 %v610, %v1719
  %1721 = vmatmul.f32.gmra.mxu0 %v1114
  %v1722 = vpop.f32.mrf.mxu0
  %v1723 = vadd.f32 %v610, %v1722
  %1724 = vmatmul.f32.gmra.mxu0 %v1117
  %v1725 = vpop.f32.mrf.mxu0
  %v1726 = vadd.f32 %v610, %v1725
  %1727 = vmatmul.f32.gmra.mxu0 %v1120
  %v1728 = vpop.f32.mrf.mxu0
  %v1729 = vadd.f32 %v610, %v1728
  %1730 = vmatmul.f32.gmra.mxu0 %v1123
  %v1731 = vpop.f32.mrf.mxu0
  %v1732 = vadd.f32 %v610, %v1731
  %1733 = vmatmul.f32.gmra.mxu0 %v1126
  %v1734 = vpop.f32.mrf.mxu0
  %v1735 = vadd.f32 %v610, %v1734
  %1736 = vmatmul.f32.gmra.mxu0 %v1129
  %v1737 = vpop.f32.mrf.mxu0
  %v1738 = vadd.f32 %v610, %v1737
  %1739 = vmatmul.f32.gmra.mxu0 %v1132
  %v1740 = vpop.f32.mrf.mxu0
  %v1741 = vadd.f32 %v610, %v1740
  %1742 = vmatmul.f32.gmra.mxu0 %v1135
  %v1743 = vpop.f32.mrf.mxu0
  %v1744 = vadd.f32 %v610, %v1743
  %1745 = vmatmul.f32.gmra.mxu0 %v1138
  %v1746 = vpop.f32.mrf.mxu0
  %v1747 = vadd.f32 %v610, %v1746
  %1748 = vmatmul.f32.gmra.mxu0 %v1141
  %v1749 = vpop.f32.mrf.mxu0
  %v1750 = vadd.f32 %v610, %v1749
  %1751 = vmatmul.f32.gmra.mxu0 %v1144
  %v1752 = vpop.f32.mrf.mxu0
  %v1753 = vadd.f32 %v610, %v1752
  %1754 = vmatmul.f32.gmra.mxu0 %v1147
  %v1755 = vpop.f32.mrf.mxu0
  %v1756 = vadd.f32 %v610, %v1755
  %1757 = vmatmul.f32.gmra.mxu0 %v1150
  %v1758 = vpop.f32.mrf.mxu0
  %v1759 = vadd.f32 %v610, %v1758
  %1760 = vmatmul.f32.gmra.mxu0 %v1153
  %v1761 = vpop.f32.mrf.mxu0
  %v1762 = vadd.f32 %v610, %v1761
  %1763 = vmatmul.f32.gmra.mxu0 %v1156
  %v1764 = vpop.f32.mrf.mxu0
  %v1765 = vadd.f32 %v610, %v1764
  %1766 = vmatmul.f32.gmra.mxu0 %v1159
  %v1767 = vpop.f32.mrf.mxu0
  %v1768 = vadd.f32 %v610, %v1767
  %1769 = vmatmul.f32.gmra.mxu0 %v1162
  %v1770 = vpop.f32.mrf.mxu0
  %v1771 = vadd.f32 %v610, %v1770
  %1772 = vmatmul.f32.gmra.mxu0 %v1165
  %v1773 = vpop.f32.mrf.mxu0
  %v1774 = vadd.f32 %v610, %v1773
  %1775 = vmatmul.f32.gmra.mxu0 %v1168
  %v1776 = vpop.f32.mrf.mxu0
  %v1777 = vadd.f32 %v610, %v1776
  %1778 = vmatmul.f32.gmra.mxu0 %v1171
  %v1779 = vpop.f32.mrf.mxu0
  %v1780 = vadd.f32 %v610, %v1779
  %1781 = vmatmul.f32.gmra.mxu0 %v1174
  %v1782 = vpop.f32.mrf.mxu0
  %v1783 = vadd.f32 %v610, %v1782
  %1784 = vmatmul.f32.gmra.mxu0 %v1177
  %v1785 = vpop.f32.mrf.mxu0
  %v1786 = vadd.f32 %v610, %v1785
  %1787 = vmatmul.f32.gmra.mxu0 %v1180
  %v1788 = vpop.f32.mrf.mxu0
  %v1789 = vadd.f32 %v610, %v1788
  %1790 = vmatmul.f32.gmra.mxu0 %v1183
  %v1791 = vpop.f32.mrf.mxu0
  %v1792 = vadd.f32 %v610, %v1791
  %1793 = vmatmul.f32.gmra.mxu0 %v1186
  %v1794 = vpop.f32.mrf.mxu0
  %v1795 = vadd.f32 %v610, %v1794
  %1796 = vmatmul.f32.gmra.mxu0 %v1189
  %v1797 = vpop.f32.mrf.mxu0
  %v1798 = vadd.f32 %v610, %v1797
  %1799 = vmatmul.f32.gmra.mxu0 %v1192
  %v1800 = vpop.f32.mrf.mxu0
  %v1801 = vadd.f32 %v610, %v1800
  %1802 = vmatmul.f32.gmra.mxu0 %v1195
  %v1803 = vpop.f32.mrf.mxu0
  %v1804 = vadd.f32 %v610, %v1803
  %1805 = vmatmul.f32.gmra.mxu0 %v1198
  %v1806 = vpop.f32.mrf.mxu0
  %v1807 = vadd.f32 %v610, %v1806
  %1808 = vdwg.mxu0
  %v1809 = vmax.f32 %v1222, 0.0
  %v1810 = vmax.f32 %v1225, 0.0
  %v1811 = vmax.f32 %v1228, 0.0
  %v1812 = vmax.f32 %v1231, 0.0
  %v1813 = vmax.f32 %v1234, 0.0
  %v1814 = vmax.f32 %v1237, 0.0
  %v1815 = vmax.f32 %v1240, 0.0
  %v1816 = vmax.f32 %v1243, 0.0
  %v1817 = vmax.f32 %v1246, 0.0
  %v1818 = vmax.f32 %v1249, 0.0
  %v1819 = vmax.f32 %v1252, 0.0
  %v1820 = vmax.f32 %v1255, 0.0
  %v1821 = vmax.f32 %v1258, 0.0
  %v1822 = vmax.f32 %v1261, 0.0
  %v1823 = vmax.f32 %v1264, 0.0
  %v1824 = vmax.f32 %v1267, 0.0
  %v1825 = vmax.f32 %v1270, 0.0
  %v1826 = vmax.f32 %v1273, 0.0
  %v1827 = vmax.f32 %v1276, 0.0
  %v1828 = vmax.f32 %v1279, 0.0
  %v1829 = vmax.f32 %v1282, 0.0
  %v1830 = vmax.f32 %v1285, 0.0
  %v1831 = vmax.f32 %v1288, 0.0
  %v1832 = vmax.f32 %v1291, 0.0
  %v1833 = vmax.f32 %v1294, 0.0
  %v1834 = vmax.f32 %v1297, 0.0
  %v1835 = vmax.f32 %v1300, 0.0
  %v1836 = vmax.f32 %v1303, 0.0
  %v1837 = vmax.f32 %v1306, 0.0
  %v1838 = vmax.f32 %v1309, 0.0
  %v1839 = vmax.f32 %v1312, 0.0
  %v1840 = vmax.f32 %v1315, 0.0
  %v1841 = vmax.f32 %v1318, 0.0
  %v1842 = vmax.f32 %v1321, 0.0
  %v1843 = vmax.f32 %v1324, 0.0
  %v1844 = vmax.f32 %v1327, 0.0
  %v1845 = vmax.f32 %v1330, 0.0
  %v1846 = vmax.f32 %v1333, 0.0
  %v1847 = vmax.f32 %v1336, 0.0
  %v1848 = vmax.f32 %v1339, 0.0
  %v1849 = vmax.f32 %v1342, 0.0
  %v1850 = vmax.f32 %v1345, 0.0
  %v1851 = vmax.f32 %v1348, 0.0
  %v1852 = vmax.f32 %v1351, 0.0
  %v1853 = vmax.f32 %v1354, 0.0
  %v1854 = vmax.f32 %v1357, 0.0
  %v1855 = vmax.f32 %v1360, 0.0
  %v1856 = vmax.f32 %v1363, 0.0
  %v1857 = vmax.f32 %v1366, 0.0
  %v1858 = vmax.f32 %v1369, 0.0
  %v1859 = vmax.f32 %v1372, 0.0
  %v1860 = vmax.f32 %v1375, 0.0
  %v1861 = vmax.f32 %v1378, 0.0
  %v1862 = vmax.f32 %v1381, 0.0
  %v1863 = vmax.f32 %v1384, 0.0
  %v1864 = vmax.f32 %v1387, 0.0
  %v1865 = vmax.f32 %v1390, 0.0
  %v1866 = vmax.f32 %v1393, 0.0
  %v1867 = vmax.f32 %v1396, 0.0
  %v1868 = vmax.f32 %v1399, 0.0
  %v1869 = vmax.f32 %v1402, 0.0
  %v1870 = vmax.f32 %v1405, 0.0
  %v1871 = vmax.f32 %v1408, 0.0
  %v1872 = vmax.f32 %v1411, 0.0
  %v1873 = vmax.f32 %v1414, 0.0
  %v1874 = vmax.f32 %v1417, 0.0
  %v1875 = vmax.f32 %v1420, 0.0
  %v1876 = vmax.f32 %v1423, 0.0
  %v1877 = vmax.f32 %v1426, 0.0
  %v1878 = vmax.f32 %v1429, 0.0
  %v1879 = vmax.f32 %v1432, 0.0
  %v1880 = vmax.f32 %v1435, 0.0
  %v1881 = vmax.f32 %v1438, 0.0
  %v1882 = vmax.f32 %v1441, 0.0
  %v1883 = vmax.f32 %v1444, 0.0
  %v1884 = vmax.f32 %v1447, 0.0
  %v1885 = vmax.f32 %v1450, 0.0
  %v1886 = vmax.f32 %v1453, 0.0
  %v1887 = vmax.f32 %v1456, 0.0
  %v1888 = vmax.f32 %v1459, 0.0
  %v1889 = vmax.f32 %v1462, 0.0
  %v1890 = vmax.f32 %v1465, 0.0
  %v1891 = vmax.f32 %v1468, 0.0
  %v1892 = vmax.f32 %v1471, 0.0
  %v1893 = vmax.f32 %v1474, 0.0
  %v1894 = vmax.f32 %v1477, 0.0
  %v1895 = vmax.f32 %v1480, 0.0
  %v1896 = vmax.f32 %v1483, 0.0
  %v1897 = vmax.f32 %v1486, 0.0
  %v1898 = vmax.f32 %v1489, 0.0
  %v1899 = vmax.f32 %v1492, 0.0
  %v1900 = vmax.f32 %v1495, 0.0
  %v1901 = vmax.f32 %v1498, 0.0
  %v1902 = vmax.f32 %v1501, 0.0
  %v1903 = vmax.f32 %v1504, 0.0
  %v1904 = vmax.f32 %v1507, 0.0
  %v1905 = vmax.f32 %v1510, 0.0
  %v1906 = vmax.f32 %v1513, 0.0
  %v1907 = vmax.f32 %v1516, 0.0
  %v1908 = vmax.f32 %v1519, 0.0
  %v1909 = vmax.f32 %v1522, 0.0
  %v1910 = vmax.f32 %v1525, 0.0
  %v1911 = vmax.f32 %v1528, 0.0
  %v1912 = vmax.f32 %v1531, 0.0
  %v1913 = vmax.f32 %v1534, 0.0
  %v1914 = vmax.f32 %v1537, 0.0
  %v1915 = vmax.f32 %v1540, 0.0
  %v1916 = vmax.f32 %v1543, 0.0
  %v1917 = vmax.f32 %v1546, 0.0
  %v1918 = vmax.f32 %v1549, 0.0
  %v1919 = vmax.f32 %v1552, 0.0
  %v1920 = vmax.f32 %v1555, 0.0
  %v1921 = vmax.f32 %v1558, 0.0
  %v1922 = vmax.f32 %v1561, 0.0
  %v1923 = vmax.f32 %v1564, 0.0
  %v1924 = vmax.f32 %v1567, 0.0
  %v1925 = vmax.f32 %v1570, 0.0
  %v1926 = vmax.f32 %v1573, 0.0
  %v1927 = vmax.f32 %v1576, 0.0
  %v1928 = vmax.f32 %v1579, 0.0
  %v1929 = vmax.f32 %v1582, 0.0
  %v1930 = vmax.f32 %v1585, 0.0
  %v1931 = vmax.f32 %v1588, 0.0
  %v1932 = vmax.f32 %v1591, 0.0
  %v1933 = vmax.f32 %v1594, 0.0
  %v1934 = vmax.f32 %v1597, 0.0
  %v1935 = vmax.f32 %v1600, 0.0
  %v1936 = vmax.f32 %v1603, 0.0
  %v1937 = vmax.f32 %v1606, 0.0
  %v1938 = vmax.f32 %v1609, 0.0
  %v1939 = vmax.f32 %v1612, 0.0
  %v1940 = vmax.f32 %v1615, 0.0
  %v1941 = vmax.f32 %v1618, 0.0
  %v1942 = vmax.f32 %v1621, 0.0
  %v1943 = vmax.f32 %v1624, 0.0
  %v1944 = vmax.f32 %v1627, 0.0
  %v1945 = vmax.f32 %v1630, 0.0
  %v1946 = vmax.f32 %v1633, 0.0
  %v1947 = vmax.f32 %v1636, 0.0
  %v1948 = vmax.f32 %v1639, 0.0
  %v1949 = vmax.f32 %v1642, 0.0
  %v1950 = vmax.f32 %v1645, 0.0
  %v1951 = vmax.f32 %v1648, 0.0
  %v1952 = vmax.f32 %v1651, 0.0
  %v1953 = vmax.f32 %v1654, 0.0
  %v1954 = vmax.f32 %v1657, 0.0
  %v1955 = vmax.f32 %v1660, 0.0
  %v1956 = vmax.f32 %v1663, 0.0
  %v1957 = vmax.f32 %v1666, 0.0
  %v1958 = vmax.f32 %v1669, 0.0
  %v1959 = vmax.f32 %v1672, 0.0
  %v1960 = vmax.f32 %v1675, 0.0
  %v1961 = vmax.f32 %v1678, 0.0
  %v1962 = vmax.f32 %v1681, 0.0
  %v1963 = vmax.f32 %v1684, 0.0
  %v1964 = vmax.f32 %v1687, 0.0
  %v1965 = vmax.f32 %v1690, 0.0
  %v1966 = vmax.f32 %v1693, 0.0
  %v1967 = vmax.f32 %v1696, 0.0
  %v1968 = vmax.f32 %v1699, 0.0
  %v1969 = vmax.f32 %v1702, 0.0
  %v1970 = vmax.f32 %v1705, 0.0
  %v1971 = vmax.f32 %v1708, 0.0
  %v1972 = vmax.f32 %v1711, 0.0
  %v1973 = vmax.f32 %v1714, 0.0
  %v1974 = vmax.f32 %v1717, 0.0
  %v1975 = vmax.f32 %v1720, 0.0
  %v1976 = vmax.f32 %v1723, 0.0
  %v1977 = vmax.f32 %v1726, 0.0
  %v1978 = vmax.f32 %v1729, 0.0
  %v1979 = vmax.f32 %v1732, 0.0
  %v1980 = vmax.f32 %v1735, 0.0
  %v1981 = vmax.f32 %v1738, 0.0
  %v1982 = vmax.f32 %v1741, 0.0
  %v1983 = vmax.f32 %v1744, 0.0
  %v1984 = vmax.f32 %v1747, 0.0
  %v1985 = vmax.f32 %v1750, 0.0
  %v1986 = vmax.f32 %v1753, 0.0
  %v1987 = vmax.f32 %v1756, 0.0
  %v1988 = vmax.f32 %v1759, 0.0
  %v1989 = vmax.f32 %v1762, 0.0
  %v1990 = vmax.f32 %v1765, 0.0
  %v1991 = vmax.f32 %v1768, 0.0
  %v1992 = vmax.f32 %v1771, 0.0
  %v1993 = vmax.f32 %v1774, 0.0
  %v1994 = vmax.f32 %v1777, 0.0
  %v1995 = vmax.f32 %v1780, 0.0
  %v1996 = vmax.f32 %v1783, 0.0
  %v1997 = vmax.f32 %v1786, 0.0
  %v1998 = vmax.f32 %v1789, 0.0
  %v1999 = vmax.f32 %v1792, 0.0
  %v2000 = vmax.f32 %v1795, 0.0
  %v2001 = vmax.f32 %v1798, 0.0
  %v2002 = vmax.f32 %v1801, 0.0
  %v2003 = vmax.f32 %v1804, 0.0
  %v2004 = vmax.f32 %v1807, 0.0
  %vm2005 = vcmask 48128
  %2006 = vst.msk [vmem:[#allocation3] sm:$0xff] %vm2005, %v1809
  %2007 = vst.msk [vmem:[#allocation3 + $0x8] sm:$0xff] %vm2005, %v1810
  %2008 = vst.msk [vmem:[#allocation3 + $0x10] sm:$0xff] %vm2005, %v1811
  %2009 = vst.msk [vmem:[#allocation3 + $0x18] sm:$0xff] %vm2005, %v1812
  %2010 = vst.msk [vmem:[#allocation3 + $0x20] sm:$0xff] %vm2005, %v1813
  %2011 = vst.msk [vmem:[#allocation3 + $0x28] sm:$0xff] %vm2005, %v1814
  %2012 = vst.msk [vmem:[#allocation3 + $0x30] sm:$0xff] %vm2005, %v1815
  %2013 = vst.msk [vmem:[#allocation3 + $0x38] sm:$0xff] %vm2005, %v1816
  %2014 = vst.msk [vmem:[#allocation3 + $0x40] sm:$0xff] %vm2005, %v1817
  %2015 = vst.msk [vmem:[#allocation3 + $0x48] sm:$0xff] %vm2005, %v1818
  %2016 = vst.msk [vmem:[#allocation3 + $0x50] sm:$0xff] %vm2005, %v1819
  %2017 = vst.msk [vmem:[#allocation3 + $0x58] sm:$0xff] %vm2005, %v1820
  %2018 = vst.msk [vmem:[#allocation3 + $0x60] sm:$0xff] %vm2005, %v1821
  %2019 = vst.msk [vmem:[#allocation3 + $0x68] sm:$0xff] %vm2005, %v1822
  %2020 = vst.msk [vmem:[#allocation3 + $0x70] sm:$0xff] %vm2005, %v1823
  %2021 = vst.msk [vmem:[#allocation3 + $0x78] sm:$0xff] %vm2005, %v1824
  %2022 = vst.msk [vmem:[#allocation3 + $0x80] sm:$0xff] %vm2005, %v1825
  %2023 = vst.msk [vmem:[#allocation3 + $0x88] sm:$0xff] %vm2005, %v1826
  %2024 = vst.msk [vmem:[#allocation3 + $0x90] sm:$0xff] %vm2005, %v1827
  %2025 = vst.msk [vmem:[#allocation3 + $0x98] sm:$0xff] %vm2005, %v1828
  %2026 = vst.msk [vmem:[#allocation3 + $0xa0] sm:$0xff] %vm2005, %v1829
  %2027 = vst.msk [vmem:[#allocation3 + $0xa8] sm:$0xff] %vm2005, %v1830
  %2028 = vst.msk [vmem:[#allocation3 + $0xb0] sm:$0xff] %vm2005, %v1831
  %2029 = vst.msk [vmem:[#allocation3 + $0xb8] sm:$0xff] %vm2005, %v1832
  %2030 = vst.msk [vmem:[#allocation3 + $0xc0] sm:$0xff] %vm2005, %v1833
  %2031 = vst.msk [vmem:[#allocation3 + $0xc8] sm:$0xff] %vm2005, %v1834
  %2032 = vst.msk [vmem:[#allocation3 + $0xd0] sm:$0xff] %vm2005, %v1835
  %2033 = vst.msk [vmem:[#allocation3 + $0xd8] sm:$0xff] %vm2005, %v1836
  %2034 = vst.msk [vmem:[#allocation3 + $0xe0] sm:$0xff] %vm2005, %v1837
  %2035 = vst.msk [vmem:[#allocation3 + $0xe8] sm:$0xff] %vm2005, %v1838
  %2036 = vst.msk [vmem:[#allocation3 + $0xf0] sm:$0xff] %vm2005, %v1839
  %2037 = vst.msk [vmem:[#allocation3 + $0xf8] sm:$0xff] %vm2005, %v1840
  %2038 = vst.msk [vmem:[#allocation3 + $0x100] sm:$0xff] %vm2005, %v1841
  %2039 = vst.msk [vmem:[#allocation3 + $0x108] sm:$0xff] %vm2005, %v1842
  %2040 = vst.msk [vmem:[#allocation3 + $0x110] sm:$0xff] %vm2005, %v1843
  %2041 = vst.msk [vmem:[#allocation3 + $0x118] sm:$0xff] %vm2005, %v1844
  %2042 = vst.msk [vmem:[#allocation3 + $0x120] sm:$0xff] %vm2005, %v1845
  %2043 = vst.msk [vmem:[#allocation3 + $0x128] sm:$0xff] %vm2005, %v1846
  %2044 = vst.msk [vmem:[#allocation3 + $0x130] sm:$0xff] %vm2005, %v1847
  %2045 = vst.msk [vmem:[#allocation3 + $0x138] sm:$0xff] %vm2005, %v1848
  %2046 = vst.msk [vmem:[#allocation3 + $0x140] sm:$0xff] %vm2005, %v1849
  %2047 = vst.msk [vmem:[#allocation3 + $0x148] sm:$0xff] %vm2005, %v1850
  %2048 = vst.msk [vmem:[#allocation3 + $0x150] sm:$0xff] %vm2005, %v1851
  %2049 = vst.msk [vmem:[#allocation3 + $0x158] sm:$0xff] %vm2005, %v1852
  %2050 = vst.msk [vmem:[#allocation3 + $0x160] sm:$0xff] %vm2005, %v1853
  %2051 = vst.msk [vmem:[#allocation3 + $0x168] sm:$0xff] %vm2005, %v1854
  %2052 = vst.msk [vmem:[#allocation3 + $0x170] sm:$0xff] %vm2005, %v1855
  %2053 = vst.msk [vmem:[#allocation3 + $0x178] sm:$0xff] %vm2005, %v1856
  %2054 = vst.msk [vmem:[#allocation3 + $0x180] sm:$0xff] %vm2005, %v1857
  %2055 = vst.msk [vmem:[#allocation3 + $0x188] sm:$0xff] %vm2005, %v1858
  %2056 = vst.msk [vmem:[#allocation3 + $0x190] sm:$0xff] %vm2005, %v1859
  %2057 = vst.msk [vmem:[#allocation3 + $0x198] sm:$0xff] %vm2005, %v1860
  %2058 = vst.msk [vmem:[#allocation3 + $0x1a0] sm:$0xff] %vm2005, %v1861
  %2059 = vst.msk [vmem:[#allocation3 + $0x1a8] sm:$0xff] %vm2005, %v1862
  %2060 = vst.msk [vmem:[#allocation3 + $0x1b0] sm:$0xff] %vm2005, %v1863
  %2061 = vst.msk [vmem:[#allocation3 + $0x1b8] sm:$0xff] %vm2005, %v1864
  %2062 = vst.msk [vmem:[#allocation3 + $0x1c0] sm:$0xff] %vm2005, %v1865
  %2063 = vst.msk [vmem:[#allocation3 + $0x1c8] sm:$0xff] %vm2005, %v1866
  %2064 = vst.msk [vmem:[#allocation3 + $0x1d0] sm:$0xff] %vm2005, %v1867
  %2065 = vst.msk [vmem:[#allocation3 + $0x1d8] sm:$0xff] %vm2005, %v1868
  %2066 = vst.msk [vmem:[#allocation3 + $0x1e0] sm:$0xff] %vm2005, %v1869
  %2067 = vst.msk [vmem:[#allocation3 + $0x1e8] sm:$0xff] %vm2005, %v1870
  %2068 = vst.msk [vmem:[#allocation3 + $0x1f0] sm:$0xff] %vm2005, %v1871
  %2069 = vst.msk [vmem:[#allocation3 + $0x1f8] sm:$0xff] %vm2005, %v1872
  %2070 = vst.msk [vmem:[#allocation3 + $0x200] sm:$0xff] %vm2005, %v1873
  %2071 = vst.msk [vmem:[#allocation3 + $0x208] sm:$0xff] %vm2005, %v1874
  %2072 = vst.msk [vmem:[#allocation3 + $0x210] sm:$0xff] %vm2005, %v1875
  %2073 = vst.msk [vmem:[#allocation3 + $0x218] sm:$0xff] %vm2005, %v1876
  %2074 = vst.msk [vmem:[#allocation3 + $0x220] sm:$0xff] %vm2005, %v1877
  %2075 = vst.msk [vmem:[#allocation3 + $0x228] sm:$0xff] %vm2005, %v1878
  %2076 = vst.msk [vmem:[#allocation3 + $0x230] sm:$0xff] %vm2005, %v1879
  %2077 = vst.msk [vmem:[#allocation3 + $0x238] sm:$0xff] %vm2005, %v1880
  %2078 = vst.msk [vmem:[#allocation3 + $0x240] sm:$0xff] %vm2005, %v1881
  %2079 = vst.msk [vmem:[#allocation3 + $0x248] sm:$0xff] %vm2005, %v1882
  %2080 = vst.msk [vmem:[#allocation3 + $0x250] sm:$0xff] %vm2005, %v1883
  %2081 = vst.msk [vmem:[#allocation3 + $0x258] sm:$0xff] %vm2005, %v1884
  %2082 = vst.msk [vmem:[#allocation3 + $0x260] sm:$0xff] %vm2005, %v1885
  %2083 = vst.msk [vmem:[#allocation3 + $0x268] sm:$0xff] %vm2005, %v1886
  %2084 = vst.msk [vmem:[#allocation3 + $0x270] sm:$0xff] %vm2005, %v1887
  %2085 = vst.msk [vmem:[#allocation3 + $0x278] sm:$0xff] %vm2005, %v1888
  %2086 = vst.msk [vmem:[#allocation3 + $0x280] sm:$0xff] %vm2005, %v1889
  %2087 = vst.msk [vmem:[#allocation3 + $0x288] sm:$0xff] %vm2005, %v1890
  %2088 = vst.msk [vmem:[#allocation3 + $0x290] sm:$0xff] %vm2005, %v1891
  %2089 = vst.msk [vmem:[#allocation3 + $0x298] sm:$0xff] %vm2005, %v1892
  %2090 = vst.msk [vmem:[#allocation3 + $0x2a0] sm:$0xff] %vm2005, %v1893
  %2091 = vst.msk [vmem:[#allocation3 + $0x2a8] sm:$0xff] %vm2005, %v1894
  %2092 = vst.msk [vmem:[#allocation3 + $0x2b0] sm:$0xff] %vm2005, %v1895
  %2093 = vst.msk [vmem:[#allocation3 + $0x2b8] sm:$0xff] %vm2005, %v1896
  %2094 = vst.msk [vmem:[#allocation3 + $0x2c0] sm:$0xff] %vm2005, %v1897
  %2095 = vst.msk [vmem:[#allocation3 + $0x2c8] sm:$0xff] %vm2005, %v1898
  %2096 = vst.msk [vmem:[#allocation3 + $0x2d0] sm:$0xff] %vm2005, %v1899
  %2097 = vst.msk [vmem:[#allocation3 + $0x2d8] sm:$0xff] %vm2005, %v1900
  %2098 = vst.msk [vmem:[#allocation3 + $0x2e0] sm:$0xff] %vm2005, %v1901
  %2099 = vst.msk [vmem:[#allocation3 + $0x2e8] sm:$0xff] %vm2005, %v1902
  %2100 = vst.msk [vmem:[#allocation3 + $0x2f0] sm:$0xff] %vm2005, %v1903
  %2101 = vst.msk [vmem:[#allocation3 + $0x2f8] sm:$0xff] %vm2005, %v1904
  %2102 = vst.msk [vmem:[#allocation3 + $0x300] sm:$0xff] %vm2005, %v1905
  %2103 = vst.msk [vmem:[#allocation3 + $0x308] sm:$0xff] %vm2005, %v1906
  %2104 = vst.msk [vmem:[#allocation3 + $0x310] sm:$0xff] %vm2005, %v1907
  %2105 = vst.msk [vmem:[#allocation3 + $0x318] sm:$0xff] %vm2005, %v1908
  %2106 = vst.msk [vmem:[#allocation3 + $0x320] sm:$0xff] %vm2005, %v1909
  %2107 = vst.msk [vmem:[#allocation3 + $0x328] sm:$0xff] %vm2005, %v1910
  %2108 = vst.msk [vmem:[#allocation3 + $0x330] sm:$0xff] %vm2005, %v1911
  %2109 = vst.msk [vmem:[#allocation3 + $0x338] sm:$0xff] %vm2005, %v1912
  %2110 = vst.msk [vmem:[#allocation3 + $0x340] sm:$0xff] %vm2005, %v1913
  %2111 = vst.msk [vmem:[#allocation3 + $0x348] sm:$0xff] %vm2005, %v1914
  %2112 = vst.msk [vmem:[#allocation3 + $0x350] sm:$0xff] %vm2005, %v1915
  %2113 = vst.msk [vmem:[#allocation3 + $0x358] sm:$0xff] %vm2005, %v1916
  %2114 = vst.msk [vmem:[#allocation3 + $0x360] sm:$0xff] %vm2005, %v1917
  %2115 = vst.msk [vmem:[#allocation3 + $0x368] sm:$0xff] %vm2005, %v1918
  %2116 = vst.msk [vmem:[#allocation3 + $0x370] sm:$0xff] %vm2005, %v1919
  %2117 = vst.msk [vmem:[#allocation3 + $0x378] sm:$0xff] %vm2005, %v1920
  %2118 = vst.msk [vmem:[#allocation3 + $0x380] sm:$0xff] %vm2005, %v1921
  %2119 = vst.msk [vmem:[#allocation3 + $0x388] sm:$0xff] %vm2005, %v1922
  %2120 = vst.msk [vmem:[#allocation3 + $0x390] sm:$0xff] %vm2005, %v1923
  %2121 = vst.msk [vmem:[#allocation3 + $0x398] sm:$0xff] %vm2005, %v1924
  %2122 = vst.msk [vmem:[#allocation3 + $0x3a0] sm:$0xff] %vm2005, %v1925
  %2123 = vst.msk [vmem:[#allocation3 + $0x3a8] sm:$0xff] %vm2005, %v1926
  %2124 = vst.msk [vmem:[#allocation3 + $0x3b0] sm:$0xff] %vm2005, %v1927
  %2125 = vst.msk [vmem:[#allocation3 + $0x3b8] sm:$0xff] %vm2005, %v1928
  %2126 = vst.msk [vmem:[#allocation3 + $0x3c0] sm:$0xff] %vm2005, %v1929
  %2127 = vst.msk [vmem:[#allocation3 + $0x3c8] sm:$0xff] %vm2005, %v1930
  %2128 = vst.msk [vmem:[#allocation3 + $0x3d0] sm:$0xff] %vm2005, %v1931
  %2129 = vst.msk [vmem:[#allocation3 + $0x3d8] sm:$0xff] %vm2005, %v1932
  %2130 = vst.msk [vmem:[#allocation3 + $0x3e0] sm:$0xff] %vm2005, %v1933
  %2131 = vst.msk [vmem:[#allocation3 + $0x3e8] sm:$0xff] %vm2005, %v1934
  %2132 = vst.msk [vmem:[#allocation3 + $0x3f0] sm:$0xff] %vm2005, %v1935
  %2133 = vst.msk [vmem:[#allocation3 + $0x3f8] sm:$0xff] %vm2005, %v1936
  %2134 = vst.msk [vmem:[#allocation3 + $0x400] sm:$0xff] %vm2005, %v1937
  %2135 = vst.msk [vmem:[#allocation3 + $0x408] sm:$0xff] %vm2005, %v1938
  %2136 = vst.msk [vmem:[#allocation3 + $0x410] sm:$0xff] %vm2005, %v1939
  %2137 = vst.msk [vmem:[#allocation3 + $0x418] sm:$0xff] %vm2005, %v1940
  %2138 = vst.msk [vmem:[#allocation3 + $0x420] sm:$0xff] %vm2005, %v1941
  %2139 = vst.msk [vmem:[#allocation3 + $0x428] sm:$0xff] %vm2005, %v1942
  %2140 = vst.msk [vmem:[#allocation3 + $0x430] sm:$0xff] %vm2005, %v1943
  %2141 = vst.msk [vmem:[#allocation3 + $0x438] sm:$0xff] %vm2005, %v1944
  %2142 = vst.msk [vmem:[#allocation3 + $0x440] sm:$0xff] %vm2005, %v1945
  %2143 = vst.msk [vmem:[#allocation3 + $0x448] sm:$0xff] %vm2005, %v1946
  %2144 = vst.msk [vmem:[#allocation3 + $0x450] sm:$0xff] %vm2005, %v1947
  %2145 = vst.msk [vmem:[#allocation3 + $0x458] sm:$0xff] %vm2005, %v1948
  %2146 = vst.msk [vmem:[#allocation3 + $0x460] sm:$0xff] %vm2005, %v1949
  %2147 = vst.msk [vmem:[#allocation3 + $0x468] sm:$0xff] %vm2005, %v1950
  %2148 = vst.msk [vmem:[#allocation3 + $0x470] sm:$0xff] %vm2005, %v1951
  %2149 = vst.msk [vmem:[#allocation3 + $0x478] sm:$0xff] %vm2005, %v1952
  %2150 = vst.msk [vmem:[#allocation3 + $0x480] sm:$0xff] %vm2005, %v1953
  %2151 = vst.msk [vmem:[#allocation3 + $0x488] sm:$0xff] %vm2005, %v1954
  %2152 = vst.msk [vmem:[#allocation3 + $0x490] sm:$0xff] %vm2005, %v1955
  %2153 = vst.msk [vmem:[#allocation3 + $0x498] sm:$0xff] %vm2005, %v1956
  %2154 = vst.msk [vmem:[#allocation3 + $0x4a0] sm:$0xff] %vm2005, %v1957
  %2155 = vst.msk [vmem:[#allocation3 + $0x4a8] sm:$0xff] %vm2005, %v1958
  %2156 = vst.msk [vmem:[#allocation3 + $0x4b0] sm:$0xff] %vm2005, %v1959
  %2157 = vst.msk [vmem:[#allocation3 + $0x4b8] sm:$0xff] %vm2005, %v1960
  %2158 = vst.msk [vmem:[#allocation3 + $0x4c0] sm:$0xff] %vm2005, %v1961
  %2159 = vst.msk [vmem:[#allocation3 + $0x4c8] sm:$0xff] %vm2005, %v1962
  %2160 = vst.msk [vmem:[#allocation3 + $0x4d0] sm:$0xff] %vm2005, %v1963
  %2161 = vst.msk [vmem:[#allocation3 + $0x4d8] sm:$0xff] %vm2005, %v1964
  %2162 = vst.msk [vmem:[#allocation3 + $0x4e0] sm:$0xff] %vm2005, %v1965
  %2163 = vst.msk [vmem:[#allocation3 + $0x4e8] sm:$0xff] %vm2005, %v1966
  %2164 = vst.msk [vmem:[#allocation3 + $0x4f0] sm:$0xff] %vm2005, %v1967
  %2165 = vst.msk [vmem:[#allocation3 + $0x4f8] sm:$0xff] %vm2005, %v1968
  %2166 = vst.msk [vmem:[#allocation3 + $0x500] sm:$0xff] %vm2005, %v1969
  %2167 = vst.msk [vmem:[#allocation3 + $0x508] sm:$0xff] %vm2005, %v1970
  %2168 = vst.msk [vmem:[#allocation3 + $0x510] sm:$0xff] %vm2005, %v1971
  %2169 = vst.msk [vmem:[#allocation3 + $0x518] sm:$0xff] %vm2005, %v1972
  %2170 = vst.msk [vmem:[#allocation3 + $0x520] sm:$0xff] %vm2005, %v1973
  %2171 = vst.msk [vmem:[#allocation3 + $0x528] sm:$0xff] %vm2005, %v1974
  %2172 = vst.msk [vmem:[#allocation3 + $0x530] sm:$0xff] %vm2005, %v1975
  %2173 = vst.msk [vmem:[#allocation3 + $0x538] sm:$0xff] %vm2005, %v1976
  %2174 = vst.msk [vmem:[#allocation3 + $0x540] sm:$0xff] %vm2005, %v1977
  %2175 = vst.msk [vmem:[#allocation3 + $0x548] sm:$0xff] %vm2005, %v1978
  %2176 = vst.msk [vmem:[#allocation3 + $0x550] sm:$0xff] %vm2005, %v1979
  %2177 = vst.msk [vmem:[#allocation3 + $0x558] sm:$0xff] %vm2005, %v1980
  %2178 = vst.msk [vmem:[#allocation3 + $0x560] sm:$0xff] %vm2005, %v1981
  %2179 = vst.msk [vmem:[#allocation3 + $0x568] sm:$0xff] %vm2005, %v1982
  %2180 = vst.msk [vmem:[#allocation3 + $0x570] sm:$0xff] %vm2005, %v1983
  %2181 = vst.msk [vmem:[#allocation3 + $0x578] sm:$0xff] %vm2005, %v1984
  %2182 = vst.msk [vmem:[#allocation3 + $0x580] sm:$0xff] %vm2005, %v1985
  %2183 = vst.msk [vmem:[#allocation3 + $0x588] sm:$0xff] %vm2005, %v1986
  %2184 = vst.msk [vmem:[#allocation3 + $0x590] sm:$0xff] %vm2005, %v1987
  %2185 = vst.msk [vmem:[#allocation3 + $0x598] sm:$0xff] %vm2005, %v1988
  %2186 = vst.msk [vmem:[#allocation3 + $0x5a0] sm:$0xff] %vm2005, %v1989
  %2187 = vst.msk [vmem:[#allocation3 + $0x5a8] sm:$0xff] %vm2005, %v1990
  %2188 = vst.msk [vmem:[#allocation3 + $0x5b0] sm:$0xff] %vm2005, %v1991
  %2189 = vst.msk [vmem:[#allocation3 + $0x5b8] sm:$0xff] %vm2005, %v1992
  %2190 = vst.msk [vmem:[#allocation3 + $0x5c0] sm:$0xff] %vm2005, %v1993
  %2191 = vst.msk [vmem:[#allocation3 + $0x5c8] sm:$0xff] %vm2005, %v1994
  %2192 = vst.msk [vmem:[#allocation3 + $0x5d0] sm:$0xff] %vm2005, %v1995
  %2193 = vst.msk [vmem:[#allocation3 + $0x5d8] sm:$0xff] %vm2005, %v1996
  %2194 = vst.msk [vmem:[#allocation3 + $0x5e0] sm:$0xff] %vm2005, %v1997
  %2195 = vst.msk [vmem:[#allocation3 + $0x5e8] sm:$0xff] %vm2005, %v1998
  %2196 = vst.msk [vmem:[#allocation3 + $0x5f0] sm:$0xff] %vm2005, %v1999
  %2197 = vst.msk [vmem:[#allocation3 + $0x5f8] sm:$0xff] %vm2005, %v2000
  %2198 = vst.msk [vmem:[#allocation3 + $0x600] sm:$0xff] %vm2005, %v2001
  %2199 = vst.msk [vmem:[#allocation3 + $0x608] sm:$0xff] %vm2005, %v2002
  %2200 = vst.msk [vmem:[#allocation3 + $0x610] sm:$0xff] %vm2005, %v2003
  %2201 = vst.msk [vmem:[#allocation3 + $0x618] sm:$0xff] %vm2005, %v2004
  %v2202 = vld [vmem:[#allocation3] sm:$0xff]
  %v2203 = vld [vmem:[#allocation3 + $0x8] sm:$0xff]
  %v2204 = vld [vmem:[#allocation3 + $0x10] sm:$0xff]
  %v2205 = vld [vmem:[#allocation3 + $0x18] sm:$0xff]
  %v2206 = vld [vmem:[#allocation3 + $0x20] sm:$0xff]
  %v2207 = vld [vmem:[#allocation3 + $0x28] sm:$0xff]
  %v2208 = vld [vmem:[#allocation3 + $0x30] sm:$0xff]
  %v2209 = vld [vmem:[#allocation3 + $0x38] sm:$0xff]
  %v2210 = vld [vmem:[#allocation3 + $0x40] sm:$0xff]
  %v2211 = vld [vmem:[#allocation3 + $0x48] sm:$0xff]
  %v2212 = vld [vmem:[#allocation3 + $0x50] sm:$0xff]
  %v2213 = vld [vmem:[#allocation3 + $0x58] sm:$0xff]
  %v2214 = vld [vmem:[#allocation3 + $0x60] sm:$0xff]
  %v2215 = vld [vmem:[#allocation3 + $0x68] sm:$0xff]
  %v2216 = vld [vmem:[#allocation3 + $0x70] sm:$0xff]
  %v2217 = vld [vmem:[#allocation3 + $0x78] sm:$0xff]
  %v2218 = vld [vmem:[#allocation3 + $0x80] sm:$0xff]
  %v2219 = vld [vmem:[#allocation3 + $0x88] sm:$0xff]
  %v2220 = vld [vmem:[#allocation3 + $0x90] sm:$0xff]
  %v2221 = vld [vmem:[#allocation3 + $0x98] sm:$0xff]
  %v2222 = vld [vmem:[#allocation3 + $0xa0] sm:$0xff]
  %v2223 = vld [vmem:[#allocation3 + $0xa8] sm:$0xff]
  %v2224 = vld [vmem:[#allocation3 + $0xb0] sm:$0xff]
  %v2225 = vld [vmem:[#allocation3 + $0xb8] sm:$0xff]
  %v2226 = vld [vmem:[#allocation3 + $0xc0] sm:$0xff]
  %v2227 = vld [vmem:[#allocation3 + $0xc8] sm:$0xff]
  %v2228 = vld [vmem:[#allocation3 + $0xd0] sm:$0xff]
  %v2229 = vld [vmem:[#allocation3 + $0xd8] sm:$0xff]
  %v2230 = vld [vmem:[#allocation3 + $0xe0] sm:$0xff]
  %v2231 = vld [vmem:[#allocation3 + $0xe8] sm:$0xff]
  %v2232 = vld [vmem:[#allocation3 + $0xf0] sm:$0xff]
  %v2233 = vld [vmem:[#allocation3 + $0xf8] sm:$0xff]
  %v2234 = vld [vmem:[#allocation3 + $0x100] sm:$0xff]
  %v2235 = vld [vmem:[#allocation3 + $0x108] sm:$0xff]
  %v2236 = vld [vmem:[#allocation3 + $0x110] sm:$0xff]
  %v2237 = vld [vmem:[#allocation3 + $0x118] sm:$0xff]
  %v2238 = vld [vmem:[#allocation3 + $0x120] sm:$0xff]
  %v2239 = vld [vmem:[#allocation3 + $0x128] sm:$0xff]
  %v2240 = vld [vmem:[#allocation3 + $0x130] sm:$0xff]
  %v2241 = vld [vmem:[#allocation3 + $0x138] sm:$0xff]
  %v2242 = vld [vmem:[#allocation3 + $0x140] sm:$0xff]
  %v2243 = vld [vmem:[#allocation3 + $0x148] sm:$0xff]
  %v2244 = vld [vmem:[#allocation3 + $0x150] sm:$0xff]
  %v2245 = vld [vmem:[#allocation3 + $0x158] sm:$0xff]
  %v2246 = vld [vmem:[#allocation3 + $0x160] sm:$0xff]
  %v2247 = vld [vmem:[#allocation3 + $0x168] sm:$0xff]
  %v2248 = vld [vmem:[#allocation3 + $0x170] sm:$0xff]
  %v2249 = vld [vmem:[#allocation3 + $0x178] sm:$0xff]
  %v2250 = vld [vmem:[#allocation3 + $0x180] sm:$0xff]
  %v2251 = vld [vmem:[#allocation3 + $0x188] sm:$0xff]
  %v2252 = vld [vmem:[#allocation3 + $0x190] sm:$0xff]
  %v2253 = vld [vmem:[#allocation3 + $0x198] sm:$0xff]
  %v2254 = vld [vmem:[#allocation3 + $0x1a0] sm:$0xff]
  %v2255 = vld [vmem:[#allocation3 + $0x1a8] sm:$0xff]
  %v2256 = vld [vmem:[#allocation3 + $0x1b0] sm:$0xff]
  %v2257 = vld [vmem:[#allocation3 + $0x1b8] sm:$0xff]
  %v2258 = vld [vmem:[#allocation3 + $0x1c0] sm:$0xff]
  %v2259 = vld [vmem:[#allocation3 + $0x1c8] sm:$0xff]
  %v2260 = vld [vmem:[#allocation3 + $0x1d0] sm:$0xff]
  %v2261 = vld [vmem:[#allocation3 + $0x1d8] sm:$0xff]
  %v2262 = vld [vmem:[#allocation3 + $0x1e0] sm:$0xff]
  %v2263 = vld [vmem:[#allocation3 + $0x1e8] sm:$0xff]
  %v2264 = vld [vmem:[#allocation3 + $0x1f0] sm:$0xff]
  %v2265 = vld [vmem:[#allocation3 + $0x1f8] sm:$0xff]
  %v2266 = vld [vmem:[#allocation3 + $0x200] sm:$0xff]
  %v2267 = vld [vmem:[#allocation3 + $0x208] sm:$0xff]
  %v2268 = vld [vmem:[#allocation3 + $0x210] sm:$0xff]
  %v2269 = vld [vmem:[#allocation3 + $0x218] sm:$0xff]
  %v2270 = vld [vmem:[#allocation3 + $0x220] sm:$0xff]
  %v2271 = vld [vmem:[#allocation3 + $0x228] sm:$0xff]
  %v2272 = vld [vmem:[#allocation3 + $0x230] sm:$0xff]
  %v2273 = vld [vmem:[#allocation3 + $0x238] sm:$0xff]
  %v2274 = vld [vmem:[#allocation3 + $0x240] sm:$0xff]
  %v2275 = vld [vmem:[#allocation3 + $0x248] sm:$0xff]
  %v2276 = vld [vmem:[#allocation3 + $0x250] sm:$0xff]
  %v2277 = vld [vmem:[#allocation3 + $0x258] sm:$0xff]
  %v2278 = vld [vmem:[#allocation3 + $0x260] sm:$0xff]
  %v2279 = vld [vmem:[#allocation3 + $0x268] sm:$0xff]
  %v2280 = vld [vmem:[#allocation3 + $0x270] sm:$0xff]
  %v2281 = vld [vmem:[#allocation3 + $0x278] sm:$0xff]
  %v2282 = vld [vmem:[#allocation3 + $0x280] sm:$0xff]
  %v2283 = vld [vmem:[#allocation3 + $0x288] sm:$0xff]
  %v2284 = vld [vmem:[#allocation3 + $0x290] sm:$0xff]
  %v2285 = vld [vmem:[#allocation3 + $0x298] sm:$0xff]
  %v2286 = vld [vmem:[#allocation3 + $0x2a0] sm:$0xff]
  %v2287 = vld [vmem:[#allocation3 + $0x2a8] sm:$0xff]
  %v2288 = vld [vmem:[#allocation3 + $0x2b0] sm:$0xff]
  %v2289 = vld [vmem:[#allocation3 + $0x2b8] sm:$0xff]
  %v2290 = vld [vmem:[#allocation3 + $0x2c0] sm:$0xff]
  %v2291 = vld [vmem:[#allocation3 + $0x2c8] sm:$0xff]
  %v2292 = vld [vmem:[#allocation3 + $0x2d0] sm:$0xff]
  %v2293 = vld [vmem:[#allocation3 + $0x2d8] sm:$0xff]
  %v2294 = vld [vmem:[#allocation3 + $0x2e0] sm:$0xff]
  %v2295 = vld [vmem:[#allocation3 + $0x2e8] sm:$0xff]
  %v2296 = vld [vmem:[#allocation3 + $0x2f0] sm:$0xff]
  %v2297 = vld [vmem:[#allocation3 + $0x2f8] sm:$0xff]
  %v2298 = vld [vmem:[#allocation3 + $0x300] sm:$0xff]
  %v2299 = vld [vmem:[#allocation3 + $0x308] sm:$0xff]
  %v2300 = vmax.f32 %v2202, %v2251
  %v2301 = vmax.f32 %v2203, %v2252
  %v2302 = vmax.f32 %v2204, %v2253
  %v2303 = vmax.f32 %v2205, %v2254
  %v2304 = vmax.f32 %v2206, %v2255
  %v2305 = vmax.f32 %v2207, %v2256
  %v2306 = vmax.f32 %v2208, %v2257
  %v2307 = vmax.f32 %v2209, %v2258
  %v2308 = vmax.f32 %v2210, %v2259
  %v2309 = vmax.f32 %v2211, %v2260
  %v2310 = vmax.f32 %v2212, %v2261
  %v2311 = vmax.f32 %v2213, %v2262
  %v2312 = vmax.f32 %v2214, %v2263
  %v2313 = vmax.f32 %v2215, %v2264
  %v2314 = vmax.f32 %v2216, %v2265
  %v2315 = vmax.f32 %v2217, %v2266
  %v2316 = vmax.f32 %v2218, %v2267
  %v2317 = vmax.f32 %v2219, %v2268
  %v2318 = vmax.f32 %v2220, %v2269
  %v2319 = vmax.f32 %v2221, %v2270
  %v2320 = vmax.f32 %v2222, %v2271
  %v2321 = vmax.f32 %v2223, %v2272
  %v2322 = vmax.f32 %v2224, %v2273
  %v2323 = vmax.f32 %v2225, %v2274
  %v2324 = vmax.f32 %v2226, %v2275
  %v2325 = vmax.f32 %v2227, %v2276
  %v2326 = vmax.f32 %v2228, %v2277
  %v2327 = vmax.f32 %v2229, %v2278
  %v2328 = vmax.f32 %v2230, %v2279
  %v2329 = vmax.f32 %v2231, %v2280
  %v2330 = vmax.f32 %v2232, %v2281
  %v2331 = vmax.f32 %v2233, %v2282
  %v2332 = vmax.f32 %v2234, %v2283
  %v2333 = vmax.f32 %v2235, %v2284
  %v2334 = vmax.f32 %v2236, %v2285
  %v2335 = vmax.f32 %v2237, %v2286
  %v2336 = vmax.f32 %v2238, %v2287
  %v2337 = vmax.f32 %v2239, %v2288
  %v2338 = vmax.f32 %v2240, %v2289
  %v2339 = vmax.f32 %v2241, %v2290
  %v2340 = vmax.f32 %v2242, %v2291
  %v2341 = vmax.f32 %v2243, %v2292
  %v2342 = vmax.f32 %v2244, %v2293
  %v2343 = vmax.f32 %v2245, %v2294
  %v2344 = vmax.f32 %v2246, %v2295
  %v2345 = vmax.f32 %v2247, %v2296
  %v2346 = vmax.f32 %v2248, %v2297
  %v2347 = vmax.f32 %v2249, %v2298
  %v2348 = vmax.f32 %v2250, %v2299
  %v2349 = vld [vmem:[#allocation3 + $0x310] sm:$0xff]
  %v2350 = vld [vmem:[#allocation3 + $0x318] sm:$0xff]
  %v2351 = vld [vmem:[#allocation3 + $0x320] sm:$0xff]
  %v2352 = vld [vmem:[#allocation3 + $0x328] sm:$0xff]
  %v2353 = vld [vmem:[#allocation3 + $0x330] sm:$0xff]
  %v2354 = vld [vmem:[#allocation3 + $0x338] sm:$0xff]
  %v2355 = vld [vmem:[#allocation3 + $0x340] sm:$0xff]
  %v2356 = vld [vmem:[#allocation3 + $0x348] sm:$0xff]
  %v2357 = vld [vmem:[#allocation3 + $0x350] sm:$0xff]
  %v2358 = vld [vmem:[#allocation3 + $0x358] sm:$0xff]
  %v2359 = vld [vmem:[#allocation3 + $0x360] sm:$0xff]
  %v2360 = vld [vmem:[#allocation3 + $0x368] sm:$0xff]
  %v2361 = vld [vmem:[#allocation3 + $0x370] sm:$0xff]
  %v2362 = vld [vmem:[#allocation3 + $0x378] sm:$0xff]
  %v2363 = vld [vmem:[#allocation3 + $0x380] sm:$0xff]
  %v2364 = vld [vmem:[#allocation3 + $0x388] sm:$0xff]
  %v2365 = vld [vmem:[#allocation3 + $0x390] sm:$0xff]
  %v2366 = vld [vmem:[#allocation3 + $0x398] sm:$0xff]
  %v2367 = vld [vmem:[#allocation3 + $0x3a0] sm:$0xff]
  %v2368 = vld [vmem:[#allocation3 + $0x3a8] sm:$0xff]
  %v2369 = vld [vmem:[#allocation3 + $0x3b0] sm:$0xff]
  %v2370 = vld [vmem:[#allocation3 + $0x3b8] sm:$0xff]
  %v2371 = vld [vmem:[#allocation3 + $0x3c0] sm:$0xff]
  %v2372 = vld [vmem:[#allocation3 + $0x3c8] sm:$0xff]
  %v2373 = vld [vmem:[#allocation3 + $0x3d0] sm:$0xff]
  %v2374 = vld [vmem:[#allocation3 + $0x3d8] sm:$0xff]
  %v2375 = vld [vmem:[#allocation3 + $0x3e0] sm:$0xff]
  %v2376 = vld [vmem:[#allocation3 + $0x3e8] sm:$0xff]
  %v2377 = vld [vmem:[#allocation3 + $0x3f0] sm:$0xff]
  %v2378 = vld [vmem:[#allocation3 + $0x3f8] sm:$0xff]
  %v2379 = vld [vmem:[#allocation3 + $0x400] sm:$0xff]
  %v2380 = vld [vmem:[#allocation3 + $0x408] sm:$0xff]
  %v2381 = vld [vmem:[#allocation3 + $0x410] sm:$0xff]
  %v2382 = vld [vmem:[#allocation3 + $0x418] sm:$0xff]
  %v2383 = vld [vmem:[#allocation3 + $0x420] sm:$0xff]
  %v2384 = vld [vmem:[#allocation3 + $0x428] sm:$0xff]
  %v2385 = vld [vmem:[#allocation3 + $0x430] sm:$0xff]
  %v2386 = vld [vmem:[#allocation3 + $0x438] sm:$0xff]
  %v2387 = vld [vmem:[#allocation3 + $0x440] sm:$0xff]
  %v2388 = vld [vmem:[#allocation3 + $0x448] sm:$0xff]
  %v2389 = vld [vmem:[#allocation3 + $0x450] sm:$0xff]
  %v2390 = vld [vmem:[#allocation3 + $0x458] sm:$0xff]
  %v2391 = vld [vmem:[#allocation3 + $0x460] sm:$0xff]
  %v2392 = vld [vmem:[#allocation3 + $0x468] sm:$0xff]
  %v2393 = vld [vmem:[#allocation3 + $0x470] sm:$0xff]
  %v2394 = vld [vmem:[#allocation3 + $0x478] sm:$0xff]
  %v2395 = vld [vmem:[#allocation3 + $0x480] sm:$0xff]
  %v2396 = vld [vmem:[#allocation3 + $0x488] sm:$0xff]
  %v2397 = vld [vmem:[#allocation3 + $0x490] sm:$0xff]
  %v2398 = vld [vmem:[#allocation3 + $0x498] sm:$0xff]
  %v2399 = vld [vmem:[#allocation3 + $0x4a0] sm:$0xff]
  %v2400 = vld [vmem:[#allocation3 + $0x4a8] sm:$0xff]
  %v2401 = vld [vmem:[#allocation3 + $0x4b0] sm:$0xff]
  %v2402 = vld [vmem:[#allocation3 + $0x4b8] sm:$0xff]
  %v2403 = vld [vmem:[#allocation3 + $0x4c0] sm:$0xff]
  %v2404 = vld [vmem:[#allocation3 + $0x4c8] sm:$0xff]
  %v2405 = vld [vmem:[#allocation3 + $0x4d0] sm:$0xff]
  %v2406 = vld [vmem:[#allocation3 + $0x4d8] sm:$0xff]
  %v2407 = vld [vmem:[#allocation3 + $0x4e0] sm:$0xff]
  %v2408 = vld [vmem:[#allocation3 + $0x4e8] sm:$0xff]
  %v2409 = vld [vmem:[#allocation3 + $0x4f0] sm:$0xff]
  %v2410 = vld [vmem:[#allocation3 + $0x4f8] sm:$0xff]
  %v2411 = vld [vmem:[#allocation3 + $0x500] sm:$0xff]
  %v2412 = vld [vmem:[#allocation3 + $0x508] sm:$0xff]
  %v2413 = vld [vmem:[#allocation3 + $0x510] sm:$0xff]
  %v2414 = vld [vmem:[#allocation3 + $0x518] sm:$0xff]
  %v2415 = vld [vmem:[#allocation3 + $0x520] sm:$0xff]
  %v2416 = vld [vmem:[#allocation3 + $0x528] sm:$0xff]
  %v2417 = vld [vmem:[#allocation3 + $0x530] sm:$0xff]
  %v2418 = vld [vmem:[#allocation3 + $0x538] sm:$0xff]
  %v2419 = vld [vmem:[#allocation3 + $0x540] sm:$0xff]
  %v2420 = vld [vmem:[#allocation3 + $0x548] sm:$0xff]
  %v2421 = vld [vmem:[#allocation3 + $0x550] sm:$0xff]
  %v2422 = vld [vmem:[#allocation3 + $0x558] sm:$0xff]
  %v2423 = vld [vmem:[#allocation3 + $0x560] sm:$0xff]
  %v2424 = vld [vmem:[#allocation3 + $0x568] sm:$0xff]
  %v2425 = vld [vmem:[#allocation3 + $0x570] sm:$0xff]
  %v2426 = vld [vmem:[#allocation3 + $0x578] sm:$0xff]
  %v2427 = vld [vmem:[#allocation3 + $0x580] sm:$0xff]
  %v2428 = vld [vmem:[#allocation3 + $0x588] sm:$0xff]
  %v2429 = vld [vmem:[#allocation3 + $0x590] sm:$0xff]
  %v2430 = vld [vmem:[#allocation3 + $0x598] sm:$0xff]
  %v2431 = vld [vmem:[#allocation3 + $0x5a0] sm:$0xff]
  %v2432 = vld [vmem:[#allocation3 + $0x5a8] sm:$0xff]
  %v2433 = vld [vmem:[#allocation3 + $0x5b0] sm:$0xff]
  %v2434 = vld [vmem:[#allocation3 + $0x5b8] sm:$0xff]
  %v2435 = vld [vmem:[#allocation3 + $0x5c0] sm:$0xff]
  %v2436 = vld [vmem:[#allocation3 + $0x5c8] sm:$0xff]
  %v2437 = vld [vmem:[#allocation3 + $0x5d0] sm:$0xff]
  %v2438 = vld [vmem:[#allocation3 + $0x5d8] sm:$0xff]
  %v2439 = vld [vmem:[#allocation3 + $0x5e0] sm:$0xff]
  %v2440 = vld [vmem:[#allocation3 + $0x5e8] sm:$0xff]
  %v2441 = vld [vmem:[#allocation3 + $0x5f0] sm:$0xff]
  %v2442 = vld [vmem:[#allocation3 + $0x5f8] sm:$0xff]
  %v2443 = vld [vmem:[#allocation3 + $0x600] sm:$0xff]
  %v2444 = vld [vmem:[#allocation3 + $0x608] sm:$0xff]
  %v2445 = vld [vmem:[#allocation3 + $0x610] sm:$0xff]
  %v2446 = vld [vmem:[#allocation3 + $0x618] sm:$0xff]
  %v2447 = vmax.f32 %v2349, %v2398
  %v2448 = vmax.f32 %v2350, %v2399
  %v2449 = vmax.f32 %v2351, %v2400
  %v2450 = vmax.f32 %v2352, %v2401
  %v2451 = vmax.f32 %v2353, %v2402
  %v2452 = vmax.f32 %v2354, %v2403
  %v2453 = vmax.f32 %v2355, %v2404
  %v2454 = vmax.f32 %v2356, %v2405
  %v2455 = vmax.f32 %v2357, %v2406
  %v2456 = vmax.f32 %v2358, %v2407
  %v2457 = vmax.f32 %v2359, %v2408
  %v2458 = vmax.f32 %v2360, %v2409
  %v2459 = vmax.f32 %v2361, %v2410
  %v2460 = vmax.f32 %v2362, %v2411
  %v2461 = vmax.f32 %v2363, %v2412
  %v2462 = vmax.f32 %v2364, %v2413
  %v2463 = vmax.f32 %v2365, %v2414
  %v2464 = vmax.f32 %v2366, %v2415
  %v2465 = vmax.f32 %v2367, %v2416
  %v2466 = vmax.f32 %v2368, %v2417
  %v2467 = vmax.f32 %v2369, %v2418
  %v2468 = vmax.f32 %v2370, %v2419
  %v2469 = vmax.f32 %v2371, %v2420
  %v2470 = vmax.f32 %v2372, %v2421
  %v2471 = vmax.f32 %v2373, %v2422
  %v2472 = vmax.f32 %v2374, %v2423
  %v2473 = vmax.f32 %v2375, %v2424
  %v2474 = vmax.f32 %v2376, %v2425
  %v2475 = vmax.f32 %v2377, %v2426
  %v2476 = vmax.f32 %v2378, %v2427
  %v2477 = vmax.f32 %v2379, %v2428
  %v2478 = vmax.f32 %v2380, %v2429
  %v2479 = vmax.f32 %v2381, %v2430
  %v2480 = vmax.f32 %v2382, %v2431
  %v2481 = vmax.f32 %v2383, %v2432
  %v2482 = vmax.f32 %v2384, %v2433
  %v2483 = vmax.f32 %v2385, %v2434
  %v2484 = vmax.f32 %v2386, %v2435
  %v2485 = vmax.f32 %v2387, %v2436
  %v2486 = vmax.f32 %v2388, %v2437
  %v2487 = vmax.f32 %v2389, %v2438
  %v2488 = vmax.f32 %v2390, %v2439
  %v2489 = vmax.f32 %v2391, %v2440
  %v2490 = vmax.f32 %v2392, %v2441
  %v2491 = vmax.f32 %v2393, %v2442
  %v2492 = vmax.f32 %v2394, %v2443
  %v2493 = vmax.f32 %v2395, %v2444
  %v2494 = vmax.f32 %v2396, %v2445
  %v2495 = vmax.f32 %v2397, %v2446
  %v2496 = vmax.f32 %v2300, %v2447
  %v2497 = vmax.f32 %v2301, %v2448
  %v2498 = vmax.f32 %v2302, %v2449
  %v2499 = vmax.f32 %v2303, %v2450
  %v2500 = vmax.f32 %v2304, %v2451
  %v2501 = vmax.f32 %v2305, %v2452
  %v2502 = vmax.f32 %v2306, %v2453
  %v2503 = vmax.f32 %v2307, %v2454
  %v2504 = vmax.f32 %v2308, %v2455
  %v2505 = vmax.f32 %v2309, %v2456
  %v2506 = vmax.f32 %v2310, %v2457
  %v2507 = vmax.f32 %v2311, %v2458
  %v2508 = vmax.f32 %v2312, %v2459
  %v2509 = vmax.f32 %v2313, %v2460
  %v2510 = vmax.f32 %v2314, %v2461
  %v2511 = vmax.f32 %v2315, %v2462
  %v2512 = vmax.f32 %v2316, %v2463
  %v2513 = vmax.f32 %v2317, %v2464
  %v2514 = vmax.f32 %v2318, %v2465
  %v2515 = vmax.f32 %v2319, %v2466
  %v2516 = vmax.f32 %v2320, %v2467
  %v2517 = vmax.f32 %v2321, %v2468
  %v2518 = vmax.f32 %v2322, %v2469
  %v2519 = vmax.f32 %v2323, %v2470
  %v2520 = vmax.f32 %v2324, %v2471
  %v2521 = vmax.f32 %v2325, %v2472
  %v2522 = vmax.f32 %v2326, %v2473
  %v2523 = vmax.f32 %v2327, %v2474
  %v2524 = vmax.f32 %v2328, %v2475
  %v2525 = vmax.f32 %v2329, %v2476
  %v2526 = vmax.f32 %v2330, %v2477
  %v2527 = vmax.f32 %v2331, %v2478
  %v2528 = vmax.f32 %v2332, %v2479
  %v2529 = vmax.f32 %v2333, %v2480
  %v2530 = vmax.f32 %v2334, %v2481
  %v2531 = vmax.f32 %v2335, %v2482
  %v2532 = vmax.f32 %v2336, %v2483
  %v2533 = vmax.f32 %v2337, %v2484
  %v2534 = vmax.f32 %v2338, %v2485
  %v2535 = vmax.f32 %v2339, %v2486
  %v2536 = vmax.f32 %v2340, %v2487
  %v2537 = vmax.f32 %v2341, %v2488
  %v2538 = vmax.f32 %v2342, %v2489
  %v2539 = vmax.f32 %v2343, %v2490
  %v2540 = vmax.f32 %v2344, %v2491
  %v2541 = vmax.f32 %v2345, %v2492
  %v2542 = vmax.f32 %v2346, %v2493
  %v2543 = vmax.f32 %v2347, %v2494
  %v2544 = vmax.f32 %v2348, %v2495
  %2545 = vst.msk [vmem:[%s3] sm:$0xff] %vm2005, %v2496
  %2546 = vst.msk [vmem:[%s3 + $0x8] sm:$0xff] %vm2005, %v2497
  %2547 = vst.msk [vmem:[%s3 + $0x10] sm:$0xff] %vm2005, %v2498
  %2548 = vst.msk [vmem:[%s3 + $0x18] sm:$0xff] %vm2005, %v2499
  %2549 = vst.msk [vmem:[%s3 + $0x20] sm:$0xff] %vm2005, %v2500
  %2550 = vst.msk [vmem:[%s3 + $0x28] sm:$0xff] %vm2005, %v2501
  %2551 = vst.msk [vmem:[%s3 + $0x30] sm:$0xff] %vm2005, %v2502
  %2552 = vst.msk [vmem:[%s3 + $0x38] sm:$0xff] %vm2005, %v2503
  %2553 = vst.msk [vmem:[%s3 + $0x40] sm:$0xff] %vm2005, %v2504
  %2554 = vst.msk [vmem:[%s3 + $0x48] sm:$0xff] %vm2005, %v2505
  %2555 = vst.msk [vmem:[%s3 + $0x50] sm:$0xff] %vm2005, %v2506
  %2556 = vst.msk [vmem:[%s3 + $0x58] sm:$0xff] %vm2005, %v2507
  %2557 = vst.msk [vmem:[%s3 + $0x60] sm:$0xff] %vm2005, %v2508
  %2558 = vst.msk [vmem:[%s3 + $0x68] sm:$0xff] %vm2005, %v2509
  %2559 = vst.msk [vmem:[%s3 + $0x70] sm:$0xff] %vm2005, %v2510
  %2560 = vst.msk [vmem:[%s3 + $0x78] sm:$0xff] %vm2005, %v2511
  %2561 = vst.msk [vmem:[%s3 + $0x80] sm:$0xff] %vm2005, %v2512
  %2562 = vst.msk [vmem:[%s3 + $0x88] sm:$0xff] %vm2005, %v2513
  %2563 = vst.msk [vmem:[%s3 + $0x90] sm:$0xff] %vm2005, %v2514
  %2564 = vst.msk [vmem:[%s3 + $0x98] sm:$0xff] %vm2005, %v2515
  %2565 = vst.msk [vmem:[%s3 + $0xa0] sm:$0xff] %vm2005, %v2516
  %2566 = vst.msk [vmem:[%s3 + $0xa8] sm:$0xff] %vm2005, %v2517
  %2567 = vst.msk [vmem:[%s3 + $0xb0] sm:$0xff] %vm2005, %v2518
  %2568 = vst.msk [vmem:[%s3 + $0xb8] sm:$0xff] %vm2005, %v2519
  %2569 = vst.msk [vmem:[%s3 + $0xc0] sm:$0xff] %vm2005, %v2520
  %2570 = vst.msk [vmem:[%s3 + $0xc8] sm:$0xff] %vm2005, %v2521
  %2571 = vst.msk [vmem:[%s3 + $0xd0] sm:$0xff] %vm2005, %v2522
  %2572 = vst.msk [vmem:[%s3 + $0xd8] sm:$0xff] %vm2005, %v2523
  %2573 = vst.msk [vmem:[%s3 + $0xe0] sm:$0xff] %vm2005, %v2524
  %2574 = vst.msk [vmem:[%s3 + $0xe8] sm:$0xff] %vm2005, %v2525
  %2575 = vst.msk [vmem:[%s3 + $0xf0] sm:$0xff] %vm2005, %v2526
  %2576 = vst.msk [vmem:[%s3 + $0xf8] sm:$0xff] %vm2005, %v2527
  %2577 = vst.msk [vmem:[%s3 + $0x100] sm:$0xff] %vm2005, %v2528
  %2578 = vst.msk [vmem:[%s3 + $0x108] sm:$0xff] %vm2005, %v2529
  %2579 = vst.msk [vmem:[%s3 + $0x110] sm:$0xff] %vm2005, %v2530
  %2580 = vst.msk [vmem:[%s3 + $0x118] sm:$0xff] %vm2005, %v2531
  %2581 = vst.msk [vmem:[%s3 + $0x120] sm:$0xff] %vm2005, %v2532
  %2582 = vst.msk [vmem:[%s3 + $0x128] sm:$0xff] %vm2005, %v2533
  %2583 = vst.msk [vmem:[%s3 + $0x130] sm:$0xff] %vm2005, %v2534
  %2584 = vst.msk [vmem:[%s3 + $0x138] sm:$0xff] %vm2005, %v2535
  %2585 = vst.msk [vmem:[%s3 + $0x140] sm:$0xff] %vm2005, %v2536
  %2586 = vst.msk [vmem:[%s3 + $0x148] sm:$0xff] %vm2005, %v2537
  %2587 = vst.msk [vmem:[%s3 + $0x150] sm:$0xff] %vm2005, %v2538
  %2588 = vst.msk [vmem:[%s3 + $0x158] sm:$0xff] %vm2005, %v2539
  %2589 = vst.msk [vmem:[%s3 + $0x160] sm:$0xff] %vm2005, %v2540
  %2590 = vst.msk [vmem:[%s3 + $0x168] sm:$0xff] %vm2005, %v2541
  %2591 = vst.msk [vmem:[%s3 + $0x170] sm:$0xff] %vm2005, %v2542
  %2592 = vst.msk [vmem:[%s3 + $0x178] sm:$0xff] %vm2005, %v2543
  %2593 = vst.msk [vmem:[%s3 + $0x180] sm:$0xff] %vm2005, %v2544
  // Predicated region
  $region14: #{cnn_forward.2} parent=0 // pred_check
    _
  $region15: #{cnn_forward.2} parent=0 // pred_check_branch
    %2595 = sbr.rel (0) target = $region17
  $region16: #{cnn_forward.2} parent=0 // pred_region
    _
  $region17: #{cnn_forward.2} parent=0 // pred_fallthru
    _
  // Predicated region
  $region18: #{cnn_forward.2} parent=0 // pred_check
    _
  $region19: #{cnn_forward.2} parent=0 // pred_check_branch
    %2597 = sbr.rel (0) target = $region21
  $region20: #{cnn_forward.2} parent=0 // pred_region
    _
  $region21: #{cnn_forward.2} parent=0 // pred_fallthru
    _

// kernel: cnn_forward.3
$region0: #{cnn_forward.3}
  #allocation0 [shape = 'u32[]', space=smem, size = 0x4, offset = 0x4, fixed_abs, tag = 'smem constant byte address 0x4 - core index']
  #allocation1 [shape = 'u32[72,128]{1,0:T(1,128)}', space=vmem, size = 0x9000, scoped, tag = 'internal scratch']
  #allocation2 [shape = 'f32[200,16]{1,0:T(8,128)}', space=vmem, size = 0x19000, scoped, tag = 'scratch operand']
  #allocation3 [shape = 'f32[50,16]{1,0:T(8,128)}', space=vmem, size = 0x7000, scoped, tag = 'scratch operand']
  #allocation4 [shape = 'f32[2,400]{1,0:T(2,128)}', space=vmem, size = 0x1000, scoped, tag = 'scratch operand']
  %s0 = inlined_call_operand.vmem [shape: f32[200,150], index: 0, kind: input, shape index: {}]
  %s1 = inlined_call_operand.vmem [shape: f32[150,16], index: 1, kind: input, shape index: {}]
  %s2 = inlined_call_operand.vmem [shape: f32[1,16], index: 2, kind: input, shape index: {}]
  %s3 = inlined_call_operand.vmem [shape: f32[400,120], index: 3, kind: input, shape index: {}]
  %s4 = inlined_call_operand.vmem [shape: f32[1,120], index: 4, kind: input, shape index: {}]
  %s5 = inlined_call_operand.vmem [shape: f32[120,84], index: 5, kind: input, shape index: {}]
  %s6 = inlined_call_operand.vmem [shape: f32[1,84], index: 6, kind: input, shape index: {}]
  %s7 = inlined_call_operand.vmem [shape: f32[84,10], index: 7, kind: input, shape index: {}]
  %s8 = inlined_call_operand.vmem [shape: f32[1,10], index: 8, kind: input, shape index: {}]
  %s9 = inlined_call_operand.hbm [shape: f32[2,10], index: 9, kind: output, shape index: {}]
  %s10 = sld [smem:[#allocation0]]
  $region46: #{cnn_forward.3} parent=0
    _
  %s12 = ssub.s32 1, %s10
  %s13 = scalar_select 0, %s12, %s10
  $region1: #{cnn_forward.3} parent=0
    #allocation5 [shape = 'u8[1024]{0}', space=vmem, size = 0x400, scoped, tag = 'output window, operand 0, single buffered']
    #allocation6 [shape = 's32[1]{0}', space=sflag, size = 0x4, scoped, tag = 'scoped memory for cnn_forward.3']
    %14 = vsyncpa [#allocation6], 0
    // Predicated region
    $region2: #{cnn_forward.3} parent=1 // pred_check
      _
    $region3: #{cnn_forward.3} parent=1 // pred_check_branch
      %16 = sbr.rel (0) target = $region5
    $region4: #{cnn_forward.3} parent=1 // pred_region
      _
    $region5: #{cnn_forward.3} parent=1 // pred_fallthru
      _
    // Predicated region
    $region6: #{cnn_forward.3} parent=1 // pred_check
      _
    $region7: #{cnn_forward.3} parent=1 // pred_check_branch
      %18 = sbr.rel (0) target = $region9
    $region8: #{cnn_forward.3} parent=1 // pred_region
      _
    $region9: #{cnn_forward.3} parent=1 // pred_fallthru
      _
    // Predicated region
    $region10: #{cnn_forward.3} parent=1 // pred_check
      _
    $region11: #{cnn_forward.3} parent=1 // pred_check_branch
      %20 = sbr.rel (0) target = $region13
    $region12: #{cnn_forward.3} parent=1 // pred_region
      _
    $region13: #{cnn_forward.3} parent=1 // pred_fallthru
      _
    // Predicated region
    $region14: #{cnn_forward.3} parent=1 // pred_check
      _
    $region15: #{cnn_forward.3} parent=1 // pred_check_branch
      %22 = sbr.rel (0) target = $region17
    $region16: #{cnn_forward.3} parent=1 // pred_region
      _
    $region17: #{cnn_forward.3} parent=1 // pred_fallthru
      _
    // Predicated region
    $region18: #{cnn_forward.3} parent=1 // pred_check
      _
    $region19: #{cnn_forward.3} parent=1 // pred_check_branch
      %24 = sbr.rel (0) target = $region21
    $region20: #{cnn_forward.3} parent=1 // pred_region
      _
    $region21: #{cnn_forward.3} parent=1 // pred_fallthru
      _
    // Predicated region
    $region22: #{cnn_forward.3} parent=1 // pred_check
      _
    $region23: #{cnn_forward.3} parent=1 // pred_check_branch
      %26 = sbr.rel (0) target = $region25
    $region24: #{cnn_forward.3} parent=1 // pred_region
      _
    $region25: #{cnn_forward.3} parent=1 // pred_fallthru
      _
    // Predicated region
    $region26: #{cnn_forward.3} parent=1 // pred_check
      _
    $region27: #{cnn_forward.3} parent=1 // pred_check_branch
      %28 = sbr.rel (0) target = $region29
    $region28: #{cnn_forward.3} parent=1 // pred_region
      _
    $region29: #{cnn_forward.3} parent=1 // pred_fallthru
      _
    // Predicated region
    $region30: #{cnn_forward.3} parent=1 // pred_check
      _
    $region31: #{cnn_forward.3} parent=1 // pred_check_branch
      %30 = sbr.rel (0) target = $region33
    $region32: #{cnn_forward.3} parent=1 // pred_region
      _
    $region33: #{cnn_forward.3} parent=1 // pred_fallthru
      _
    // Predicated region
    $region34: #{cnn_forward.3} parent=1 // pred_check
      _
    $region35: #{cnn_forward.3} parent=1 // pred_check_branch
      %32 = sbr.rel (0) target = $region37
    $region36: #{cnn_forward.3} parent=1 // pred_region
      _
    $region37: #{cnn_forward.3} parent=1 // pred_fallthru
      _
    %v33 = vld [vmem:[%s0] sm:$0xff]
    %v34 = vld [vmem:[%s0 + $0x8] sm:$0xff]
    %v35 = vld [vmem:[%s0 + $0x10] sm:$0xff]
    %v36 = vld [vmem:[%s0 + $0x18] sm:$0xff]
    %v37 = vld [vmem:[%s0 + $0x20] sm:$0xff]
    %v38 = vld [vmem:[%s0 + $0x28] sm:$0xff]
    %v39 = vld [vmem:[%s0 + $0x30] sm:$0xff]
    %v40 = vld [vmem:[%s0 + $0x38] sm:$0xff]
    %v41 = vld [vmem:[%s0 + $0x40] sm:$0xff]
    %v42 = vld [vmem:[%s0 + $0x48] sm:$0xff]
    %v43 = vld [vmem:[%s0 + $0x50] sm:$0xff]
    %v44 = vld [vmem:[%s0 + $0x58] sm:$0xff]
    %v45 = vld [vmem:[%s0 + $0x60] sm:$0xff]
    %v46 = vld [vmem:[%s0 + $0x68] sm:$0xff]
    %v47 = vld [vmem:[%s0 + $0x70] sm:$0xff]
    %v48 = vld [vmem:[%s0 + $0x78] sm:$0xff]
    %v49 = vld [vmem:[%s0 + $0x80] sm:$0xff]
    %v50 = vld [vmem:[%s0 + $0x88] sm:$0xff]
    %v51 = vld [vmem:[%s0 + $0x90] sm:$0xff]
    %v52 = vld [vmem:[%s0 + $0x98] sm:$0xff]
    %v53 = vld [vmem:[%s0 + $0xa0] sm:$0xff]
    %v54 = vld [vmem:[%s0 + $0xa8] sm:$0xff]
    %v55 = vld [vmem:[%s0 + $0xb0] sm:$0xff]
    %v56 = vld [vmem:[%s0 + $0xb8] sm:$0xff]
    %v57 = vld [vmem:[%s0 + $0xc0] sm:$0xff]
    %v58 = vld [vmem:[%s0 + $0xc8] sm:$0xff]
    %v59 = vld [vmem:[%s0 + $0xd0] sm:$0xff]
    %v60 = vld [vmem:[%s0 + $0xd8] sm:$0xff]
    %v61 = vld [vmem:[%s0 + $0xe0] sm:$0xff]
    %v62 = vld [vmem:[%s0 + $0xe8] sm:$0xff]
    %v63 = vld [vmem:[%s0 + $0xf0] sm:$0xff]
    %v64 = vld [vmem:[%s0 + $0xf8] sm:$0xff]
    %v65 = vld [vmem:[%s0 + $0x100] sm:$0xff]
    %v66 = vld [vmem:[%s0 + $0x108] sm:$0xff]
    %v67 = vld [vmem:[%s0 + $0x110] sm:$0xff]
    %v68 = vld [vmem:[%s0 + $0x118] sm:$0xff]
    %v69 = vld [vmem:[%s0 + $0x120] sm:$0xff]
    %v70 = vld [vmem:[%s0 + $0x128] sm:$0xff]
    %v71 = vld [vmem:[%s0 + $0x130] sm:$0xff]
    %v72 = vld [vmem:[%s0 + $0x138] sm:$0xff]
    %v73 = vld [vmem:[%s0 + $0x140] sm:$0xff]
    %v74 = vld [vmem:[%s0 + $0x148] sm:$0xff]
    %v75 = vld [vmem:[%s0 + $0x150] sm:$0xff]
    %v76 = vld [vmem:[%s0 + $0x158] sm:$0xff]
    %v77 = vld [vmem:[%s0 + $0x160] sm:$0xff]
    %v78 = vld [vmem:[%s0 + $0x168] sm:$0xff]
    %v79 = vld [vmem:[%s0 + $0x170] sm:$0xff]
    %v80 = vld [vmem:[%s0 + $0x178] sm:$0xff]
    %v81 = vld [vmem:[%s0 + $0x180] sm:$0xff]
    %v82 = vld [vmem:[%s0 + $0x188] sm:$0xff]
    %v83 = vld [vmem:[%s1] sm:$0xff]
    %v84 = vld [vmem:[%s1 + $0x8] sm:$0xff]
    %v85 = vld [vmem:[%s1 + $0x10] sm:$0xff]
    %v86 = vld [vmem:[%s1 + $0x18] sm:$0xff]
    %v87 = vld [vmem:[%s1 + $0x20] sm:$0xff]
    %v88 = vld [vmem:[%s1 + $0x28] sm:$0xff]
    %v89 = vld [vmem:[%s1 + $0x30] sm:$0xff]
    %v90 = vld [vmem:[%s1 + $0x38] sm:$0xff]
    %v91 = vld [vmem:[%s1 + $0x40] sm:$0xff]
    %v92 = vld [vmem:[%s1 + $0x48] sm:$0xff]
    %v93 = vld [vmem:[%s1 + $0x50] sm:$0xff]
    %v94 = vld [vmem:[%s1 + $0x58] sm:$0xff]
    %v95 = vld [vmem:[%s1 + $0x60] sm:$0xff]
    %v96 = vld [vmem:[%s1 + $0x68] sm:$0xff]
    %v97 = vld [vmem:[%s1 + $0x70] sm:$0xff]
    %v98 = vld [vmem:[%s1 + $0x78] sm:$0xff]
    %v99 = vld [vmem:[%s1 + $0x80] sm:$0xff]
    %v100 = vld [vmem:[%s1 + $0x88] sm:$0xff]
    %v101 = vld [vmem:[%s1 + $0x90] sm:$0x3f]
    %v102 = vld [vmem:[%s2] sm:$0x1]
    %v104 = vperm.slane %v102, 0
    %vm106 = vcmask 179200
    %v108 = vsel %vm106, %v34, 0
    %v111 = vsel %vm106, %v36, 0
    %v114 = vsel %vm106, %v38, 0
    %v117 = vsel %vm106, %v40, 0
    %v120 = vsel %vm106, %v42, 0
    %v123 = vsel %vm106, %v44, 0
    %v126 = vsel %vm106, %v46, 0
    %v129 = vsel %vm106, %v48, 0
    %v132 = vsel %vm106, %v50, 0
    %v135 = vsel %vm106, %v52, 0
    %v138 = vsel %vm106, %v54, 0
    %v141 = vsel %vm106, %v56, 0
    %v144 = vsel %vm106, %v58, 0
    %v147 = vsel %vm106, %v60, 0
    %v150 = vsel %vm106, %v62, 0
    %v153 = vsel %vm106, %v64, 0
    %v156 = vsel %vm106, %v66, 0
    %v159 = vsel %vm106, %v68, 0
    %v162 = vsel %vm106, %v70, 0
    %v165 = vsel %vm106, %v72, 0
    %v168 = vsel %vm106, %v74, 0
    %v171 = vsel %vm106, %v76, 0
    %v174 = vsel %vm106, %v78, 0
    %v177 = vsel %vm106, %v80, 0
    %v180 = vsel %vm106, %v82, 0
    %vm182 = vcmask 1045504
    %v184 = vsel %vm182, %v101, 0
    %186 = vmatpush.msra.mxu0 %v98
    %187 = vmatpush.msra.mxu0 %v97
    %188 = vmatpush.msra.mxu0 %v96
    %189 = vmatpush.msra.mxu0 %v95
    %190 = vmatpush.msra.mxu0 %v94
    %191 = vmatpush.msra.mxu0 %v93
    %192 = vmatpush.msra.mxu0 %v92
    %193 = vmatpush.msra.mxu0 %v91
    %194 = vmatpush.msra.mxu0 %v90
    %195 = vmatpush.msra.mxu0 %v89
    %196 = vmatpush.msra.mxu0 %v88
    %197 = vmatpush.msra.mxu0 %v87
    %198 = vmatpush.msra.mxu0 %v86
    %199 = vmatpush.msra.mxu0 %v85
    %200 = vmatpush.msra.mxu0 %v84
    %201 = vmatpush.msra.mxu0 %v83
    %202 = vmatmul.f32.gmra.mxu0 %v33
    %v203 = vpop.f32.mrf.mxu0
    %v204 = vadd.f32 %v104, %v203
    %205 = vmatmul.f32.gmra.mxu0 %v35
    %v206 = vpop.f32.mrf.mxu0
    %v207 = vadd.f32 %v104, %v206
    %208 = vmatmul.f32.gmra.mxu0 %v37
    %v209 = vpop.f32.mrf.mxu0
    %v210 = vadd.f32 %v104, %v209
    %211 = vmatmul.f32.gmra.mxu0 %v39
    %v212 = vpop.f32.mrf.mxu0
    %v213 = vadd.f32 %v104, %v212
    %214 = vmatmul.f32.gmra.mxu0 %v41
    %v215 = vpop.f32.mrf.mxu0
    %v216 = vadd.f32 %v104, %v215
    %217 = vmatmul.f32.gmra.mxu0 %v43
    %v218 = vpop.f32.mrf.mxu0
    %v219 = vadd.f32 %v104, %v218
    %220 = vmatmul.f32.gmra.mxu0 %v45
    %v221 = vpop.f32.mrf.mxu0
    %v222 = vadd.f32 %v104, %v221
    %223 = vmatmul.f32.gmra.mxu0 %v47
    %v224 = vpop.f32.mrf.mxu0
    %v225 = vadd.f32 %v104, %v224
    %226 = vmatmul.f32.gmra.mxu0 %v49
    %v227 = vpop.f32.mrf.mxu0
    %v228 = vadd.f32 %v104, %v227
    %229 = vmatmul.f32.gmra.mxu0 %v51
    %v230 = vpop.f32.mrf.mxu0
    %v231 = vadd.f32 %v104, %v230
    %232 = vmatmul.f32.gmra.mxu0 %v53
    %v233 = vpop.f32.mrf.mxu0
    %v234 = vadd.f32 %v104, %v233
    %235 = vmatmul.f32.gmra.mxu0 %v55
    %v236 = vpop.f32.mrf.mxu0
    %v237 = vadd.f32 %v104, %v236
    %238 = vmatmul.f32.gmra.mxu0 %v57
    %v239 = vpop.f32.mrf.mxu0
    %v240 = vadd.f32 %v104, %v239
    %241 = vmatmul.f32.gmra.mxu0 %v59
    %v242 = vpop.f32.mrf.mxu0
    %v243 = vadd.f32 %v104, %v242
    %244 = vmatmul.f32.gmra.mxu0 %v61
    %v245 = vpop.f32.mrf.mxu0
    %v246 = vadd.f32 %v104, %v245
    %247 = vmatmul.f32.gmra.mxu0 %v63
    %v248 = vpop.f32.mrf.mxu0
    %v249 = vadd.f32 %v104, %v248
    %250 = vmatmul.f32.gmra.mxu0 %v65
    %v251 = vpop.f32.mrf.mxu0
    %v252 = vadd.f32 %v104, %v251
    %253 = vmatmul.f32.gmra.mxu0 %v67
    %v254 = vpop.f32.mrf.mxu0
    %v255 = vadd.f32 %v104, %v254
    %256 = vmatmul.f32.gmra.mxu0 %v69
    %v257 = vpop.f32.mrf.mxu0
    %v258 = vadd.f32 %v104, %v257
    %259 = vmatmul.f32.gmra.mxu0 %v71
    %v260 = vpop.f32.mrf.mxu0
    %v261 = vadd.f32 %v104, %v260
    %262 = vmatmul.f32.gmra.mxu0 %v73
    %v263 = vpop.f32.mrf.mxu0
    %v264 = vadd.f32 %v104, %v263
    %265 = vmatmul.f32.gmra.mxu0 %v75
    %v266 = vpop.f32.mrf.mxu0
    %v267 = vadd.f32 %v104, %v266
    %268 = vmatmul.f32.gmra.mxu0 %v77
    %v269 = vpop.f32.mrf.mxu0
    %v270 = vadd.f32 %v104, %v269
    %271 = vmatmul.f32.gmra.mxu0 %v79
    %v272 = vpop.f32.mrf.mxu0
    %v273 = vadd.f32 %v104, %v272
    %274 = vmatmul.f32.gmra.mxu0 %v81
    %v275 = vpop.f32.mrf.mxu0
    %v276 = vadd.f32 %v104, %v275
    %277 = vdwg.mxu0
    %278 = vmatpush.msra.mxu0 0.0
    %279 = vmatpush.msra.mxu0 0.0
    %280 = vmatpush.msra.mxu0 0.0
    %281 = vmatpush.msra.mxu0 0.0
    %282 = vmatpush.msra.mxu0 0.0
    %283 = vmatpush.msra.mxu0 0.0
    %284 = vmatpush.msra.mxu0 0.0
    %285 = vmatpush.msra.mxu0 0.0
    %286 = vmatpush.msra.mxu0 0.0
    %287 = vmatpush.msra.mxu0 0.0
    %288 = vmatpush.msra.mxu0 0.0
    %289 = vmatpush.msra.mxu0 0.0
    %290 = vmatpush.msra.mxu0 0.0
    %291 = vmatpush.msra.mxu0 %v184
    %292 = vmatpush.msra.mxu0 %v100
    %293 = vmatpush.msra.mxu0 %v99
    %294 = vmatmul.f32.gmra.mxu0 %v108
    %v295 = vpop.f32.mrf.mxu0
    %v296 = vadd.f32 %v204, %v295
    %297 = vmatmul.f32.gmra.mxu0 %v111
    %v298 = vpop.f32.mrf.mxu0
    %v299 = vadd.f32 %v207, %v298
    %300 = vmatmul.f32.gmra.mxu0 %v114
    %v301 = vpop.f32.mrf.mxu0
    %v302 = vadd.f32 %v210, %v301
    %303 = vmatmul.f32.gmra.mxu0 %v117
    %v304 = vpop.f32.mrf.mxu0
    %v305 = vadd.f32 %v213, %v304
    %306 = vmatmul.f32.gmra.mxu0 %v120
    %v307 = vpop.f32.mrf.mxu0
    %v308 = vadd.f32 %v216, %v307
    %309 = vmatmul.f32.gmra.mxu0 %v123
    %v310 = vpop.f32.mrf.mxu0
    %v311 = vadd.f32 %v219, %v310
    %312 = vmatmul.f32.gmra.mxu0 %v126
    %v313 = vpop.f32.mrf.mxu0
    %v314 = vadd.f32 %v222, %v313
    %315 = vmatmul.f32.gmra.mxu0 %v129
    %v316 = vpop.f32.mrf.mxu0
    %v317 = vadd.f32 %v225, %v316
    %318 = vmatmul.f32.gmra.mxu0 %v132
    %v319 = vpop.f32.mrf.mxu0
    %v320 = vadd.f32 %v228, %v319
    %321 = vmatmul.f32.gmra.mxu0 %v135
    %v322 = vpop.f32.mrf.mxu0
    %v323 = vadd.f32 %v231, %v322
    %324 = vmatmul.f32.gmra.mxu0 %v138
    %v325 = vpop.f32.mrf.mxu0
    %v326 = vadd.f32 %v234, %v325
    %327 = vmatmul.f32.gmra.mxu0 %v141
    %v328 = vpop.f32.mrf.mxu0
    %v329 = vadd.f32 %v237, %v328
    %330 = vmatmul.f32.gmra.mxu0 %v144
    %v331 = vpop.f32.mrf.mxu0
    %v332 = vadd.f32 %v240, %v331
    %333 = vmatmul.f32.gmra.mxu0 %v147
    %v334 = vpop.f32.mrf.mxu0
    %v335 = vadd.f32 %v243, %v334
    %336 = vmatmul.f32.gmra.mxu0 %v150
    %v337 = vpop.f32.mrf.mxu0
    %v338 = vadd.f32 %v246, %v337
    %339 = vmatmul.f32.gmra.mxu0 %v153
    %v340 = vpop.f32.mrf.mxu0
    %v341 = vadd.f32 %v249, %v340
    %342 = vmatmul.f32.gmra.mxu0 %v156
    %v343 = vpop.f32.mrf.mxu0
    %v344 = vadd.f32 %v252, %v343
    %345 = vmatmul.f32.gmra.mxu0 %v159
    %v346 = vpop.f32.mrf.mxu0
    %v347 = vadd.f32 %v255, %v346
    %348 = vmatmul.f32.gmra.mxu0 %v162
    %v349 = vpop.f32.mrf.mxu0
    %v350 = vadd.f32 %v258, %v349
    %351 = vmatmul.f32.gmra.mxu0 %v165
    %v352 = vpop.f32.mrf.mxu0
    %v353 = vadd.f32 %v261, %v352
    %354 = vmatmul.f32.gmra.mxu0 %v168
    %v355 = vpop.f32.mrf.mxu0
    %v356 = vadd.f32 %v264, %v355
    %357 = vmatmul.f32.gmra.mxu0 %v171
    %v358 = vpop.f32.mrf.mxu0
    %v359 = vadd.f32 %v267, %v358
    %360 = vmatmul.f32.gmra.mxu0 %v174
    %v361 = vpop.f32.mrf.mxu0
    %v362 = vadd.f32 %v270, %v361
    %363 = vmatmul.f32.gmra.mxu0 %v177
    %v364 = vpop.f32.mrf.mxu0
    %v365 = vadd.f32 %v273, %v364
    %366 = vmatmul.f32.gmra.mxu0 %v180
    %v367 = vpop.f32.mrf.mxu0
    %v368 = vadd.f32 %v276, %v367
    %369 = vdwg.mxu0
    %v370 = vmax.f32 %v296, 0.0
    %v371 = vmax.f32 %v299, 0.0
    %v372 = vmax.f32 %v302, 0.0
    %v373 = vmax.f32 %v305, 0.0
    %v374 = vmax.f32 %v308, 0.0
    %v375 = vmax.f32 %v311, 0.0
    %v376 = vmax.f32 %v314, 0.0
    %v377 = vmax.f32 %v317, 0.0
    %v378 = vmax.f32 %v320, 0.0
    %v379 = vmax.f32 %v323, 0.0
    %v380 = vmax.f32 %v326, 0.0
    %v381 = vmax.f32 %v329, 0.0
    %v382 = vmax.f32 %v332, 0.0
    %v383 = vmax.f32 %v335, 0.0
    %v384 = vmax.f32 %v338, 0.0
    %v385 = vmax.f32 %v341, 0.0
    %v386 = vmax.f32 %v344, 0.0
    %v387 = vmax.f32 %v347, 0.0
    %v388 = vmax.f32 %v350, 0.0
    %v389 = vmax.f32 %v353, 0.0
    %v390 = vmax.f32 %v356, 0.0
    %v391 = vmax.f32 %v359, 0.0
    %v392 = vmax.f32 %v362, 0.0
    %v393 = vmax.f32 %v365, 0.0
    %v394 = vmax.f32 %v368, 0.0
    %vm395 = vcmask 130048
    %396 = vst.msk [vmem:[#allocation2] sm:$0xff] %vm395, %v370
    %397 = vst.msk [vmem:[#allocation2 + $0x8] sm:$0xff] %vm395, %v371
    %398 = vst.msk [vmem:[#allocation2 + $0x10] sm:$0xff] %vm395, %v372
    %399 = vst.msk [vmem:[#allocation2 + $0x18] sm:$0xff] %vm395, %v373
    %400 = vst.msk [vmem:[#allocation2 + $0x20] sm:$0xff] %vm395, %v374
    %401 = vst.msk [vmem:[#allocation2 + $0x28] sm:$0xff] %vm395, %v375
    %402 = vst.msk [vmem:[#allocation2 + $0x30] sm:$0xff] %vm395, %v376
    %403 = vst.msk [vmem:[#allocation2 + $0x38] sm:$0xff] %vm395, %v377
    %404 = vst.msk [vmem:[#allocation2 + $0x40] sm:$0xff] %vm395, %v378
    %405 = vst.msk [vmem:[#allocation2 + $0x48] sm:$0xff] %vm395, %v379
    %406 = vst.msk [vmem:[#allocation2 + $0x50] sm:$0xff] %vm395, %v380
    %407 = vst.msk [vmem:[#allocation2 + $0x58] sm:$0xff] %vm395, %v381
    %408 = vst.msk [vmem:[#allocation2 + $0x60] sm:$0xff] %vm395, %v382
    %409 = vst.msk [vmem:[#allocation2 + $0x68] sm:$0xff] %vm395, %v383
    %410 = vst.msk [vmem:[#allocation2 + $0x70] sm:$0xff] %vm395, %v384
    %411 = vst.msk [vmem:[#allocation2 + $0x78] sm:$0xff] %vm395, %v385
    %412 = vst.msk [vmem:[#allocation2 + $0x80] sm:$0xff] %vm395, %v386
    %413 = vst.msk [vmem:[#allocation2 + $0x88] sm:$0xff] %vm395, %v387
    %414 = vst.msk [vmem:[#allocation2 + $0x90] sm:$0xff] %vm395, %v388
    %415 = vst.msk [vmem:[#allocation2 + $0x98] sm:$0xff] %vm395, %v389
    %416 = vst.msk [vmem:[#allocation2 + $0xa0] sm:$0xff] %vm395, %v390
    %417 = vst.msk [vmem:[#allocation2 + $0xa8] sm:$0xff] %vm395, %v391
    %418 = vst.msk [vmem:[#allocation2 + $0xb0] sm:$0xff] %vm395, %v392
    %419 = vst.msk [vmem:[#allocation2 + $0xb8] sm:$0xff] %vm395, %v393
    %420 = vst.msk [vmem:[#allocation2 + $0xc0] sm:$0xff] %vm395, %v394
    %v421 = vld [vmem:[#allocation2] sm:$0xff]
    %v422 = vld [vmem:[#allocation2 + $0x8] sm:$0xff]
    %v423 = vld [vmem:[#allocation2 + $0x10] sm:$0xff]
    %v424 = vld [vmem:[#allocation2 + $0x18] sm:$0xff]
    %v425 = vld [vmem:[#allocation2 + $0x20] sm:$0xff]
    %v426 = vld [vmem:[#allocation2 + $0x28] sm:$0xff]
    %v427 = vld [vmem:[#allocation2 + $0x30] sm:$0x3]
    %v428 = vld [vmem:[#allocation2 + $0x32] sm:$0xff]
    %v429 = vld [vmem:[#allocation2 + $0x3a] sm:$0xff]
    %v430 = vld [vmem:[#allocation2 + $0x42] sm:$0xff]
    %v431 = vld [vmem:[#allocation2 + $0x4a] sm:$0xff]
    %v432 = vld [vmem:[#allocation2 + $0x52] sm:$0xff]
    %v433 = vld [vmem:[#allocation2 + $0x5a] sm:$0xff]
    %v434 = vld [vmem:[#allocation2 + $0x62] sm:$0x3]
    %v435 = vmax.f32 %v421, %v428
    %v436 = vmax.f32 %v422, %v429
    %v437 = vmax.f32 %v423, %v430
    %v438 = vmax.f32 %v424, %v431
    %v439 = vmax.f32 %v425, %v432
    %v440 = vmax.f32 %v426, %v433
    %v441 = vmax.f32 %v427, %v434
    %v442 = vld [vmem:[#allocation2 + $0x64] sm:$0xff]
    %v443 = vld [vmem:[#allocation2 + $0x6c] sm:$0xff]
    %v444 = vld [vmem:[#allocation2 + $0x74] sm:$0xff]
    %v445 = vld [vmem:[#allocation2 + $0x7c] sm:$0xff]
    %v446 = vld [vmem:[#allocation2 + $0x84] sm:$0xff]
    %v447 = vld [vmem:[#allocation2 + $0x8c] sm:$0xff]
    %v448 = vld [vmem:[#allocation2 + $0x94] sm:$0x3]
    %v449 = vld [vmem:[#allocation2 + $0x96] sm:$0xff]
    %v450 = vld [vmem:[#allocation2 + $0x9e] sm:$0xff]
    %v451 = vld [vmem:[#allocation2 + $0xa6] sm:$0xff]
    %v452 = vld [vmem:[#allocation2 + $0xae] sm:$0xff]
    %v453 = vld [vmem:[#allocation2 + $0xb6] sm:$0xff]
    %v454 = vld [vmem:[#allocation2 + $0xbe] sm:$0xff]
    %v455 = vld [vmem:[#allocation2 + $0xc6] sm:$0x3]
    %v456 = vmax.f32 %v442, %v449
    %v457 = vmax.f32 %v443, %v450
    %v458 = vmax.f32 %v444, %v451
    %v459 = vmax.f32 %v445, %v452
    %v460 = vmax.f32 %v446, %v453
    %v461 = vmax.f32 %v447, %v454
    %v462 = vmax.f32 %v448, %v455
    %v463 = vmax.f32 %v435, %v456
    %v464 = vmax.f32 %v436, %v457
    %v465 = vmax.f32 %v437, %v458
    %v466 = vmax.f32 %v438, %v459
    %v467 = vmax.f32 %v439, %v460
    %v468 = vmax.f32 %v440, %v461
    %v469 = vmax.f32 %v441, %v462
    %470 = vst.msk [vmem:[#allocation3] sm:$0xff] %vm395, %v463
    %471 = vst.msk [vmem:[#allocation3 + $0x8] sm:$0xff] %vm395, %v464
    %472 = vst.msk [vmem:[#allocation3 + $0x10] sm:$0xff] %vm395, %v465
    %473 = vst.msk [vmem:[#allocation3 + $0x18] sm:$0xff] %vm395, %v466
    %474 = vst.msk [vmem:[#allocation3 + $0x20] sm:$0xff] %vm395, %v467
    %475 = vst.msk [vmem:[#allocation3 + $0x28] sm:$0xff] %vm395, %v468
    %vm476 = vcmask 123904
    %477 = vst.msk [vmem:[#allocation3 + $0x30] sm:$0x3] %vm476, %v469
    %v478 = vld [vmem:[#allocation3] sm:$0x3]
    %479 = vst.msk [vmem:[#allocation4] sm:$0x3] %vm476, %v478
    %v480 = vld [vmem:[#allocation3 + $0x2] sm:$0x3]
    %482 = vrot.lane.b32.xlu0 %v480, 16
    %v483 = vpop.permute.xlu0 %482
    %vm485 = vcmask 255104
    %486 = vst.msk [vmem:[#allocation4] sm:$0x3] %vm485, %v483
    %v487 = vld [vmem:[#allocation3 + $0x4] sm:$0x3]
    %489 = vrot.lane.b32.xlu0 %v487, 32
    %v490 = vpop.permute.xlu0 %489
    %vm492 = vcmask 386304
    %493 = vst.msk [vmem:[#allocation4] sm:$0x3] %vm492, %v490
    %v494 = vld [vmem:[#allocation3 + $0x6] sm:$0x3]
    %496 = vrot.lane.b32.xlu0 %v494, 48
    %v497 = vpop.permute.xlu0 %496
    %vm499 = vcmask 517504
    %500 = vst.msk [vmem:[#allocation4] sm:$0x3] %vm499, %v497
    %v501 = vld [vmem:[#allocation3 + $0x8] sm:$0x3]
    %503 = vrot.lane.b32.xlu0 %v501, 64
    %v504 = vpop.permute.xlu0 %503
    %vm506 = vcmask 648704
    %507 = vst.msk [vmem:[#allocation4] sm:$0x3] %vm506, %v504
    %v508 = vld [vmem:[#allocation3 + $0xa] sm:$0x3]
    %510 = vrot.lane.b32.xlu0 %v508, 80
    %v511 = vpop.permute.xlu0 %510
    %vm513 = vcmask 779904
    %514 = vst.msk [vmem:[#allocation4] sm:$0x3] %vm513, %v511
    %v515 = vld [vmem:[#allocation3 + $0xc] sm:$0x3]
    %517 = vrot.lane.b32.xlu0 %v515, 96
    %v518 = vpop.permute.xlu0 %517
    %vm520 = vcmask 911104
    %521 = vst.msk [vmem:[#allocation4] sm:$0x3] %vm520, %v518
    %v522 = vld [vmem:[#allocation3 + $0xe] sm:$0x3]
    %524 = vrot.lane.b32.xlu0 %v522, 112
    %v525 = vpop.permute.xlu0 %524
    %vm527 = vcmask 1042304
    %528 = vst.msk [vmem:[#allocation4] sm:$0x3] %vm527, %v525
    %v529 = vld [vmem:[#allocation3 + $0x10] sm:$0x3]
    %530 = vst.msk [vmem:[#allocation4 + $0x2] sm:$0x3] %vm476, %v529
    %v531 = vld [vmem:[#allocation3 + $0x12] sm:$0x3]
    %533 = vrot.lane.b32.xlu0 %v531, 16
    %v534 = vpop.permute.xlu0 %533
    %536 = vst.msk [vmem:[#allocation4 + $0x2] sm:$0x3] %vm485, %v534
    %v537 = vld [vmem:[#allocation3 + $0x14] sm:$0x3]
    %539 = vrot.lane.b32.xlu0 %v537, 32
    %v540 = vpop.permute.xlu0 %539
    %542 = vst.msk [vmem:[#allocation4 + $0x2] sm:$0x3] %vm492, %v540
    %v543 = vld [vmem:[#allocation3 + $0x16] sm:$0x3]
    %545 = vrot.lane.b32.xlu0 %v543, 48
    %v546 = vpop.permute.xlu0 %545
    %548 = vst.msk [vmem:[#allocation4 + $0x2] sm:$0x3] %vm499, %v546
    %v549 = vld [vmem:[#allocation3 + $0x18] sm:$0x3]
    %551 = vrot.lane.b32.xlu0 %v549, 64
    %v552 = vpop.permute.xlu0 %551
    %554 = vst.msk [vmem:[#allocation4 + $0x2] sm:$0x3] %vm506, %v552
    %v555 = vld [vmem:[#allocation3 + $0x1a] sm:$0x3]
    %557 = vrot.lane.b32.xlu0 %v555, 80
    %v558 = vpop.permute.xlu0 %557
    %560 = vst.msk [vmem:[#allocation4 + $0x2] sm:$0x3] %vm513, %v558
    %v561 = vld [vmem:[#allocation3 + $0x1c] sm:$0x3]
    %563 = vrot.lane.b32.xlu0 %v561, 96
    %v564 = vpop.permute.xlu0 %563
    %566 = vst.msk [vmem:[#allocation4 + $0x2] sm:$0x3] %vm520, %v564
    %v567 = vld [vmem:[#allocation3 + $0x1e] sm:$0x3]
    %569 = vrot.lane.b32.xlu0 %v567, 112
    %v570 = vpop.permute.xlu0 %569
    %572 = vst.msk [vmem:[#allocation4 + $0x2] sm:$0x3] %vm527, %v570
    %v573 = vld [vmem:[#allocation3 + $0x20] sm:$0x3]
    %574 = vst.msk [vmem:[#allocation4 + $0x4] sm:$0x3] %vm476, %v573
    %v575 = vld [vmem:[#allocation3 + $0x22] sm:$0x3]
    %577 = vrot.lane.b32.xlu0 %v575, 16
    %v578 = vpop.permute.xlu0 %577
    %580 = vst.msk [vmem:[#allocation4 + $0x4] sm:$0x3] %vm485, %v578
    %v581 = vld [vmem:[#allocation3 + $0x24] sm:$0x3]
    %583 = vrot.lane.b32.xlu0 %v581, 32
    %v584 = vpop.permute.xlu0 %583
    %586 = vst.msk [vmem:[#allocation4 + $0x4] sm:$0x3] %vm492, %v584
    %v587 = vld [vmem:[#allocation3 + $0x26] sm:$0x3]
    %589 = vrot.lane.b32.xlu0 %v587, 48
    %v590 = vpop.permute.xlu0 %589
    %592 = vst.msk [vmem:[#allocation4 + $0x4] sm:$0x3] %vm499, %v590
    %v593 = vld [vmem:[#allocation3 + $0x28] sm:$0x3]
    %595 = vrot.lane.b32.xlu0 %v593, 64
    %v596 = vpop.permute.xlu0 %595
    %598 = vst.msk [vmem:[#allocation4 + $0x4] sm:$0x3] %vm506, %v596
    %v599 = vld [vmem:[#allocation3 + $0x2a] sm:$0x3]
    %601 = vrot.lane.b32.xlu0 %v599, 80
    %v602 = vpop.permute.xlu0 %601
    %604 = vst.msk [vmem:[#allocation4 + $0x4] sm:$0x3] %vm513, %v602
    %v605 = vld [vmem:[#allocation3 + $0x2c] sm:$0x3]
    %607 = vrot.lane.b32.xlu0 %v605, 96
    %v608 = vpop.permute.xlu0 %607
    %610 = vst.msk [vmem:[#allocation4 + $0x4] sm:$0x3] %vm520, %v608
    %v611 = vld [vmem:[#allocation3 + $0x2e] sm:$0x3]
    %613 = vrot.lane.b32.xlu0 %v611, 112
    %v614 = vpop.permute.xlu0 %613
    %616 = vst.msk [vmem:[#allocation4 + $0x4] sm:$0x3] %vm527, %v614
    %v617 = vld [vmem:[#allocation3 + $0x30] sm:$0x3]
    %618 = vst.msk [vmem:[#allocation4 + $0x6] sm:$0x3] %vm476, %v617
    %v619 = vld [vmem:[#allocation4] sm:$0xff]
    %v620 = vld [vmem:[%s3] sm:$0xff]
    %v621 = vld [vmem:[%s3 + $0x8] sm:$0xff]
    %v622 = vld [vmem:[%s3 + $0x10] sm:$0xff]
    %v623 = vld [vmem:[%s3 + $0x18] sm:$0xff]
    %v624 = vld [vmem:[%s3 + $0x20] sm:$0xff]
    %v625 = vld [vmem:[%s3 + $0x28] sm:$0xff]
    %v626 = vld [vmem:[%s3 + $0x30] sm:$0xff]
    %v627 = vld [vmem:[%s3 + $0x38] sm:$0xff]
    %v628 = vld [vmem:[%s3 + $0x40] sm:$0xff]
    %v629 = vld [vmem:[%s3 + $0x48] sm:$0xff]
    %v630 = vld [vmem:[%s3 + $0x50] sm:$0xff]
    %v631 = vld [vmem:[%s3 + $0x58] sm:$0xff]
    %v632 = vld [vmem:[%s3 + $0x60] sm:$0xff]
    %v633 = vld [vmem:[%s3 + $0x68] sm:$0xff]
    %v634 = vld [vmem:[%s3 + $0x70] sm:$0xff]
    %v635 = vld [vmem:[%s3 + $0x78] sm:$0xff]
    %v636 = vld [vmem:[%s3 + $0x80] sm:$0xff]
    %v637 = vld [vmem:[%s3 + $0x88] sm:$0xff]
    %v638 = vld [vmem:[%s3 + $0x90] sm:$0xff]
    %v639 = vld [vmem:[%s3 + $0x98] sm:$0xff]
    %v640 = vld [vmem:[%s3 + $0xa0] sm:$0xff]
    %v641 = vld [vmem:[%s3 + $0xa8] sm:$0xff]
    %v642 = vld [vmem:[%s3 + $0xb0] sm:$0xff]
    %v643 = vld [vmem:[%s3 + $0xb8] sm:$0xff]
    %v644 = vld [vmem:[%s3 + $0xc0] sm:$0xff]
    %v645 = vld [vmem:[%s3 + $0xc8] sm:$0xff]
    %v646 = vld [vmem:[%s3 + $0xd0] sm:$0xff]
    %v647 = vld [vmem:[%s3 + $0xd8] sm:$0xff]
    %v648 = vld [vmem:[%s3 + $0xe0] sm:$0xff]
    %v649 = vld [vmem:[%s3 + $0xe8] sm:$0xff]
    %v650 = vld [vmem:[%s3 + $0xf0] sm:$0xff]
    %v651 = vld [vmem:[%s3 + $0xf8] sm:$0xff]
    %v652 = vld [vmem:[%s3 + $0x100] sm:$0xff]
    %v653 = vld [vmem:[%s3 + $0x108] sm:$0xff]
    %v654 = vld [vmem:[%s3 + $0x110] sm:$0xff]
    %v655 = vld [vmem:[%s3 + $0x118] sm:$0xff]
    %v656 = vld [vmem:[%s3 + $0x120] sm:$0xff]
    %v657 = vld [vmem:[%s3 + $0x128] sm:$0xff]
    %v658 = vld [vmem:[%s3 + $0x130] sm:$0xff]
    %v659 = vld [vmem:[%s3 + $0x138] sm:$0xff]
    %v660 = vld [vmem:[%s3 + $0x140] sm:$0xff]
    %v661 = vld [vmem:[%s3 + $0x148] sm:$0xff]
    %v662 = vld [vmem:[%s3 + $0x150] sm:$0xff]
    %v663 = vld [vmem:[%s3 + $0x158] sm:$0xff]
    %v664 = vld [vmem:[%s3 + $0x160] sm:$0xff]
    %v665 = vld [vmem:[%s3 + $0x168] sm:$0xff]
    %v666 = vld [vmem:[%s3 + $0x170] sm:$0xff]
    %v667 = vld [vmem:[%s3 + $0x178] sm:$0xff]
    %v668 = vld [vmem:[%s3 + $0x180] sm:$0xff]
    %v669 = vld [vmem:[%s3 + $0x188] sm:$0xff]
    %v670 = vld [vmem:[%s4] sm:$0x1]
    %v672 = vperm.slane %v670, 0
    %675 = vst [vmem:[#allocation1] ss:$4 sm:$0xff] %v619
    %v676 = vld.sshfl [vmem:[#allocation1] sm:$0xff pattern:$0x73625140]
    %v677 = vld.sshfl [vmem:[#allocation1 + $0x8] sm:$0xff pattern:$0x73625140]
    %v678 = vld.sshfl [vmem:[#allocation1 + $0x10] sm:$0xff pattern:$0x73625140]
    %v679 = vld.sshfl [vmem:[#allocation1 + $0x18] sm:$0xff pattern:$0x73625140]
    %v683 = vsel %vm395, %v679, 0
    %685 = vmatpush.msra.mxu0 %v635
    %686 = vmatpush.msra.mxu0 %v634
    %687 = vmatpush.msra.mxu0 %v633
    %688 = vmatpush.msra.mxu0 %v632
    %689 = vmatpush.msra.mxu0 %v631
    %690 = vmatpush.msra.mxu0 %v630
    %691 = vmatpush.msra.mxu0 %v629
    %692 = vmatpush.msra.mxu0 %v628
    %693 = vmatpush.msra.mxu0 %v627
    %694 = vmatpush.msra.mxu0 %v626
    %695 = vmatpush.msra.mxu0 %v625
    %696 = vmatpush.msra.mxu0 %v624
    %697 = vmatpush.msra.mxu0 %v623
    %698 = vmatpush.msra.mxu0 %v622
    %699 = vmatpush.msra.mxu0 %v621
    %700 = vmatpush.msra.mxu0 %v620
    %701 = vmatmul.f32.gmra.mxu0 %v676
    %v702 = vpop.f32.mrf.mxu0
    %v703 = vadd.f32 %v672, %v702
    %704 = vdwg.mxu0
    %705 = vmatpush.msra.mxu0 %v651
    %706 = vmatpush.msra.mxu0 %v650
    %707 = vmatpush.msra.mxu0 %v649
    %708 = vmatpush.msra.mxu0 %v648
    %709 = vmatpush.msra.mxu0 %v647
    %710 = vmatpush.msra.mxu0 %v646
    %711 = vmatpush.msra.mxu0 %v645
    %712 = vmatpush.msra.mxu0 %v644
    %713 = vmatpush.msra.mxu0 %v643
    %714 = vmatpush.msra.mxu0 %v642
    %715 = vmatpush.msra.mxu0 %v641
    %716 = vmatpush.msra.mxu0 %v640
    %717 = vmatpush.msra.mxu0 %v639
    %718 = vmatpush.msra.mxu0 %v638
    %719 = vmatpush.msra.mxu0 %v637
    %720 = vmatpush.msra.mxu0 %v636
    %721 = vmatmul.f32.gmra.mxu0 %v677
    %v722 = vpop.f32.mrf.mxu0
    %v723 = vadd.f32 %v703, %v722
    %724 = vdwg.mxu0
    %725 = vmatpush.msra.mxu0 %v667
    %726 = vmatpush.msra.mxu0 %v666
    %727 = vmatpush.msra.mxu0 %v665
    %728 = vmatpush.msra.mxu0 %v664
    %729 = vmatpush.msra.mxu0 %v663
    %730 = vmatpush.msra.mxu0 %v662
    %731 = vmatpush.msra.mxu0 %v661
    %732 = vmatpush.msra.mxu0 %v660
    %733 = vmatpush.msra.mxu0 %v659
    %734 = vmatpush.msra.mxu0 %v658
    %735 = vmatpush.msra.mxu0 %v657
    %736 = vmatpush.msra.mxu0 %v656
    %737 = vmatpush.msra.mxu0 %v655
    %738 = vmatpush.msra.mxu0 %v654
    %739 = vmatpush.msra.mxu0 %v653
    %740 = vmatpush.msra.mxu0 %v652
    %741 = vmatmul.f32.gmra.mxu0 %v678
    %v742 = vpop.f32.mrf.mxu0
    %v743 = vadd.f32 %v723, %v742
    %744 = vdwg.mxu0
    %745 = vmatpush.msra.mxu0 0.0
    %746 = vmatpush.msra.mxu0 0.0
    %747 = vmatpush.msra.mxu0 0.0
    %748 = vmatpush.msra.mxu0 0.0
    %749 = vmatpush.msra.mxu0 0.0
    %750 = vmatpush.msra.mxu0 0.0
    %751 = vmatpush.msra.mxu0 0.0
    %752 = vmatpush.msra.mxu0 0.0
    %753 = vmatpush.msra.mxu0 0.0
    %754 = vmatpush.msra.mxu0 0.0
    %755 = vmatpush.msra.mxu0 0.0
    %756 = vmatpush.msra.mxu0 0.0
    %757 = vmatpush.msra.mxu0 0.0
    %758 = vmatpush.msra.mxu0 0.0
    %759 = vmatpush.msra.mxu0 %v669
    %760 = vmatpush.msra.mxu0 %v668
    %761 = vmatmul.f32.gmra.mxu0 %v683
    %v762 = vpop.f32.mrf.mxu0
    %v763 = vadd.f32 %v743, %v762
    %764 = vdwg.mxu0
    %v765 = vmax.f32 %v763, 0.0
    %v766 = vld [vmem:[%s5] sm:$0xff]
    %v767 = vld [vmem:[%s5 + $0x8] sm:$0xff]
    %v768 = vld [vmem:[%s5 + $0x10] sm:$0xff]
    %v769 = vld [vmem:[%s5 + $0x18] sm:$0xff]
    %v770 = vld [vmem:[%s5 + $0x20] sm:$0xff]
    %v771 = vld [vmem:[%s5 + $0x28] sm:$0xff]
    %v772 = vld [vmem:[%s5 + $0x30] sm:$0xff]
    %v773 = vld [vmem:[%s5 + $0x38] sm:$0xff]
    %v774 = vld [vmem:[%s5 + $0x40] sm:$0xff]
    %v775 = vld [vmem:[%s5 + $0x48] sm:$0xff]
    %v776 = vld [vmem:[%s5 + $0x50] sm:$0xff]
    %v777 = vld [vmem:[%s5 + $0x58] sm:$0xff]
    %v778 = vld [vmem:[%s5 + $0x60] sm:$0xff]
    %v779 = vld [vmem:[%s5 + $0x68] sm:$0xff]
    %v780 = vld [vmem:[%s5 + $0x70] sm:$0xff]
    %v781 = vld [vmem:[%s6] sm:$0x1]
    %v783 = vperm.slane %v781, 0
    %vm785 = vcmask 982016
    %v787 = vsel %vm785, %v765, 0
    %789 = vmatpush.msra.mxu0 0.0
    %790 = vmatpush.msra.mxu0 %v780
    %791 = vmatpush.msra.mxu0 %v779
    %792 = vmatpush.msra.mxu0 %v778
    %793 = vmatpush.msra.mxu0 %v777
    %794 = vmatpush.msra.mxu0 %v776
    %795 = vmatpush.msra.mxu0 %v775
    %796 = vmatpush.msra.mxu0 %v774
    %797 = vmatpush.msra.mxu0 %v773
    %798 = vmatpush.msra.mxu0 %v772
    %799 = vmatpush.msra.mxu0 %v771
    %800 = vmatpush.msra.mxu0 %v770
    %801 = vmatpush.msra.mxu0 %v769
    %802 = vmatpush.msra.mxu0 %v768
    %803 = vmatpush.msra.mxu0 %v767
    %804 = vmatpush.msra.mxu0 %v766
    %805 = vmatmul.f32.gmra.mxu0 %v787
    %v806 = vpop.f32.mrf.mxu0
    %v807 = vadd.f32 %v783, %v806
    %808 = vdwg.mxu0
    %v809 = vmax.f32 %v807, 0.0
    %v810 = vld [vmem:[%s7] sm:$0xff]
    %v811 = vld [vmem:[%s7 + $0x8] sm:$0xff]
    %v812 = vld [vmem:[%s7 + $0x10] sm:$0xff]
    %v813 = vld [vmem:[%s7 + $0x18] sm:$0xff]
    %v814 = vld [vmem:[%s7 + $0x20] sm:$0xff]
    %v815 = vld [vmem:[%s7 + $0x28] sm:$0xff]
    %v816 = vld [vmem:[%s7 + $0x30] sm:$0xff]
    %v817 = vld [vmem:[%s7 + $0x38] sm:$0xff]
    %v818 = vld [vmem:[%s7 + $0x40] sm:$0xff]
    %v819 = vld [vmem:[%s7 + $0x48] sm:$0xff]
    %v820 = vld [vmem:[%s7 + $0x50] sm:$0xf]
    %v821 = vld [vmem:[%s8] sm:$0x1]
    %v823 = vperm.slane %v821, 0
    %vm825 = vcmask 687104
    %v827 = vsel %vm825, %v809, 0
    %vm829 = vcmask 1043456
    %v831 = vsel %vm829, %v820, 0
    %833 = vmatpush.msra.mxu0 0.0
    %834 = vmatpush.msra.mxu0 0.0
    %835 = vmatpush.msra.mxu0 0.0
    %836 = vmatpush.msra.mxu0 0.0
    %837 = vmatpush.msra.mxu0 0.0
    %838 = vmatpush.msra.mxu0 %v831
    %839 = vmatpush.msra.mxu0 %v819
    %840 = vmatpush.msra.mxu0 %v818
    %841 = vmatpush.msra.mxu0 %v817
    %842 = vmatpush.msra.mxu0 %v816
    %843 = vmatpush.msra.mxu0 %v815
    %844 = vmatpush.msra.mxu0 %v814
    %845 = vmatpush.msra.mxu0 %v813
    %846 = vmatpush.msra.mxu0 %v812
    %847 = vmatpush.msra.mxu0 %v811
    %848 = vmatpush.msra.mxu0 %v810
    %849 = vmatmul.f32.gmra.mxu0 %v827
    %v850 = vpop.f32.mrf.mxu0
    %v851 = vadd.f32 %v823, %v850
    %852 = vdwg.mxu0
    %vm853 = vcmask 74752
    %854 = vst.msk [vmem:[#allocation5] sm:$0x3] %vm853, %v851
    // Predicated region
    $region38: #{cnn_forward.3} parent=1 // pred_check
      _
    $region39: #{cnn_forward.3} parent=1 // pred_check_branch
      %856 = sbr.rel (0) target = $region41
    $region40: #{cnn_forward.3} parent=1 // pred_region
      %858 = vsyncadd [#allocation6], 0
      %s860 = sshll.u32 [#allocation5], 4
      %s861 = int_to_ptr.vmem [resolvable:$true] %s860
      %s862 = sshll.u32 %s9, 4
      %s863 = int_to_ptr.hbm [resolvable:$true] %s862
      %865 = dma.vmem_to_hbm [thread:$0]  %s861, 32, %s863, [#allocation6]
    $region41: #{cnn_forward.3} parent=1 // pred_fallthru
      _
    // Predicated region
    $region42: #{cnn_forward.3} parent=1 // pred_check
      _
    $region43: #{cnn_forward.3} parent=1 // pred_check_branch
      %867 = sbr.rel (0) target = $region45
    $region44: #{cnn_forward.3} parent=1 // pred_region
      %869 = dma.done [#allocation6], 32
    $region45: #{cnn_forward.3} parent=1 // pred_fallthru
      _
    %870 = vsyncpa [#allocation6], 1

</llo_original>
